<compile_context>
chip_gen: v7x
topology: tpu7x:2x2x1
jax: 0.10.0
libtpu: 0.0.40
codegen_flags: <defaults>
</compile_context>

<pallas_src>
import functools

import jax
import jax.numpy as jnp
from jax.experimental import pallas as pl
from jax.experimental.pallas import tpu as pltpu

KERNEL = 5          # conv kernel size
STRIDE = 5          # conv stride (== kernel -> non-overlapping, aligned patches)
CIN = 3
COUT = 3


def _conv1_kernel(x_ref, wt_ref, ssum_ref, bias_ref, o_ref):
    """One (batch, row-block) tile of Conv2d(3, 3, k=5, s=5) + bias.

    x_ref:    (1, CIN, TOY, KERNEL, W)  raw image rows (free reshape of NCHW)
    wt_ref:   (COUT, CIN, KERNEL, W)    conv weights tiled kx-periodically along W
    ssum_ref: (W, Wo)                   0/1 matrix summing each 5-lane group
    bias_ref: (COUT,)                   SMEM scalars
    o_ref:    (1, COUT, TOY, Wo)        NCHW output tile
    """
    for o in range(COUT):
        # mix input channels on the VPU (weights already tiled along W so the
        # kx dependence is carried lane-wise)
        acc = x_ref[0, 0] * wt_ref[o, 0]                     # (TOY, KERNEL, W)
        for c in range(1, CIN):
            acc = acc + x_ref[0, c] * wt_ref[o, c]
        rows = jnp.sum(acc, axis=1)                          # sum over ky -> (TOY, W)
        # collapse every 5 consecutive lanes (the kx positions of one output
        # column) with a tiny MXU matmul against the 0/1 segment-sum matrix.
        seg = jnp.dot(rows, ssum_ref[...],
                      preferred_element_type=jnp.float32)    # (TOY, Wo)
        o_ref[0, o] = seg + bias_ref[o]


def _pick_tile_oy(Ho, W, budget_bytes=4 << 20):
    """Largest output-row tile that (a) divides Ho, (b) is a multiple of 8 or
    equals Ho (output BlockSpec constraint), and (c) keeps the input block
    under ~4 MiB so double-buffering fits every generation's default VMEM."""
    bytes_per_row = CIN * 8 * W * 4          # KERNEL=5 rows pad to 8 sublanes, f32
    legal = [t for t in range(1, Ho + 1)
             if Ho % t == 0 and (t % 8 == 0 or t == Ho)]
    fitting = [t for t in legal if t * bytes_per_row <= budget_bytes]
    return max(fitting) if fitting else min(legal)


@functools.partial(jax.jit, static_argnames=("tile_oy",))
def lipfd_conv1(x, weight, bias, *, tile_oy=None):
    """nn.Conv2d(3, 3, kernel_size=5, stride=5) forward (NCHW in, NCHW out).

    Args:
      x:      (B, 3, H, W)  float32, NCHW (PyTorch convention).
      weight: (3, 3, 5, 5)  float32  (out_ch, in_ch, kh, kw).
      bias:   (3,)          float32.
    Returns:
      (B, 3, H//5, W//5) float32.
    """
    B, C, H, W = x.shape
    assert C == CIN and H % STRIDE == 0 and W % STRIDE == 0
    Ho, Wo = H // STRIDE, W // STRIDE
    if tile_oy is None:
        tile_oy = _pick_tile_oy(Ho, W)
    assert Ho % tile_oy == 0

    # ---- zero-copy glue (no HBM passes) ----
    # contiguous reshape exposing (output row, in-patch row):
    x5 = x.reshape(B, CIN, Ho, KERNEL, W)
    # weights tiled along W so wt[o, c, ky, 5*ox + kx] == weight[o, c, ky, kx]:
    wt = jnp.tile(weight.astype(jnp.float32), (1, 1, 1, Wo))
    # 0/1 segment-sum matrix: column ox sums lanes [5*ox, 5*ox + 5):
    ssum = (jnp.arange(W, dtype=jnp.int32)[:, None] // KERNEL
            == jnp.arange(Wo, dtype=jnp.int32)[None, :]).astype(jnp.float32)

    grid = (B, Ho // tile_oy)
    out = pl.pallas_call(
        _conv1_kernel,
        out_shape=jax.ShapeDtypeStruct((B, COUT, Ho, Wo), jnp.float32),
        grid_spec=pltpu.PrefetchScalarGridSpec(
            num_scalar_prefetch=0,
            grid=grid,
            in_specs=[
                # raw image rows for this (batch, row-block); last two block
                # dims (KERNEL, W) are full array dims -> always legal.
                pl.BlockSpec((1, CIN, tile_oy, KERNEL, W),
                             lambda b, r: (b, 0, r, 0, 0)),
                # tiny constant blocks: resident across the whole grid.
                pl.BlockSpec((COUT, CIN, KERNEL, W), lambda b, r: (0, 0, 0, 0)),
                pl.BlockSpec((W, Wo), lambda b, r: (0, 0)),
                # bias as 3 SMEM scalars (fused add in-kernel).
                pl.BlockSpec(memory_space=pltpu.MemorySpace.SMEM),
            ],
            out_specs=pl.BlockSpec((1, COUT, tile_oy, Wo),
                                   lambda b, r: (b, 0, r, 0)),
        ),
        compiler_params=pltpu.CompilerParams(
            dimension_semantics=("parallel", "parallel")),
    )(x5, wt, ssum, bias.astype(jnp.float32))
    return out


def lipfd_get_features(x, conv_w, conv_b):
    """LipFD.get_features: conv1 -> CLIP encode_image."""
    x = lipfd_conv1(x, conv_w, conv_b)
    # TODO(synk): self.encoder.encode_image(x) is an external CLIP model
    # (clip.load(name)); no in-script definition exists, so it is not faked.
    return x


def lipfd_forward(x, feature):
    """LipFD.forward: return self.backbone(x, feature)."""
    # TODO(synk): get_backbone() is defined outside this module; its forward
    # cannot be reproduced faithfully, so forward() is left as a pass-through
    # marker and the concretely-defined conv1 path is what is kernelized.
    return x, feature


if __name__ == "__main__":
    key = jax.random.PRNGKey(0)
    kx, kw, kb = jax.random.split(key, 3)

    # small shapes consistent with the module: 3-channel image, spatial
    # divisible by the stride-5 conv.
    B, H, W = 2, 80, 80
    x = jax.random.normal(kx, (B, 3, H, W), dtype=jnp.float32)

    # deterministic synthetic conv1 params (PyTorch-like uniform init scale)
    fan_in = CIN * KERNEL * KERNEL
    bound = 1.0 / (fan_in ** 0.5)
    conv_w = jax.random.uniform(kw, (COUT, CIN, KERNEL, KERNEL),
                                minval=-bound, maxval=bound, dtype=jnp.float32)
    conv_b = jax.random.uniform(kb, (COUT,),
                                minval=-bound, maxval=bound, dtype=jnp.float32)

    out = lipfd_get_features(x, conv_w, conv_b)
    out = jax.block_until_ready(out)

    # correctness check against a plain-JAX conv reference
    ref = jax.lax.conv_general_dilated(
        x, conv_w, window_strides=(STRIDE, STRIDE), padding="VALID",
        dimension_numbers=("NCHW", "OIHW", "NCHW")) + conv_b.reshape(1, COUT, 1, 1)
    assert out.shape == (B, 3, H // STRIDE, W // STRIDE)
    assert jnp.allclose(out, ref, atol=1e-4, rtol=1e-4)

    print("KERNEL_OK")
</pallas_src>

<mosaic_0001>
module attributes {stable_mosaic.version = 11 : i64} {
  func.func @_conv1_kernel(%arg0: i32, %arg1: i32, %arg2: memref<1x3x16x5x80xf32, #tpu.memory_space<vmem>>, %arg3: memref<3x3x5x80xf32, #tpu.memory_space<vmem>>, %arg4: memref<80x16xf32, #tpu.memory_space<vmem>>, %arg5: memref<3xf32, #tpu.memory_space<smem>>, %arg6: memref<1x3x16x16xf32, #tpu.memory_space<vmem>>) attributes {dimension_semantics = [#tpu.dimension_semantics<parallel>, #tpu.dimension_semantics<parallel>], iteration_bounds = array<i64: 2, 1>, scalar_prefetch = 0 : i64, scratch_operands = 0 : i64, tpu.core_type = #tpu.core_type<tc>, window_params = [{transform_indices = @transform_0, window_bounds = array<i64: 1, 3, 16, 5, 80>}, {pipeline_mode = #tpu.pipeline_mode<synchronous>, transform_indices = @transform_1, window_bounds = array<i64: 3, 3, 5, 80>}, {pipeline_mode = #tpu.pipeline_mode<synchronous>, transform_indices = @transform_2, window_bounds = array<i64: 80, 16>}, {transform_indices = @transform_3, window_bounds = array<i64: 3>}, {transform_indices = @transform_4, window_bounds = array<i64: 1, 3, 16, 16>}]} {
    %c0 = arith.constant 0 : index
    %c0_0 = arith.constant 0 : index
    %c0_1 = arith.constant 0 : index
    %c0_2 = arith.constant 0 : index
    %c0_3 = arith.constant 0 : index
    %0 = vector.load %arg2[%c0, %c0_0, %c0_1, %c0_2, %c0_3] : memref<1x3x16x5x80xf32, #tpu.memory_space<vmem>>, vector<1x1x16x5x80xf32>
    %1 = vector.shape_cast %0 : vector<1x1x16x5x80xf32> to vector<16x5x80xf32>
    %c0_4 = arith.constant 0 : index
    %c0_5 = arith.constant 0 : index
    %c0_6 = arith.constant 0 : index
    %c0_7 = arith.constant 0 : index
    %2 = vector.load %arg3[%c0_4, %c0_5, %c0_6, %c0_7] : memref<3x3x5x80xf32, #tpu.memory_space<vmem>>, vector<1x1x5x80xf32>
    %3 = vector.shape_cast %2 : vector<1x1x5x80xf32> to vector<5x80xf32>
    %4 = vector.shape_cast %3 : vector<5x80xf32> to vector<1x5x80xf32>
    %5 = vector.broadcast %4 : vector<1x5x80xf32> to vector<16x5x80xf32>
    %6 = arith.mulf %1, %5 : vector<16x5x80xf32>
    %c0_8 = arith.constant 0 : index
    %c1 = arith.constant 1 : index
    %c0_9 = arith.constant 0 : index
    %c0_10 = arith.constant 0 : index
    %c0_11 = arith.constant 0 : index
    %7 = vector.load %arg2[%c0_8, %c1, %c0_9, %c0_10, %c0_11] : memref<1x3x16x5x80xf32, #tpu.memory_space<vmem>>, vector<1x1x16x5x80xf32>
    %8 = vector.shape_cast %7 : vector<1x1x16x5x80xf32> to vector<16x5x80xf32>
    %c0_12 = arith.constant 0 : index
    %c1_13 = arith.constant 1 : index
    %c0_14 = arith.constant 0 : index
    %c0_15 = arith.constant 0 : index
    %9 = vector.load %arg3[%c0_12, %c1_13, %c0_14, %c0_15] : memref<3x3x5x80xf32, #tpu.memory_space<vmem>>, vector<1x1x5x80xf32>
    %10 = vector.shape_cast %9 : vector<1x1x5x80xf32> to vector<5x80xf32>
    %11 = vector.shape_cast %10 : vector<5x80xf32> to vector<1x5x80xf32>
    %12 = vector.broadcast %11 : vector<1x5x80xf32> to vector<16x5x80xf32>
    %13 = arith.mulf %8, %12 : vector<16x5x80xf32>
    %14 = arith.addf %6, %13 : vector<16x5x80xf32>
    %c0_16 = arith.constant 0 : index
    %c2 = arith.constant 2 : index
    %c0_17 = arith.constant 0 : index
    %c0_18 = arith.constant 0 : index
    %c0_19 = arith.constant 0 : index
    %15 = vector.load %arg2[%c0_16, %c2, %c0_17, %c0_18, %c0_19] : memref<1x3x16x5x80xf32, #tpu.memory_space<vmem>>, vector<1x1x16x5x80xf32>
    %16 = vector.shape_cast %15 : vector<1x1x16x5x80xf32> to vector<16x5x80xf32>
    %c0_20 = arith.constant 0 : index
    %c2_21 = arith.constant 2 : index
    %c0_22 = arith.constant 0 : index
    %c0_23 = arith.constant 0 : index
    %17 = vector.load %arg3[%c0_20, %c2_21, %c0_22, %c0_23] : memref<3x3x5x80xf32, #tpu.memory_space<vmem>>, vector<1x1x5x80xf32>
    %18 = vector.shape_cast %17 : vector<1x1x5x80xf32> to vector<5x80xf32>
    %19 = vector.shape_cast %18 : vector<5x80xf32> to vector<1x5x80xf32>
    %20 = vector.broadcast %19 : vector<1x5x80xf32> to vector<16x5x80xf32>
    %21 = arith.mulf %16, %20 : vector<16x5x80xf32>
    %22 = arith.addf %14, %21 : vector<16x5x80xf32>
    %cst = arith.constant dense<0.000000e+00> : vector<16x80xf32>
    %23 = vector.multi_reduction <add>, %22, %cst [1] : vector<16x5x80xf32> to vector<16x80xf32>
    %c0_24 = arith.constant 0 : index
    %c0_25 = arith.constant 0 : index
    %24 = vector.load %arg4[%c0_24, %c0_25] : memref<80x16xf32, #tpu.memory_space<vmem>>, vector<80x16xf32>
    %cst_26 = arith.constant dense<0.000000e+00> : vector<16x16xf32>
    %25 = tpu.matmul %23, %24, %cst_26 {dimension_numbers = #tpu.dot_dimension_numbers<[1], [0], [0], [1], [0, 0, 1, 1], [], []>} : vector<16x80xf32>, vector<80x16xf32>, vector<16x16xf32> -> vector<16x16xf32>
    %c0_27 = arith.constant 0 : index
    %26 = memref.load %arg5[%c0_27] : memref<3xf32, #tpu.memory_space<smem>>
    %27 = vector.broadcast %26 : f32 to vector<16x16xf32>
    %28 = arith.addf %25, %27 : vector<16x16xf32>
    %c0_28 = arith.constant 0 : index
    %c0_29 = arith.constant 0 : index
    %c0_30 = arith.constant 0 : index
    %c0_31 = arith.constant 0 : index
    %29 = vector.load %arg6[%c0_28, %c0_29, %c0_30, %c0_31] : memref<1x3x16x16xf32, #tpu.memory_space<vmem>>, vector<1x1x16x16xf32>
    %30 = vector.shape_cast %29 : vector<1x1x16x16xf32> to vector<16x16xf32>
    %31 = vector.shape_cast %28 : vector<16x16xf32> to vector<1x1x16x16xf32>
    tpu.vector_store %arg6[%c0_28, %c0_29, %c0_30, %c0_31], %31 {strides = array<i32>} : memref<1x3x16x16xf32, #tpu.memory_space<vmem>>, vector<1x1x16x16xf32>,
    %c0_32 = arith.constant 0 : index
    %c0_33 = arith.constant 0 : index
    %c0_34 = arith.constant 0 : index
    %c0_35 = arith.constant 0 : index
    %c0_36 = arith.constant 0 : index
    %32 = vector.load %arg2[%c0_32, %c0_33, %c0_34, %c0_35, %c0_36] : memref<1x3x16x5x80xf32, #tpu.memory_space<vmem>>, vector<1x1x16x5x80xf32>
    %33 = vector.shape_cast %32 : vector<1x1x16x5x80xf32> to vector<16x5x80xf32>
    %c1_37 = arith.constant 1 : index
    %c0_38 = arith.constant 0 : index
    %c0_39 = arith.constant 0 : index
    %c0_40 = arith.constant 0 : index
    %34 = vector.load %arg3[%c1_37, %c0_38, %c0_39, %c0_40] : memref<3x3x5x80xf32, #tpu.memory_space<vmem>>, vector<1x1x5x80xf32>
    %35 = vector.shape_cast %34 : vector<1x1x5x80xf32> to vector<5x80xf32>
    %36 = vector.shape_cast %35 : vector<5x80xf32> to vector<1x5x80xf32>
    %37 = vector.broadcast %36 : vector<1x5x80xf32> to vector<16x5x80xf32>
    %38 = arith.mulf %33, %37 : vector<16x5x80xf32>
    %c0_41 = arith.constant 0 : index
    %c1_42 = arith.constant 1 : index
    %c0_43 = arith.constant 0 : index
    %c0_44 = arith.constant 0 : index
    %c0_45 = arith.constant 0 : index
    %39 = vector.load %arg2[%c0_41, %c1_42, %c0_43, %c0_44, %c0_45] : memref<1x3x16x5x80xf32, #tpu.memory_space<vmem>>, vector<1x1x16x5x80xf32>
    %40 = vector.shape_cast %39 : vector<1x1x16x5x80xf32> to vector<16x5x80xf32>
    %c1_46 = arith.constant 1 : index
    %c1_47 = arith.constant 1 : index
    %c0_48 = arith.constant 0 : index
    %c0_49 = arith.constant 0 : index
    %41 = vector.load %arg3[%c1_46, %c1_47, %c0_48, %c0_49] : memref<3x3x5x80xf32, #tpu.memory_space<vmem>>, vector<1x1x5x80xf32>
    %42 = vector.shape_cast %41 : vector<1x1x5x80xf32> to vector<5x80xf32>
    %43 = vector.shape_cast %42 : vector<5x80xf32> to vector<1x5x80xf32>
    %44 = vector.broadcast %43 : vector<1x5x80xf32> to vector<16x5x80xf32>
    %45 = arith.mulf %40, %44 : vector<16x5x80xf32>
    %46 = arith.addf %38, %45 : vector<16x5x80xf32>
    %c0_50 = arith.constant 0 : index
    %c2_51 = arith.constant 2 : index
    %c0_52 = arith.constant 0 : index
    %c0_53 = arith.constant 0 : index
    %c0_54 = arith.constant 0 : index
    %47 = vector.load %arg2[%c0_50, %c2_51, %c0_52, %c0_53, %c0_54] : memref<1x3x16x5x80xf32, #tpu.memory_space<vmem>>, vector<1x1x16x5x80xf32>
    %48 = vector.shape_cast %47 : vector<1x1x16x5x80xf32> to vector<16x5x80xf32>
    %c1_55 = arith.constant 1 : index
    %c2_56 = arith.constant 2 : index
    %c0_57 = arith.constant 0 : index
    %c0_58 = arith.constant 0 : index
    %49 = vector.load %arg3[%c1_55, %c2_56, %c0_57, %c0_58] : memref<3x3x5x80xf32, #tpu.memory_space<vmem>>, vector<1x1x5x80xf32>
    %50 = vector.shape_cast %49 : vector<1x1x5x80xf32> to vector<5x80xf32>
    %51 = vector.shape_cast %50 : vector<5x80xf32> to vector<1x5x80xf32>
    %52 = vector.broadcast %51 : vector<1x5x80xf32> to vector<16x5x80xf32>
    %53 = arith.mulf %48, %52 : vector<16x5x80xf32>
    %54 = arith.addf %46, %53 : vector<16x5x80xf32>
    %cst_59 = arith.constant dense<0.000000e+00> : vector<16x80xf32>
    %55 = vector.multi_reduction <add>, %54, %cst_59 [1] : vector<16x5x80xf32> to vector<16x80xf32>
    %c0_60 = arith.constant 0 : index
    %c0_61 = arith.constant 0 : index
    %56 = vector.load %arg4[%c0_60, %c0_61] : memref<80x16xf32, #tpu.memory_space<vmem>>, vector<80x16xf32>
    %cst_62 = arith.constant dense<0.000000e+00> : vector<16x16xf32>
    %57 = tpu.matmul %55, %56, %cst_62 {dimension_numbers = #tpu.dot_dimension_numbers<[1], [0], [0], [1], [0, 0, 1, 1], [], []>} : vector<16x80xf32>, vector<80x16xf32>, vector<16x16xf32> -> vector<16x16xf32>
    %c1_63 = arith.constant 1 : index
    %58 = memref.load %arg5[%c1_63] : memref<3xf32, #tpu.memory_space<smem>>
    %59 = vector.broadcast %58 : f32 to vector<16x16xf32>
    %60 = arith.addf %57, %59 : vector<16x16xf32>
    %c0_64 = arith.constant 0 : index
    %c1_65 = arith.constant 1 : index
    %c0_66 = arith.constant 0 : index
    %c0_67 = arith.constant 0 : index
    %61 = vector.load %arg6[%c0_64, %c1_65, %c0_66, %c0_67] : memref<1x3x16x16xf32, #tpu.memory_space<vmem>>, vector<1x1x16x16xf32>
    %62 = vector.shape_cast %61 : vector<1x1x16x16xf32> to vector<16x16xf32>
    %63 = vector.shape_cast %60 : vector<16x16xf32> to vector<1x1x16x16xf32>
    tpu.vector_store %arg6[%c0_64, %c1_65, %c0_66, %c0_67], %63 {strides = array<i32>} : memref<1x3x16x16xf32, #tpu.memory_space<vmem>>, vector<1x1x16x16xf32>,
    %c0_68 = arith.constant 0 : index
    %c0_69 = arith.constant 0 : index
    %c0_70 = arith.constant 0 : index
    %c0_71 = arith.constant 0 : index
    %c0_72 = arith.constant 0 : index
    %64 = vector.load %arg2[%c0_68, %c0_69, %c0_70, %c0_71, %c0_72] : memref<1x3x16x5x80xf32, #tpu.memory_space<vmem>>, vector<1x1x16x5x80xf32>
    %65 = vector.shape_cast %64 : vector<1x1x16x5x80xf32> to vector<16x5x80xf32>
    %c2_73 = arith.constant 2 : index
    %c0_74 = arith.constant 0 : index
    %c0_75 = arith.constant 0 : index
    %c0_76 = arith.constant 0 : index
    %66 = vector.load %arg3[%c2_73, %c0_74, %c0_75, %c0_76] : memref<3x3x5x80xf32, #tpu.memory_space<vmem>>, vector<1x1x5x80xf32>
    %67 = vector.shape_cast %66 : vector<1x1x5x80xf32> to vector<5x80xf32>
    %68 = vector.shape_cast %67 : vector<5x80xf32> to vector<1x5x80xf32>
    %69 = vector.broadcast %68 : vector<1x5x80xf32> to vector<16x5x80xf32>
    %70 = arith.mulf %65, %69 : vector<16x5x80xf32>
    %c0_77 = arith.constant 0 : index
    %c1_78 = arith.constant 1 : index
    %c0_79 = arith.constant 0 : index
    %c0_80 = arith.constant 0 : index
    %c0_81 = arith.constant 0 : index
    %71 = vector.load %arg2[%c0_77, %c1_78, %c0_79, %c0_80, %c0_81] : memref<1x3x16x5x80xf32, #tpu.memory_space<vmem>>, vector<1x1x16x5x80xf32>
    %72 = vector.shape_cast %71 : vector<1x1x16x5x80xf32> to vector<16x5x80xf32>
    %c2_82 = arith.constant 2 : index
    %c1_83 = arith.constant 1 : index
    %c0_84 = arith.constant 0 : index
    %c0_85 = arith.constant 0 : index
    %73 = vector.load %arg3[%c2_82, %c1_83, %c0_84, %c0_85] : memref<3x3x5x80xf32, #tpu.memory_space<vmem>>, vector<1x1x5x80xf32>
    %74 = vector.shape_cast %73 : vector<1x1x5x80xf32> to vector<5x80xf32>
    %75 = vector.shape_cast %74 : vector<5x80xf32> to vector<1x5x80xf32>
    %76 = vector.broadcast %75 : vector<1x5x80xf32> to vector<16x5x80xf32>
    %77 = arith.mulf %72, %76 : vector<16x5x80xf32>
    %78 = arith.addf %70, %77 : vector<16x5x80xf32>
    %c0_86 = arith.constant 0 : index
    %c2_87 = arith.constant 2 : index
    %c0_88 = arith.constant 0 : index
    %c0_89 = arith.constant 0 : index
    %c0_90 = arith.constant 0 : index
    %79 = vector.load %arg2[%c0_86, %c2_87, %c0_88, %c0_89, %c0_90] : memref<1x3x16x5x80xf32, #tpu.memory_space<vmem>>, vector<1x1x16x5x80xf32>
    %80 = vector.shape_cast %79 : vector<1x1x16x5x80xf32> to vector<16x5x80xf32>
    %c2_91 = arith.constant 2 : index
    %c2_92 = arith.constant 2 : index
    %c0_93 = arith.constant 0 : index
    %c0_94 = arith.constant 0 : index
    %81 = vector.load %arg3[%c2_91, %c2_92, %c0_93, %c0_94] : memref<3x3x5x80xf32, #tpu.memory_space<vmem>>, vector<1x1x5x80xf32>
    %82 = vector.shape_cast %81 : vector<1x1x5x80xf32> to vector<5x80xf32>
    %83 = vector.shape_cast %82 : vector<5x80xf32> to vector<1x5x80xf32>
    %84 = vector.broadcast %83 : vector<1x5x80xf32> to vector<16x5x80xf32>
    %85 = arith.mulf %80, %84 : vector<16x5x80xf32>
    %86 = arith.addf %78, %85 : vector<16x5x80xf32>
    %cst_95 = arith.constant dense<0.000000e+00> : vector<16x80xf32>
    %87 = vector.multi_reduction <add>, %86, %cst_95 [1] : vector<16x5x80xf32> to vector<16x80xf32>
    %c0_96 = arith.constant 0 : index
    %c0_97 = arith.constant 0 : index
    %88 = vector.load %arg4[%c0_96, %c0_97] : memref<80x16xf32, #tpu.memory_space<vmem>>, vector<80x16xf32>
    %cst_98 = arith.constant dense<0.000000e+00> : vector<16x16xf32>
    %89 = tpu.matmul %87, %88, %cst_98 {dimension_numbers = #tpu.dot_dimension_numbers<[1], [0], [0], [1], [0, 0, 1, 1], [], []>} : vector<16x80xf32>, vector<80x16xf32>, vector<16x16xf32> -> vector<16x16xf32>
    %c2_99 = arith.constant 2 : index
    %90 = memref.load %arg5[%c2_99] : memref<3xf32, #tpu.memory_space<smem>>
    %91 = vector.broadcast %90 : f32 to vector<16x16xf32>
    %92 = arith.addf %89, %91 : vector<16x16xf32>
    %c0_100 = arith.constant 0 : index
    %c2_101 = arith.constant 2 : index
    %c0_102 = arith.constant 0 : index
    %c0_103 = arith.constant 0 : index
    %93 = vector.load %arg6[%c0_100, %c2_101, %c0_102, %c0_103] : memref<1x3x16x16xf32, #tpu.memory_space<vmem>>, vector<1x1x16x16xf32>
    %94 = vector.shape_cast %93 : vector<1x1x16x16xf32> to vector<16x16xf32>
    %95 = vector.shape_cast %92 : vector<16x16xf32> to vector<1x1x16x16xf32>
    tpu.vector_store %arg6[%c0_100, %c2_101, %c0_102, %c0_103], %95 {strides = array<i32>} : memref<1x3x16x16xf32, #tpu.memory_space<vmem>>, vector<1x1x16x16xf32>,
    return
  }
  func.func @transform_0(%arg0: i32, %arg1: i32) -> (i32, i32, i32, i32, i32) {
    %c0_i32 = arith.constant 0 : i32
    %c0_i32_0 = arith.constant 0 : i32
    %c0_i32_1 = arith.constant 0 : i32
    %c0_i32_2 = arith.constant 0 : i32
    return %arg0, %c0_i32, %arg1, %c0_i32_0, %c0_i32_1 : i32, i32, i32, i32, i32
  }
  func.func @transform_1(%arg0: i32, %arg1: i32) -> (i32, i32, i32, i32) {
    %c0_i32 = arith.constant 0 : i32
    %c0_i32_0 = arith.constant 0 : i32
    %c0_i32_1 = arith.constant 0 : i32
    %c0_i32_2 = arith.constant 0 : i32
    %c0_i32_3 = arith.constant 0 : i32
    return %c0_i32, %c0_i32_0, %c0_i32_1, %c0_i32_2 : i32, i32, i32, i32
  }
  func.func @transform_2(%arg0: i32, %arg1: i32) -> (i32, i32) {
    %c0_i32 = arith.constant 0 : i32
    %c0_i32_0 = arith.constant 0 : i32
    %c0_i32_1 = arith.constant 0 : i32
    return %c0_i32, %c0_i32_0 : i32, i32
  }
  func.func @transform_3(%arg0: i32, %arg1: i32) -> i32 {
    %c0_i32 = arith.constant 0 : i32
    %c0_i32_0 = arith.constant 0 : i32
    return %c0_i32 : i32
  }
  func.func @transform_4(%arg0: i32, %arg1: i32) -> (i32, i32, i32, i32) {
    %c0_i32 = arith.constant 0 : i32
    %c0_i32_0 = arith.constant 0 : i32
    %c0_i32_1 = arith.constant 0 : i32
    return %arg0, %c0_i32, %arg1, %c0_i32_0 : i32, i32, i32, i32
  }
}

</mosaic_0001>

<llo_original>
// kernel: tile.9
$region0: #{tile.9}
  %s0 = inlined_call_operand.vmem [shape: f32[3,3,5,16,5], index: 0, kind: input, shape index: {}]
  %s1 = inlined_call_operand.vmem [shape: f32[3,3,5,80], index: 1, kind: output, shape index: {}]
  $region1: #{tile.9} parent=0
    #allocation0 [shape = 'u8[61440]{0}', space=vmem, size = 0xf000, scoped, tag = 'scoped mem for output reshape']
    %s2 = smov 3
    %v3 = vld [vmem:[%s0] ss:$16 sm:%s2]
    %s4 = smov 12
    %v5 = vld [vmem:[%s0] ss:$16 sm:%s4]
    %vm6 = vcmask 1043458
    %v7 = vsel %vm6, %v5, %v3
    %s8 = smov 48
    %v9 = vld [vmem:[%s0] ss:$16 sm:%s8]
    %vm10 = vcmask 1045508
    %v11 = vsel %vm10, %v9, %v7
    %s12 = smov 192
    %v13 = vld [vmem:[%s0] ss:$16 sm:%s12]
    %vm14 = vcmask 1047558
    %v15 = vsel %vm14, %v13, %v11
    %vm16 = vcmask 39936
    %17 = vst.msk [vmem:[#allocation0] sm:$0x7] %vm16, %v15
    %s18 = scalar_lea.vmem [#allocation0], 5
    %19 = vst.msk [vmem:[%s18] sm:$0x38] %vm16, %v15
    %s20 = scalar_lea.vmem [#allocation0], 10
    %21 = vst.msk [vmem:[%s20] sm:$0xc0] %vm16, %v15
    %s22 = scalar_lea.vmem %s0, 128
    %s23 = smov 3
    %v24 = vld [vmem:[%s22] ss:$16 sm:%s23]
    %s25 = scalar_lea.vmem %s0, 128
    %s26 = smov 12
    %v27 = vld [vmem:[%s25] ss:$16 sm:%s26]
    %vm28 = vcmask 1043458
    %v29 = vsel %vm28, %v27, %v24
    %s30 = scalar_lea.vmem %s0, 128
    %s31 = smov 48
    %v32 = vld [vmem:[%s30] ss:$16 sm:%s31]
    %vm33 = vcmask 1045508
    %v34 = vsel %vm33, %v32, %v29
    %s35 = scalar_lea.vmem %s0, 128
    %s36 = smov 192
    %v37 = vld [vmem:[%s35] ss:$16 sm:%s36]
    %vm38 = vcmask 1047558
    %v39 = vsel %vm38, %v37, %v34
    %vm40 = vcmask 39936
    %s41 = scalar_lea.vmem [#allocation0], 18
    %42 = vst.msk [vmem:[%s41] ss:$6 sm:$0x3] %vm40, %v39
    %s43 = scalar_lea.vmem [#allocation0], 23
    %44 = vst.msk [vmem:[%s43] sm:$0xc] %vm40, %v39
    %s45 = scalar_lea.vmem [#allocation0], 28
    %46 = vst.msk [vmem:[%s45] sm:$0x70] %vm40, %v39
    %s47 = scalar_lea.vmem [#allocation0], 33
    %48 = vst.msk [vmem:[%s47] sm:$0x80] %vm40, %v39
    %s49 = scalar_lea.vmem %s0, 256
    %s50 = smov 3
    %v51 = vld [vmem:[%s49] ss:$16 sm:%s50]
    %s52 = scalar_lea.vmem %s0, 256
    %s53 = smov 12
    %v54 = vld [vmem:[%s52] ss:$16 sm:%s53]
    %vm55 = vcmask 1043458
    %v56 = vsel %vm55, %v54, %v51
    %s57 = scalar_lea.vmem %s0, 256
    %s58 = smov 48
    %v59 = vld [vmem:[%s57] ss:$16 sm:%s58]
    %vm60 = vcmask 1045508
    %v61 = vsel %vm60, %v59, %v56
    %s62 = scalar_lea.vmem %s0, 256
    %s63 = smov 192
    %v64 = vld [vmem:[%s62] ss:$16 sm:%s63]
    %vm65 = vcmask 1047558
    %v66 = vsel %vm65, %v64, %v61
    %vm67 = vcmask 39936
    %s68 = scalar_lea.vmem [#allocation0], 41
    %69 = vst.msk [vmem:[%s68] sm:$0x3] %vm67, %v66
    %s70 = scalar_lea.vmem [#allocation0], 46
    %71 = vst.msk [vmem:[%s70] sm:$0x1c] %vm67, %v66
    %s72 = scalar_lea.vmem [#allocation0], 51
    %73 = vst.msk [vmem:[%s72] sm:$0xe0] %vm67, %v66
    %s74 = scalar_lea.vmem %s0, 384
    %s75 = smov 3
    %v76 = vld [vmem:[%s74] ss:$16 sm:%s75]
    %s77 = scalar_lea.vmem %s0, 384
    %s78 = smov 12
    %v79 = vld [vmem:[%s77] ss:$16 sm:%s78]
    %vm80 = vcmask 1043458
    %v81 = vsel %vm80, %v79, %v76
    %s82 = scalar_lea.vmem %s0, 384
    %s83 = smov 48
    %v84 = vld [vmem:[%s82] ss:$16 sm:%s83]
    %vm85 = vcmask 1045508
    %v86 = vsel %vm85, %v84, %v81
    %s87 = scalar_lea.vmem %s0, 384
    %s88 = smov 192
    %v89 = vld [vmem:[%s87] ss:$16 sm:%s88]
    %vm90 = vcmask 1047558
    %v91 = vsel %vm90, %v89, %v86
    %vm92 = vcmask 39936
    %s93 = scalar_lea.vmem [#allocation0], 64
    %94 = vst.msk [vmem:[%s93] sm:$0x7] %vm92, %v91
    %s95 = scalar_lea.vmem [#allocation0], 69
    %96 = vst.msk [vmem:[%s95] sm:$0x38] %vm92, %v91
    %s97 = scalar_lea.vmem [#allocation0], 74
    %98 = vst.msk [vmem:[%s97] sm:$0xc0] %vm92, %v91
    %s99 = scalar_lea.vmem %s0, 512
    %s100 = smov 3
    %v101 = vld [vmem:[%s99] ss:$16 sm:%s100]
    %s102 = scalar_lea.vmem %s0, 512
    %s103 = smov 12
    %v104 = vld [vmem:[%s102] ss:$16 sm:%s103]
    %vm105 = vcmask 1043458
    %v106 = vsel %vm105, %v104, %v101
    %s107 = scalar_lea.vmem %s0, 512
    %s108 = smov 48
    %v109 = vld [vmem:[%s107] ss:$16 sm:%s108]
    %vm110 = vcmask 1045508
    %v111 = vsel %vm110, %v109, %v106
    %s112 = scalar_lea.vmem %s0, 512
    %s113 = smov 192
    %v114 = vld [vmem:[%s112] ss:$16 sm:%s113]
    %vm115 = vcmask 1047558
    %v116 = vsel %vm115, %v114, %v111
    %vm117 = vcmask 39936
    %s118 = scalar_lea.vmem [#allocation0], 82
    %119 = vst.msk [vmem:[%s118] ss:$6 sm:$0x3] %vm117, %v116
    %s120 = scalar_lea.vmem [#allocation0], 87
    %121 = vst.msk [vmem:[%s120] sm:$0xc] %vm117, %v116
    %s122 = scalar_lea.vmem [#allocation0], 92
    %123 = vst.msk [vmem:[%s122] sm:$0x70] %vm117, %v116
    %s124 = scalar_lea.vmem [#allocation0], 97
    %125 = vst.msk [vmem:[%s124] sm:$0x80] %vm117, %v116
    %s126 = scalar_lea.vmem %s0, 640
    %s127 = smov 3
    %v128 = vld [vmem:[%s126] ss:$16 sm:%s127]
    %s129 = scalar_lea.vmem %s0, 640
    %s130 = smov 12
    %v131 = vld [vmem:[%s129] ss:$16 sm:%s130]
    %vm132 = vcmask 1043458
    %v133 = vsel %vm132, %v131, %v128
    %s134 = scalar_lea.vmem %s0, 700
    %v135 = vld [vmem:[%s134] sm:$0x10]
    %vm136 = vcmask 1044484
    %v137 = vsel %vm136, %v135, %v133
    %vm138 = vcmask 39936
    %s139 = scalar_lea.vmem [#allocation0], 105
    %140 = vst.msk [vmem:[%s139] sm:$0x3] %vm138, %v137
    %s141 = scalar_lea.vmem [#allocation0], 110
    %142 = vst.msk [vmem:[%s141] sm:$0x1c] %vm138, %v137
    %s143 = scalar_lea.vmem %s0, 15
    %s144 = smov 3
    %v145 = vld [vmem:[%s143] ss:$16 sm:%s144]
    %s146 = scalar_lea.vmem %s0, 15
    %s147 = smov 12
    %v148 = vld [vmem:[%s146] ss:$16 sm:%s147]
    %vm149 = vcmask 1043458
    %v150 = vsel %vm149, %v148, %v145
    %s151 = scalar_lea.vmem %s0, 15
    %s152 = smov 48
    %v153 = vld [vmem:[%s151] ss:$16 sm:%s152]
    %vm154 = vcmask 1045508
    %v155 = vsel %vm154, %v153, %v150
    %s156 = scalar_lea.vmem %s0, 15
    %s157 = smov 192
    %v158 = vld [vmem:[%s156] ss:$16 sm:%s157]
    %vm159 = vcmask 1047558
    %v160 = vsel %vm159, %v158, %v155
    %161 = vrot.lane.b32.xlu0 %v160, 75
    %v162 = vpop.permute.xlu0 %161
    %vm163 = vcmask 654936
    %164 = vst.msk [vmem:[#allocation0] sm:$0x7] %vm163, %v162
    %s165 = scalar_lea.vmem [#allocation0], 5
    %166 = vst.msk [vmem:[%s165] sm:$0x38] %vm163, %v162
    %s167 = scalar_lea.vmem [#allocation0], 10
    %168 = vst.msk [vmem:[%s167] sm:$0xc0] %vm163, %v162
    %s169 = scalar_lea.vmem %s0, 207
    %s170 = smov 3
    %v171 = vld [vmem:[%s169] ss:$16 sm:%s170]
    %s172 = scalar_lea.vmem %s0, 207
    %s173 = smov 12
    %v174 = vld [vmem:[%s172] ss:$16 sm:%s173]
    %vm175 = vcmask 1043458
    %v176 = vsel %vm175, %v174, %v171
    %s177 = scalar_lea.vmem %s0, 207
    %s178 = smov 48
    %v179 = vld [vmem:[%s177] ss:$16 sm:%s178]
    %vm180 = vcmask 1045508
    %v181 = vsel %vm180, %v179, %v176
    %s182 = scalar_lea.vmem %s0, 207
    %s183 = smov 192
    %v184 = vld [vmem:[%s182] ss:$16 sm:%s183]
    %vm185 = vcmask 1047558
    %v186 = vsel %vm185, %v184, %v181
    %187 = vrot.lane.b32.xlu0 %v186, 75
    %v188 = vpop.permute.xlu0 %187
    %vm189 = vcmask 654936
    %s190 = scalar_lea.vmem [#allocation0], 32
    %191 = vst.msk [vmem:[%s190] sm:$0x7] %vm189, %v188
    %s192 = scalar_lea.vmem [#allocation0], 37
    %193 = vst.msk [vmem:[%s192] sm:$0x38] %vm189, %v188
    %s194 = scalar_lea.vmem [#allocation0], 42
    %195 = vst.msk [vmem:[%s194] sm:$0xc0] %vm189, %v188
    %s196 = scalar_lea.vmem %s0, 399
    %s197 = smov 3
    %v198 = vld [vmem:[%s196] ss:$16 sm:%s197]
    %s199 = scalar_lea.vmem %s0, 399
    %s200 = smov 12
    %v201 = vld [vmem:[%s199] ss:$16 sm:%s200]
    %vm202 = vcmask 1043458
    %v203 = vsel %vm202, %v201, %v198
    %s204 = scalar_lea.vmem %s0, 399
    %s205 = smov 48
    %v206 = vld [vmem:[%s204] ss:$16 sm:%s205]
    %vm207 = vcmask 1045508
    %v208 = vsel %vm207, %v206, %v203
    %s209 = scalar_lea.vmem %s0, 399
    %s210 = smov 192
    %v211 = vld [vmem:[%s209] ss:$16 sm:%s210]
    %vm212 = vcmask 1047558
    %v213 = vsel %vm212, %v211, %v208
    %214 = vrot.lane.b32.xlu0 %v213, 75
    %v215 = vpop.permute.xlu0 %214
    %vm216 = vcmask 654936
    %s217 = scalar_lea.vmem [#allocation0], 64
    %218 = vst.msk [vmem:[%s217] sm:$0x7] %vm216, %v215
    %s219 = scalar_lea.vmem [#allocation0], 69
    %220 = vst.msk [vmem:[%s219] sm:$0x38] %vm216, %v215
    %s221 = scalar_lea.vmem [#allocation0], 74
    %222 = vst.msk [vmem:[%s221] sm:$0xc0] %vm216, %v215
    %s223 = scalar_lea.vmem %s0, 591
    %s224 = smov 3
    %v225 = vld [vmem:[%s223] ss:$16 sm:%s224]
    %s226 = scalar_lea.vmem %s0, 591
    %s227 = smov 12
    %v228 = vld [vmem:[%s226] ss:$16 sm:%s227]
    %vm229 = vcmask 1043458
    %v230 = vsel %vm229, %v228, %v225
    %s231 = scalar_lea.vmem %s0, 591
    %s232 = smov 48
    %v233 = vld [vmem:[%s231] ss:$16 sm:%s232]
    %vm234 = vcmask 1045508
    %v235 = vsel %vm234, %v233, %v230
    %s236 = scalar_lea.vmem %s0, 591
    %s237 = smov 192
    %v238 = vld [vmem:[%s236] ss:$16 sm:%s237]
    %vm239 = vcmask 1047558
    %v240 = vsel %vm239, %v238, %v235
    %241 = vrot.lane.b32.xlu0 %v240, 75
    %v242 = vpop.permute.xlu0 %241
    %vm243 = vcmask 654936
    %s244 = scalar_lea.vmem [#allocation0], 96
    %245 = vst.msk [vmem:[%s244] sm:$0x7] %vm243, %v242
    %s246 = scalar_lea.vmem [#allocation0], 101
    %247 = vst.msk [vmem:[%s246] sm:$0x38] %vm243, %v242
    %s248 = scalar_lea.vmem [#allocation0], 106
    %249 = vst.msk [vmem:[%s248] sm:$0xc0] %vm243, %v242
    %s250 = scalar_lea.vmem %s0, 143
    %s251 = smov 3
    %v252 = vld [vmem:[%s250] ss:$16 sm:%s251]
    %s253 = scalar_lea.vmem %s0, 143
    %s254 = smov 12
    %v255 = vld [vmem:[%s253] ss:$16 sm:%s254]
    %vm256 = vcmask 1043458
    %v257 = vsel %vm256, %v255, %v252
    %s258 = scalar_lea.vmem %s0, 271
    %s259 = smov 48
    %v260 = vld [vmem:[%s258] ss:$16 sm:%s259]
    %vm261 = vcmask 1045508
    %v262 = vsel %vm261, %v260, %v257
    %s263 = scalar_lea.vmem %s0, 271
    %s264 = smov 192
    %v265 = vld [vmem:[%s263] ss:$16 sm:%s264]
    %vm266 = vcmask 1047558
    %v267 = vsel %vm266, %v265, %v262
    %268 = vrot.lane.b32.xlu0 %v267, 75
    %v269 = vpop.permute.xlu0 %268
    %vm270 = vcmask 654936
    %s271 = scalar_lea.vmem [#allocation0], 18
    %272 = vst.msk [vmem:[%s271] ss:$6 sm:$0x3] %vm270, %v269
    %s273 = scalar_lea.vmem [#allocation0], 23
    %274 = vst.msk [vmem:[%s273] sm:$0xc] %vm270, %v269
    %s275 = scalar_lea.vmem [#allocation0], 26
    %276 = vst.msk [vmem:[%s275] ss:$6 sm:$0x30] %vm270, %v269
    %s277 = scalar_lea.vmem [#allocation0], 51
    %278 = vst.msk [vmem:[%s277] sm:$0xc0] %vm270, %v269
    %s279 = scalar_lea.vmem %s0, 527
    %s280 = smov 3
    %v281 = vld [vmem:[%s279] ss:$16 sm:%s280]
    %s282 = scalar_lea.vmem %s0, 527
    %s283 = smov 12
    %v284 = vld [vmem:[%s282] ss:$16 sm:%s283]
    %vm285 = vcmask 1043458
    %v286 = vsel %vm285, %v284, %v281
    %s287 = scalar_lea.vmem %s0, 715
    %v288 = vld [vmem:[%s287] sm:$0x10]
    %vm289 = vcmask 1044484
    %v290 = vsel %vm289, %v288, %v286
    %291 = vrot.lane.b32.xlu0 %v290, 75
    %v292 = vpop.permute.xlu0 %291
    %vm293 = vcmask 654936
    %s294 = scalar_lea.vmem [#allocation0], 82
    %295 = vst.msk [vmem:[%s294] ss:$6 sm:$0x3] %vm293, %v292
    %s296 = scalar_lea.vmem [#allocation0], 87
    %297 = vst.msk [vmem:[%s296] sm:$0xc] %vm293, %v292
    %s298 = scalar_lea.vmem [#allocation0], 110
    %299 = vst.msk [vmem:[%s298] sm:$0x10] %vm293, %v292
    %s300 = scalar_lea.vmem %s0, 14
    %s301 = smov 3
    %v302 = vld [vmem:[%s300] ss:$16 sm:%s301]
    %s303 = scalar_lea.vmem %s0, 14
    %s304 = smov 12
    %v305 = vld [vmem:[%s303] ss:$16 sm:%s304]
    %vm306 = vcmask 1043458
    %v307 = vsel %vm306, %v305, %v302
    %s308 = scalar_lea.vmem %s0, 14
    %s309 = smov 48
    %v310 = vld [vmem:[%s308] ss:$16 sm:%s309]
    %vm311 = vcmask 1045508
    %v312 = vsel %vm311, %v310, %v307
    %s313 = scalar_lea.vmem %s0, 14
    %s314 = smov 192
    %v315 = vld [vmem:[%s313] ss:$16 sm:%s314]
    %vm316 = vcmask 1047558
    %v317 = vsel %vm316, %v315, %v312
    %318 = vrot.lane.b32.xlu0 %v317, 70
    %v319 = vpop.permute.xlu0 %318
    %vm320 = vcmask 613936
    %321 = vst.msk [vmem:[#allocation0] sm:$0x7] %vm320, %v319
    %s322 = scalar_lea.vmem [#allocation0], 5
    %323 = vst.msk [vmem:[%s322] sm:$0x38] %vm320, %v319
    %s324 = scalar_lea.vmem [#allocation0], 10
    %325 = vst.msk [vmem:[%s324] sm:$0xc0] %vm320, %v319
    %s326 = scalar_lea.vmem %s0, 206
    %s327 = smov 3
    %v328 = vld [vmem:[%s326] ss:$16 sm:%s327]
    %s329 = scalar_lea.vmem %s0, 206
    %s330 = smov 12
    %v331 = vld [vmem:[%s329] ss:$16 sm:%s330]
    %vm332 = vcmask 1043458
    %v333 = vsel %vm332, %v331, %v328
    %s334 = scalar_lea.vmem %s0, 206
    %s335 = smov 48
    %v336 = vld [vmem:[%s334] ss:$16 sm:%s335]
    %vm337 = vcmask 1045508
    %v338 = vsel %vm337, %v336, %v333
    %s339 = scalar_lea.vmem %s0, 206
    %s340 = smov 192
    %v341 = vld [vmem:[%s339] ss:$16 sm:%s340]
    %vm342 = vcmask 1047558
    %v343 = vsel %vm342, %v341, %v338
    %344 = vrot.lane.b32.xlu0 %v343, 70
    %v345 = vpop.permute.xlu0 %344
    %vm346 = vcmask 613936
    %s347 = scalar_lea.vmem [#allocation0], 32
    %348 = vst.msk [vmem:[%s347] sm:$0x7] %vm346, %v345
    %s349 = scalar_lea.vmem [#allocation0], 37
    %350 = vst.msk [vmem:[%s349] sm:$0x38] %vm346, %v345
    %s351 = scalar_lea.vmem [#allocation0], 42
    %352 = vst.msk [vmem:[%s351] sm:$0xc0] %vm346, %v345
    %s353 = scalar_lea.vmem %s0, 398
    %s354 = smov 3
    %v355 = vld [vmem:[%s353] ss:$16 sm:%s354]
    %s356 = scalar_lea.vmem %s0, 398
    %s357 = smov 12
    %v358 = vld [vmem:[%s356] ss:$16 sm:%s357]
    %vm359 = vcmask 1043458
    %v360 = vsel %vm359, %v358, %v355
    %s361 = scalar_lea.vmem %s0, 398
    %s362 = smov 48
    %v363 = vld [vmem:[%s361] ss:$16 sm:%s362]
    %vm364 = vcmask 1045508
    %v365 = vsel %vm364, %v363, %v360
    %s366 = scalar_lea.vmem %s0, 398
    %s367 = smov 192
    %v368 = vld [vmem:[%s366] ss:$16 sm:%s367]
    %vm369 = vcmask 1047558
    %v370 = vsel %vm369, %v368, %v365
    %371 = vrot.lane.b32.xlu0 %v370, 70
    %v372 = vpop.permute.xlu0 %371
    %vm373 = vcmask 613936
    %s374 = scalar_lea.vmem [#allocation0], 64
    %375 = vst.msk [vmem:[%s374] sm:$0x7] %vm373, %v372
    %s376 = scalar_lea.vmem [#allocation0], 69
    %377 = vst.msk [vmem:[%s376] sm:$0x38] %vm373, %v372
    %s378 = scalar_lea.vmem [#allocation0], 74
    %379 = vst.msk [vmem:[%s378] sm:$0xc0] %vm373, %v372
    %s380 = scalar_lea.vmem %s0, 590
    %s381 = smov 3
    %v382 = vld [vmem:[%s380] ss:$16 sm:%s381]
    %s383 = scalar_lea.vmem %s0, 590
    %s384 = smov 12
    %v385 = vld [vmem:[%s383] ss:$16 sm:%s384]
    %vm386 = vcmask 1043458
    %v387 = vsel %vm386, %v385, %v382
    %s388 = scalar_lea.vmem %s0, 590
    %s389 = smov 48
    %v390 = vld [vmem:[%s388] ss:$16 sm:%s389]
    %vm391 = vcmask 1045508
    %v392 = vsel %vm391, %v390, %v387
    %s393 = scalar_lea.vmem %s0, 590
    %s394 = smov 192
    %v395 = vld [vmem:[%s393] ss:$16 sm:%s394]
    %vm396 = vcmask 1047558
    %v397 = vsel %vm396, %v395, %v392
    %398 = vrot.lane.b32.xlu0 %v397, 70
    %v399 = vpop.permute.xlu0 %398
    %vm400 = vcmask 613936
    %s401 = scalar_lea.vmem [#allocation0], 96
    %402 = vst.msk [vmem:[%s401] sm:$0x7] %vm400, %v399
    %s403 = scalar_lea.vmem [#allocation0], 101
    %404 = vst.msk [vmem:[%s403] sm:$0x38] %vm400, %v399
    %s405 = scalar_lea.vmem [#allocation0], 106
    %406 = vst.msk [vmem:[%s405] sm:$0xc0] %vm400, %v399
    %s407 = scalar_lea.vmem %s0, 142
    %s408 = smov 3
    %v409 = vld [vmem:[%s407] ss:$16 sm:%s408]
    %s410 = scalar_lea.vmem %s0, 142
    %s411 = smov 12
    %v412 = vld [vmem:[%s410] ss:$16 sm:%s411]
    %vm413 = vcmask 1043458
    %v414 = vsel %vm413, %v412, %v409
    %s415 = scalar_lea.vmem %s0, 270
    %s416 = smov 48
    %v417 = vld [vmem:[%s415] ss:$16 sm:%s416]
    %vm418 = vcmask 1045508
    %v419 = vsel %vm418, %v417, %v414
    %s420 = scalar_lea.vmem %s0, 270
    %s421 = smov 192
    %v422 = vld [vmem:[%s420] ss:$16 sm:%s421]
    %vm423 = vcmask 1047558
    %v424 = vsel %vm423, %v422, %v419
    %425 = vrot.lane.b32.xlu0 %v424, 70
    %v426 = vpop.permute.xlu0 %425
    %vm427 = vcmask 613936
    %s428 = scalar_lea.vmem [#allocation0], 18
    %429 = vst.msk [vmem:[%s428] ss:$6 sm:$0x3] %vm427, %v426
    %s430 = scalar_lea.vmem [#allocation0], 23
    %431 = vst.msk [vmem:[%s430] sm:$0xc] %vm427, %v426
    %s432 = scalar_lea.vmem [#allocation0], 26
    %433 = vst.msk [vmem:[%s432] ss:$6 sm:$0x30] %vm427, %v426
    %s434 = scalar_lea.vmem [#allocation0], 51
    %435 = vst.msk [vmem:[%s434] sm:$0xc0] %vm427, %v426
    %s436 = scalar_lea.vmem %s0, 526
    %s437 = smov 3
    %v438 = vld [vmem:[%s436] ss:$16 sm:%s437]
    %s439 = scalar_lea.vmem %s0, 526
    %s440 = smov 12
    %v441 = vld [vmem:[%s439] ss:$16 sm:%s440]
    %vm442 = vcmask 1043458
    %v443 = vsel %vm442, %v441, %v438
    %s444 = scalar_lea.vmem %s0, 714
    %v445 = vld [vmem:[%s444] sm:$0x10]
    %vm446 = vcmask 1044484
    %v447 = vsel %vm446, %v445, %v443
    %448 = vrot.lane.b32.xlu0 %v447, 70
    %v449 = vpop.permute.xlu0 %448
    %vm450 = vcmask 613936
    %s451 = scalar_lea.vmem [#allocation0], 82
    %452 = vst.msk [vmem:[%s451] ss:$6 sm:$0x3] %vm450, %v449
    %s453 = scalar_lea.vmem [#allocation0], 87
    %454 = vst.msk [vmem:[%s453] sm:$0xc] %vm450, %v449
    %s455 = scalar_lea.vmem [#allocation0], 110
    %456 = vst.msk [vmem:[%s455] sm:$0x10] %vm450, %v449
    %s457 = scalar_lea.vmem %s0, 13
    %s458 = smov 3
    %v459 = vld [vmem:[%s457] ss:$16 sm:%s458]
    %s460 = scalar_lea.vmem %s0, 13
    %s461 = smov 12
    %v462 = vld [vmem:[%s460] ss:$16 sm:%s461]
    %vm463 = vcmask 1043458
    %v464 = vsel %vm463, %v462, %v459
    %s465 = scalar_lea.vmem %s0, 13
    %s466 = smov 48
    %v467 = vld [vmem:[%s465] ss:$16 sm:%s466]
    %vm468 = vcmask 1045508
    %v469 = vsel %vm468, %v467, %v464
    %s470 = scalar_lea.vmem %s0, 13
    %s471 = smov 192
    %v472 = vld [vmem:[%s470] ss:$16 sm:%s471]
    %vm473 = vcmask 1047558
    %v474 = vsel %vm473, %v472, %v469
    %475 = vrot.lane.b32.xlu0 %v474, 65
    %v476 = vpop.permute.xlu0 %475
    %vm477 = vcmask 572936
    %478 = vst.msk [vmem:[#allocation0] sm:$0x7] %vm477, %v476
    %s479 = scalar_lea.vmem [#allocation0], 5
    %480 = vst.msk [vmem:[%s479] sm:$0x38] %vm477, %v476
    %s481 = scalar_lea.vmem [#allocation0], 10
    %482 = vst.msk [vmem:[%s481] sm:$0xc0] %vm477, %v476
    %s483 = scalar_lea.vmem %s0, 205
    %s484 = smov 3
    %v485 = vld [vmem:[%s483] ss:$16 sm:%s484]
    %s486 = scalar_lea.vmem %s0, 205
    %s487 = smov 12
    %v488 = vld [vmem:[%s486] ss:$16 sm:%s487]
    %vm489 = vcmask 1043458
    %v490 = vsel %vm489, %v488, %v485
    %s491 = scalar_lea.vmem %s0, 205
    %s492 = smov 48
    %v493 = vld [vmem:[%s491] ss:$16 sm:%s492]
    %vm494 = vcmask 1045508
    %v495 = vsel %vm494, %v493, %v490
    %s496 = scalar_lea.vmem %s0, 205
    %s497 = smov 192
    %v498 = vld [vmem:[%s496] ss:$16 sm:%s497]
    %vm499 = vcmask 1047558
    %v500 = vsel %vm499, %v498, %v495
    %501 = vrot.lane.b32.xlu0 %v500, 65
    %v502 = vpop.permute.xlu0 %501
    %vm503 = vcmask 572936
    %s504 = scalar_lea.vmem [#allocation0], 32
    %505 = vst.msk [vmem:[%s504] sm:$0x7] %vm503, %v502
    %s506 = scalar_lea.vmem [#allocation0], 37
    %507 = vst.msk [vmem:[%s506] sm:$0x38] %vm503, %v502
    %s508 = scalar_lea.vmem [#allocation0], 42
    %509 = vst.msk [vmem:[%s508] sm:$0xc0] %vm503, %v502
    %s510 = scalar_lea.vmem %s0, 397
    %s511 = smov 3
    %v512 = vld [vmem:[%s510] ss:$16 sm:%s511]
    %s513 = scalar_lea.vmem %s0, 397
    %s514 = smov 12
    %v515 = vld [vmem:[%s513] ss:$16 sm:%s514]
    %vm516 = vcmask 1043458
    %v517 = vsel %vm516, %v515, %v512
    %s518 = scalar_lea.vmem %s0, 397
    %s519 = smov 48
    %v520 = vld [vmem:[%s518] ss:$16 sm:%s519]
    %vm521 = vcmask 1045508
    %v522 = vsel %vm521, %v520, %v517
    %s523 = scalar_lea.vmem %s0, 397
    %s524 = smov 192
    %v525 = vld [vmem:[%s523] ss:$16 sm:%s524]
    %vm526 = vcmask 1047558
    %v527 = vsel %vm526, %v525, %v522
    %528 = vrot.lane.b32.xlu0 %v527, 65
    %v529 = vpop.permute.xlu0 %528
    %vm530 = vcmask 572936
    %s531 = scalar_lea.vmem [#allocation0], 64
    %532 = vst.msk [vmem:[%s531] sm:$0x7] %vm530, %v529
    %s533 = scalar_lea.vmem [#allocation0], 69
    %534 = vst.msk [vmem:[%s533] sm:$0x38] %vm530, %v529
    %s535 = scalar_lea.vmem [#allocation0], 74
    %536 = vst.msk [vmem:[%s535] sm:$0xc0] %vm530, %v529
    %s537 = scalar_lea.vmem %s0, 589
    %s538 = smov 3
    %v539 = vld [vmem:[%s537] ss:$16 sm:%s538]
    %s540 = scalar_lea.vmem %s0, 589
    %s541 = smov 12
    %v542 = vld [vmem:[%s540] ss:$16 sm:%s541]
    %vm543 = vcmask 1043458
    %v544 = vsel %vm543, %v542, %v539
    %s545 = scalar_lea.vmem %s0, 589
    %s546 = smov 48
    %v547 = vld [vmem:[%s545] ss:$16 sm:%s546]
    %vm548 = vcmask 1045508
    %v549 = vsel %vm548, %v547, %v544
    %s550 = scalar_lea.vmem %s0, 589
    %s551 = smov 192
    %v552 = vld [vmem:[%s550] ss:$16 sm:%s551]
    %vm553 = vcmask 1047558
    %v554 = vsel %vm553, %v552, %v549
    %555 = vrot.lane.b32.xlu0 %v554, 65
    %v556 = vpop.permute.xlu0 %555
    %vm557 = vcmask 572936
    %s558 = scalar_lea.vmem [#allocation0], 96
    %559 = vst.msk [vmem:[%s558] sm:$0x7] %vm557, %v556
    %s560 = scalar_lea.vmem [#allocation0], 101
    %561 = vst.msk [vmem:[%s560] sm:$0x38] %vm557, %v556
    %s562 = scalar_lea.vmem [#allocation0], 106
    %563 = vst.msk [vmem:[%s562] sm:$0xc0] %vm557, %v556
    %s564 = scalar_lea.vmem %s0, 141
    %s565 = smov 3
    %v566 = vld [vmem:[%s564] ss:$16 sm:%s565]
    %s567 = scalar_lea.vmem %s0, 141
    %s568 = smov 12
    %v569 = vld [vmem:[%s567] ss:$16 sm:%s568]
    %vm570 = vcmask 1043458
    %v571 = vsel %vm570, %v569, %v566
    %s572 = scalar_lea.vmem %s0, 269
    %s573 = smov 48
    %v574 = vld [vmem:[%s572] ss:$16 sm:%s573]
    %vm575 = vcmask 1045508
    %v576 = vsel %vm575, %v574, %v571
    %s577 = scalar_lea.vmem %s0, 269
    %s578 = smov 192
    %v579 = vld [vmem:[%s577] ss:$16 sm:%s578]
    %vm580 = vcmask 1047558
    %v581 = vsel %vm580, %v579, %v576
    %582 = vrot.lane.b32.xlu0 %v581, 65
    %v583 = vpop.permute.xlu0 %582
    %vm584 = vcmask 572936
    %s585 = scalar_lea.vmem [#allocation0], 18
    %586 = vst.msk [vmem:[%s585] ss:$6 sm:$0x3] %vm584, %v583
    %s587 = scalar_lea.vmem [#allocation0], 23
    %588 = vst.msk [vmem:[%s587] sm:$0xc] %vm584, %v583
    %s589 = scalar_lea.vmem [#allocation0], 26
    %590 = vst.msk [vmem:[%s589] ss:$6 sm:$0x30] %vm584, %v583
    %s591 = scalar_lea.vmem [#allocation0], 51
    %592 = vst.msk [vmem:[%s591] sm:$0xc0] %vm584, %v583
    %s593 = scalar_lea.vmem %s0, 525
    %s594 = smov 3
    %v595 = vld [vmem:[%s593] ss:$16 sm:%s594]
    %s596 = scalar_lea.vmem %s0, 525
    %s597 = smov 12
    %v598 = vld [vmem:[%s596] ss:$16 sm:%s597]
    %vm599 = vcmask 1043458
    %v600 = vsel %vm599, %v598, %v595
    %s601 = scalar_lea.vmem %s0, 713
    %v602 = vld [vmem:[%s601] sm:$0x10]
    %vm603 = vcmask 1044484
    %v604 = vsel %vm603, %v602, %v600
    %605 = vrot.lane.b32.xlu0 %v604, 65
    %v606 = vpop.permute.xlu0 %605
    %vm607 = vcmask 572936
    %s608 = scalar_lea.vmem [#allocation0], 82
    %609 = vst.msk [vmem:[%s608] ss:$6 sm:$0x3] %vm607, %v606
    %s610 = scalar_lea.vmem [#allocation0], 87
    %611 = vst.msk [vmem:[%s610] sm:$0xc] %vm607, %v606
    %s612 = scalar_lea.vmem [#allocation0], 110
    %613 = vst.msk [vmem:[%s612] sm:$0x10] %vm607, %v606
    %s614 = scalar_lea.vmem %s0, 12
    %s615 = smov 3
    %v616 = vld [vmem:[%s614] ss:$16 sm:%s615]
    %s617 = scalar_lea.vmem %s0, 12
    %s618 = smov 12
    %v619 = vld [vmem:[%s617] ss:$16 sm:%s618]
    %vm620 = vcmask 1043458
    %v621 = vsel %vm620, %v619, %v616
    %s622 = scalar_lea.vmem %s0, 12
    %s623 = smov 48
    %v624 = vld [vmem:[%s622] ss:$16 sm:%s623]
    %vm625 = vcmask 1045508
    %v626 = vsel %vm625, %v624, %v621
    %s627 = scalar_lea.vmem %s0, 12
    %s628 = smov 192
    %v629 = vld [vmem:[%s627] ss:$16 sm:%s628]
    %vm630 = vcmask 1047558
    %v631 = vsel %vm630, %v629, %v626
    %632 = vrot.lane.b32.xlu0 %v631, 60
    %v633 = vpop.permute.xlu0 %632
    %vm634 = vcmask 531936
    %635 = vst.msk [vmem:[#allocation0] sm:$0x7] %vm634, %v633
    %s636 = scalar_lea.vmem [#allocation0], 5
    %637 = vst.msk [vmem:[%s636] sm:$0x38] %vm634, %v633
    %s638 = scalar_lea.vmem [#allocation0], 10
    %639 = vst.msk [vmem:[%s638] sm:$0xc0] %vm634, %v633
    %s640 = scalar_lea.vmem %s0, 204
    %s641 = smov 3
    %v642 = vld [vmem:[%s640] ss:$16 sm:%s641]
    %s643 = scalar_lea.vmem %s0, 204
    %s644 = smov 12
    %v645 = vld [vmem:[%s643] ss:$16 sm:%s644]
    %vm646 = vcmask 1043458
    %v647 = vsel %vm646, %v645, %v642
    %s648 = scalar_lea.vmem %s0, 204
    %s649 = smov 48
    %v650 = vld [vmem:[%s648] ss:$16 sm:%s649]
    %vm651 = vcmask 1045508
    %v652 = vsel %vm651, %v650, %v647
    %s653 = scalar_lea.vmem %s0, 204
    %s654 = smov 192
    %v655 = vld [vmem:[%s653] ss:$16 sm:%s654]
    %vm656 = vcmask 1047558
    %v657 = vsel %vm656, %v655, %v652
    %658 = vrot.lane.b32.xlu0 %v657, 60
    %v659 = vpop.permute.xlu0 %658
    %vm660 = vcmask 531936
    %s661 = scalar_lea.vmem [#allocation0], 32
    %662 = vst.msk [vmem:[%s661] sm:$0x7] %vm660, %v659
    %s663 = scalar_lea.vmem [#allocation0], 37
    %664 = vst.msk [vmem:[%s663] sm:$0x38] %vm660, %v659
    %s665 = scalar_lea.vmem [#allocation0], 42
    %666 = vst.msk [vmem:[%s665] sm:$0xc0] %vm660, %v659
    %s667 = scalar_lea.vmem %s0, 396
    %s668 = smov 3
    %v669 = vld [vmem:[%s667] ss:$16 sm:%s668]
    %s670 = scalar_lea.vmem %s0, 396
    %s671 = smov 12
    %v672 = vld [vmem:[%s670] ss:$16 sm:%s671]
    %vm673 = vcmask 1043458
    %v674 = vsel %vm673, %v672, %v669
    %s675 = scalar_lea.vmem %s0, 396
    %s676 = smov 48
    %v677 = vld [vmem:[%s675] ss:$16 sm:%s676]
    %vm678 = vcmask 1045508
    %v679 = vsel %vm678, %v677, %v674
    %s680 = scalar_lea.vmem %s0, 396
    %s681 = smov 192
    %v682 = vld [vmem:[%s680] ss:$16 sm:%s681]
    %vm683 = vcmask 1047558
    %v684 = vsel %vm683, %v682, %v679
    %685 = vrot.lane.b32.xlu0 %v684, 60
    %v686 = vpop.permute.xlu0 %685
    %vm687 = vcmask 531936
    %s688 = scalar_lea.vmem [#allocation0], 64
    %689 = vst.msk [vmem:[%s688] sm:$0x7] %vm687, %v686
    %s690 = scalar_lea.vmem [#allocation0], 69
    %691 = vst.msk [vmem:[%s690] sm:$0x38] %vm687, %v686
    %s692 = scalar_lea.vmem [#allocation0], 74
    %693 = vst.msk [vmem:[%s692] sm:$0xc0] %vm687, %v686
    %s694 = scalar_lea.vmem %s0, 588
    %s695 = smov 3
    %v696 = vld [vmem:[%s694] ss:$16 sm:%s695]
    %s697 = scalar_lea.vmem %s0, 588
    %s698 = smov 12
    %v699 = vld [vmem:[%s697] ss:$16 sm:%s698]
    %vm700 = vcmask 1043458
    %v701 = vsel %vm700, %v699, %v696
    %s702 = scalar_lea.vmem %s0, 588
    %s703 = smov 48
    %v704 = vld [vmem:[%s702] ss:$16 sm:%s703]
    %vm705 = vcmask 1045508
    %v706 = vsel %vm705, %v704, %v701
    %s707 = scalar_lea.vmem %s0, 588
    %s708 = smov 192
    %v709 = vld [vmem:[%s707] ss:$16 sm:%s708]
    %vm710 = vcmask 1047558
    %v711 = vsel %vm710, %v709, %v706
    %712 = vrot.lane.b32.xlu0 %v711, 60
    %v713 = vpop.permute.xlu0 %712
    %vm714 = vcmask 531936
    %s715 = scalar_lea.vmem [#allocation0], 96
    %716 = vst.msk [vmem:[%s715] sm:$0x7] %vm714, %v713
    %s717 = scalar_lea.vmem [#allocation0], 101
    %718 = vst.msk [vmem:[%s717] sm:$0x38] %vm714, %v713
    %s719 = scalar_lea.vmem [#allocation0], 106
    %720 = vst.msk [vmem:[%s719] sm:$0xc0] %vm714, %v713
    %s721 = scalar_lea.vmem %s0, 140
    %s722 = smov 3
    %v723 = vld [vmem:[%s721] ss:$16 sm:%s722]
    %s724 = scalar_lea.vmem %s0, 140
    %s725 = smov 12
    %v726 = vld [vmem:[%s724] ss:$16 sm:%s725]
    %vm727 = vcmask 1043458
    %v728 = vsel %vm727, %v726, %v723
    %s729 = scalar_lea.vmem %s0, 268
    %s730 = smov 48
    %v731 = vld [vmem:[%s729] ss:$16 sm:%s730]
    %vm732 = vcmask 1045508
    %v733 = vsel %vm732, %v731, %v728
    %s734 = scalar_lea.vmem %s0, 268
    %s735 = smov 192
    %v736 = vld [vmem:[%s734] ss:$16 sm:%s735]
    %vm737 = vcmask 1047558
    %v738 = vsel %vm737, %v736, %v733
    %739 = vrot.lane.b32.xlu0 %v738, 60
    %v740 = vpop.permute.xlu0 %739
    %vm741 = vcmask 531936
    %s742 = scalar_lea.vmem [#allocation0], 18
    %743 = vst.msk [vmem:[%s742] ss:$6 sm:$0x3] %vm741, %v740
    %s744 = scalar_lea.vmem [#allocation0], 23
    %745 = vst.msk [vmem:[%s744] sm:$0xc] %vm741, %v740
    %s746 = scalar_lea.vmem [#allocation0], 26
    %747 = vst.msk [vmem:[%s746] ss:$6 sm:$0x30] %vm741, %v740
    %s748 = scalar_lea.vmem [#allocation0], 51
    %749 = vst.msk [vmem:[%s748] sm:$0xc0] %vm741, %v740
    %s750 = scalar_lea.vmem %s0, 524
    %s751 = smov 3
    %v752 = vld [vmem:[%s750] ss:$16 sm:%s751]
    %s753 = scalar_lea.vmem %s0, 524
    %s754 = smov 12
    %v755 = vld [vmem:[%s753] ss:$16 sm:%s754]
    %vm756 = vcmask 1043458
    %v757 = vsel %vm756, %v755, %v752
    %s758 = scalar_lea.vmem %s0, 712
    %v759 = vld [vmem:[%s758] sm:$0x10]
    %vm760 = vcmask 1044484
    %v761 = vsel %vm760, %v759, %v757
    %762 = vrot.lane.b32.xlu0 %v761, 60
    %v763 = vpop.permute.xlu0 %762
    %vm764 = vcmask 531936
    %s765 = scalar_lea.vmem [#allocation0], 82
    %766 = vst.msk [vmem:[%s765] ss:$6 sm:$0x3] %vm764, %v763
    %s767 = scalar_lea.vmem [#allocation0], 87
    %768 = vst.msk [vmem:[%s767] sm:$0xc] %vm764, %v763
    %s769 = scalar_lea.vmem [#allocation0], 110
    %770 = vst.msk [vmem:[%s769] sm:$0x10] %vm764, %v763
    %s771 = scalar_lea.vmem %s0, 11
    %s772 = smov 3
    %v773 = vld [vmem:[%s771] ss:$16 sm:%s772]
    %s774 = scalar_lea.vmem %s0, 11
    %s775 = smov 12
    %v776 = vld [vmem:[%s774] ss:$16 sm:%s775]
    %vm777 = vcmask 1043458
    %v778 = vsel %vm777, %v776, %v773
    %s779 = scalar_lea.vmem %s0, 11
    %s780 = smov 48
    %v781 = vld [vmem:[%s779] ss:$16 sm:%s780]
    %vm782 = vcmask 1045508
    %v783 = vsel %vm782, %v781, %v778
    %s784 = scalar_lea.vmem %s0, 11
    %s785 = smov 192
    %v786 = vld [vmem:[%s784] ss:$16 sm:%s785]
    %vm787 = vcmask 1047558
    %v788 = vsel %vm787, %v786, %v783
    %789 = vrot.lane.b32.xlu0 %v788, 55
    %v790 = vpop.permute.xlu0 %789
    %vm791 = vcmask 490936
    %792 = vst.msk [vmem:[#allocation0] sm:$0x7] %vm791, %v790
    %s793 = scalar_lea.vmem [#allocation0], 5
    %794 = vst.msk [vmem:[%s793] sm:$0x38] %vm791, %v790
    %s795 = scalar_lea.vmem [#allocation0], 10
    %796 = vst.msk [vmem:[%s795] sm:$0xc0] %vm791, %v790
    %s797 = scalar_lea.vmem %s0, 203
    %s798 = smov 3
    %v799 = vld [vmem:[%s797] ss:$16 sm:%s798]
    %s800 = scalar_lea.vmem %s0, 203
    %s801 = smov 12
    %v802 = vld [vmem:[%s800] ss:$16 sm:%s801]
    %vm803 = vcmask 1043458
    %v804 = vsel %vm803, %v802, %v799
    %s805 = scalar_lea.vmem %s0, 203
    %s806 = smov 48
    %v807 = vld [vmem:[%s805] ss:$16 sm:%s806]
    %vm808 = vcmask 1045508
    %v809 = vsel %vm808, %v807, %v804
    %s810 = scalar_lea.vmem %s0, 203
    %s811 = smov 192
    %v812 = vld [vmem:[%s810] ss:$16 sm:%s811]
    %vm813 = vcmask 1047558
    %v814 = vsel %vm813, %v812, %v809
    %815 = vrot.lane.b32.xlu0 %v814, 55
    %v816 = vpop.permute.xlu0 %815
    %vm817 = vcmask 490936
    %s818 = scalar_lea.vmem [#allocation0], 32
    %819 = vst.msk [vmem:[%s818] sm:$0x7] %vm817, %v816
    %s820 = scalar_lea.vmem [#allocation0], 37
    %821 = vst.msk [vmem:[%s820] sm:$0x38] %vm817, %v816
    %s822 = scalar_lea.vmem [#allocation0], 42
    %823 = vst.msk [vmem:[%s822] sm:$0xc0] %vm817, %v816
    %s824 = scalar_lea.vmem %s0, 395
    %s825 = smov 3
    %v826 = vld [vmem:[%s824] ss:$16 sm:%s825]
    %s827 = scalar_lea.vmem %s0, 395
    %s828 = smov 12
    %v829 = vld [vmem:[%s827] ss:$16 sm:%s828]
    %vm830 = vcmask 1043458
    %v831 = vsel %vm830, %v829, %v826
    %s832 = scalar_lea.vmem %s0, 395
    %s833 = smov 48
    %v834 = vld [vmem:[%s832] ss:$16 sm:%s833]
    %vm835 = vcmask 1045508
    %v836 = vsel %vm835, %v834, %v831
    %s837 = scalar_lea.vmem %s0, 395
    %s838 = smov 192
    %v839 = vld [vmem:[%s837] ss:$16 sm:%s838]
    %vm840 = vcmask 1047558
    %v841 = vsel %vm840, %v839, %v836
    %842 = vrot.lane.b32.xlu0 %v841, 55
    %v843 = vpop.permute.xlu0 %842
    %vm844 = vcmask 490936
    %s845 = scalar_lea.vmem [#allocation0], 64
    %846 = vst.msk [vmem:[%s845] sm:$0x7] %vm844, %v843
    %s847 = scalar_lea.vmem [#allocation0], 69
    %848 = vst.msk [vmem:[%s847] sm:$0x38] %vm844, %v843
    %s849 = scalar_lea.vmem [#allocation0], 74
    %850 = vst.msk [vmem:[%s849] sm:$0xc0] %vm844, %v843
    %s851 = scalar_lea.vmem %s0, 587
    %s852 = smov 3
    %v853 = vld [vmem:[%s851] ss:$16 sm:%s852]
    %s854 = scalar_lea.vmem %s0, 587
    %s855 = smov 12
    %v856 = vld [vmem:[%s854] ss:$16 sm:%s855]
    %vm857 = vcmask 1043458
    %v858 = vsel %vm857, %v856, %v853
    %s859 = scalar_lea.vmem %s0, 587
    %s860 = smov 48
    %v861 = vld [vmem:[%s859] ss:$16 sm:%s860]
    %vm862 = vcmask 1045508
    %v863 = vsel %vm862, %v861, %v858
    %s864 = scalar_lea.vmem %s0, 587
    %s865 = smov 192
    %v866 = vld [vmem:[%s864] ss:$16 sm:%s865]
    %vm867 = vcmask 1047558
    %v868 = vsel %vm867, %v866, %v863
    %869 = vrot.lane.b32.xlu0 %v868, 55
    %v870 = vpop.permute.xlu0 %869
    %vm871 = vcmask 490936
    %s872 = scalar_lea.vmem [#allocation0], 96
    %873 = vst.msk [vmem:[%s872] sm:$0x7] %vm871, %v870
    %s874 = scalar_lea.vmem [#allocation0], 101
    %875 = vst.msk [vmem:[%s874] sm:$0x38] %vm871, %v870
    %s876 = scalar_lea.vmem [#allocation0], 106
    %877 = vst.msk [vmem:[%s876] sm:$0xc0] %vm871, %v870
    %s878 = scalar_lea.vmem %s0, 139
    %s879 = smov 3
    %v880 = vld [vmem:[%s878] ss:$16 sm:%s879]
    %s881 = scalar_lea.vmem %s0, 139
    %s882 = smov 12
    %v883 = vld [vmem:[%s881] ss:$16 sm:%s882]
    %vm884 = vcmask 1043458
    %v885 = vsel %vm884, %v883, %v880
    %s886 = scalar_lea.vmem %s0, 267
    %s887 = smov 48
    %v888 = vld [vmem:[%s886] ss:$16 sm:%s887]
    %vm889 = vcmask 1045508
    %v890 = vsel %vm889, %v888, %v885
    %s891 = scalar_lea.vmem %s0, 267
    %s892 = smov 192
    %v893 = vld [vmem:[%s891] ss:$16 sm:%s892]
    %vm894 = vcmask 1047558
    %v895 = vsel %vm894, %v893, %v890
    %896 = vrot.lane.b32.xlu0 %v895, 55
    %v897 = vpop.permute.xlu0 %896
    %vm898 = vcmask 490936
    %s899 = scalar_lea.vmem [#allocation0], 18
    %900 = vst.msk [vmem:[%s899] ss:$6 sm:$0x3] %vm898, %v897
    %s901 = scalar_lea.vmem [#allocation0], 23
    %902 = vst.msk [vmem:[%s901] sm:$0xc] %vm898, %v897
    %s903 = scalar_lea.vmem [#allocation0], 26
    %904 = vst.msk [vmem:[%s903] ss:$6 sm:$0x30] %vm898, %v897
    %s905 = scalar_lea.vmem [#allocation0], 51
    %906 = vst.msk [vmem:[%s905] sm:$0xc0] %vm898, %v897
    %s907 = scalar_lea.vmem %s0, 523
    %s908 = smov 3
    %v909 = vld [vmem:[%s907] ss:$16 sm:%s908]
    %s910 = scalar_lea.vmem %s0, 523
    %s911 = smov 12
    %v912 = vld [vmem:[%s910] ss:$16 sm:%s911]
    %vm913 = vcmask 1043458
    %v914 = vsel %vm913, %v912, %v909
    %s915 = scalar_lea.vmem %s0, 711
    %v916 = vld [vmem:[%s915] sm:$0x10]
    %vm917 = vcmask 1044484
    %v918 = vsel %vm917, %v916, %v914
    %919 = vrot.lane.b32.xlu0 %v918, 55
    %v920 = vpop.permute.xlu0 %919
    %vm921 = vcmask 490936
    %s922 = scalar_lea.vmem [#allocation0], 82
    %923 = vst.msk [vmem:[%s922] ss:$6 sm:$0x3] %vm921, %v920
    %s924 = scalar_lea.vmem [#allocation0], 87
    %925 = vst.msk [vmem:[%s924] sm:$0xc] %vm921, %v920
    %s926 = scalar_lea.vmem [#allocation0], 110
    %927 = vst.msk [vmem:[%s926] sm:$0x10] %vm921, %v920
    %s928 = scalar_lea.vmem %s0, 10
    %s929 = smov 3
    %v930 = vld [vmem:[%s928] ss:$16 sm:%s929]
    %s931 = scalar_lea.vmem %s0, 10
    %s932 = smov 12
    %v933 = vld [vmem:[%s931] ss:$16 sm:%s932]
    %vm934 = vcmask 1043458
    %v935 = vsel %vm934, %v933, %v930
    %s936 = scalar_lea.vmem %s0, 10
    %s937 = smov 48
    %v938 = vld [vmem:[%s936] ss:$16 sm:%s937]
    %vm939 = vcmask 1045508
    %v940 = vsel %vm939, %v938, %v935
    %s941 = scalar_lea.vmem %s0, 10
    %s942 = smov 192
    %v943 = vld [vmem:[%s941] ss:$16 sm:%s942]
    %vm944 = vcmask 1047558
    %v945 = vsel %vm944, %v943, %v940
    %946 = vrot.lane.b32.xlu0 %v945, 50
    %v947 = vpop.permute.xlu0 %946
    %vm948 = vcmask 449936
    %949 = vst.msk [vmem:[#allocation0] sm:$0x7] %vm948, %v947
    %s950 = scalar_lea.vmem [#allocation0], 5
    %951 = vst.msk [vmem:[%s950] sm:$0x38] %vm948, %v947
    %s952 = scalar_lea.vmem [#allocation0], 10
    %953 = vst.msk [vmem:[%s952] sm:$0xc0] %vm948, %v947
    %s954 = scalar_lea.vmem %s0, 202
    %s955 = smov 3
    %v956 = vld [vmem:[%s954] ss:$16 sm:%s955]
    %s957 = scalar_lea.vmem %s0, 202
    %s958 = smov 12
    %v959 = vld [vmem:[%s957] ss:$16 sm:%s958]
    %vm960 = vcmask 1043458
    %v961 = vsel %vm960, %v959, %v956
    %s962 = scalar_lea.vmem %s0, 202
    %s963 = smov 48
    %v964 = vld [vmem:[%s962] ss:$16 sm:%s963]
    %vm965 = vcmask 1045508
    %v966 = vsel %vm965, %v964, %v961
    %s967 = scalar_lea.vmem %s0, 202
    %s968 = smov 192
    %v969 = vld [vmem:[%s967] ss:$16 sm:%s968]
    %vm970 = vcmask 1047558
    %v971 = vsel %vm970, %v969, %v966
    %972 = vrot.lane.b32.xlu0 %v971, 50
    %v973 = vpop.permute.xlu0 %972
    %vm974 = vcmask 449936
    %s975 = scalar_lea.vmem [#allocation0], 32
    %976 = vst.msk [vmem:[%s975] sm:$0x7] %vm974, %v973
    %s977 = scalar_lea.vmem [#allocation0], 37
    %978 = vst.msk [vmem:[%s977] sm:$0x38] %vm974, %v973
    %s979 = scalar_lea.vmem [#allocation0], 42
    %980 = vst.msk [vmem:[%s979] sm:$0xc0] %vm974, %v973
    %s981 = scalar_lea.vmem %s0, 394
    %s982 = smov 3
    %v983 = vld [vmem:[%s981] ss:$16 sm:%s982]
    %s984 = scalar_lea.vmem %s0, 394
    %s985 = smov 12
    %v986 = vld [vmem:[%s984] ss:$16 sm:%s985]
    %vm987 = vcmask 1043458
    %v988 = vsel %vm987, %v986, %v983
    %s989 = scalar_lea.vmem %s0, 394
    %s990 = smov 48
    %v991 = vld [vmem:[%s989] ss:$16 sm:%s990]
    %vm992 = vcmask 1045508
    %v993 = vsel %vm992, %v991, %v988
    %s994 = scalar_lea.vmem %s0, 394
    %s995 = smov 192
    %v996 = vld [vmem:[%s994] ss:$16 sm:%s995]
    %vm997 = vcmask 1047558
    %v998 = vsel %vm997, %v996, %v993
    %999 = vrot.lane.b32.xlu0 %v998, 50
    %v1000 = vpop.permute.xlu0 %999
    %vm1001 = vcmask 449936
    %s1002 = scalar_lea.vmem [#allocation0], 64
    %1003 = vst.msk [vmem:[%s1002] sm:$0x7] %vm1001, %v1000
    %s1004 = scalar_lea.vmem [#allocation0], 69
    %1005 = vst.msk [vmem:[%s1004] sm:$0x38] %vm1001, %v1000
    %s1006 = scalar_lea.vmem [#allocation0], 74
    %1007 = vst.msk [vmem:[%s1006] sm:$0xc0] %vm1001, %v1000
    %s1008 = scalar_lea.vmem %s0, 586
    %s1009 = smov 3
    %v1010 = vld [vmem:[%s1008] ss:$16 sm:%s1009]
    %s1011 = scalar_lea.vmem %s0, 586
    %s1012 = smov 12
    %v1013 = vld [vmem:[%s1011] ss:$16 sm:%s1012]
    %vm1014 = vcmask 1043458
    %v1015 = vsel %vm1014, %v1013, %v1010
    %s1016 = scalar_lea.vmem %s0, 586
    %s1017 = smov 48
    %v1018 = vld [vmem:[%s1016] ss:$16 sm:%s1017]
    %vm1019 = vcmask 1045508
    %v1020 = vsel %vm1019, %v1018, %v1015
    %s1021 = scalar_lea.vmem %s0, 586
    %s1022 = smov 192
    %v1023 = vld [vmem:[%s1021] ss:$16 sm:%s1022]
    %vm1024 = vcmask 1047558
    %v1025 = vsel %vm1024, %v1023, %v1020
    %1026 = vrot.lane.b32.xlu0 %v1025, 50
    %v1027 = vpop.permute.xlu0 %1026
    %vm1028 = vcmask 449936
    %s1029 = scalar_lea.vmem [#allocation0], 96
    %1030 = vst.msk [vmem:[%s1029] sm:$0x7] %vm1028, %v1027
    %s1031 = scalar_lea.vmem [#allocation0], 101
    %1032 = vst.msk [vmem:[%s1031] sm:$0x38] %vm1028, %v1027
    %s1033 = scalar_lea.vmem [#allocation0], 106
    %1034 = vst.msk [vmem:[%s1033] sm:$0xc0] %vm1028, %v1027
    %s1035 = scalar_lea.vmem %s0, 138
    %s1036 = smov 3
    %v1037 = vld [vmem:[%s1035] ss:$16 sm:%s1036]
    %s1038 = scalar_lea.vmem %s0, 138
    %s1039 = smov 12
    %v1040 = vld [vmem:[%s1038] ss:$16 sm:%s1039]
    %vm1041 = vcmask 1043458
    %v1042 = vsel %vm1041, %v1040, %v1037
    %s1043 = scalar_lea.vmem %s0, 266
    %s1044 = smov 48
    %v1045 = vld [vmem:[%s1043] ss:$16 sm:%s1044]
    %vm1046 = vcmask 1045508
    %v1047 = vsel %vm1046, %v1045, %v1042
    %s1048 = scalar_lea.vmem %s0, 266
    %s1049 = smov 192
    %v1050 = vld [vmem:[%s1048] ss:$16 sm:%s1049]
    %vm1051 = vcmask 1047558
    %v1052 = vsel %vm1051, %v1050, %v1047
    %1053 = vrot.lane.b32.xlu0 %v1052, 50
    %v1054 = vpop.permute.xlu0 %1053
    %vm1055 = vcmask 449936
    %s1056 = scalar_lea.vmem [#allocation0], 18
    %1057 = vst.msk [vmem:[%s1056] ss:$6 sm:$0x3] %vm1055, %v1054
    %s1058 = scalar_lea.vmem [#allocation0], 23
    %1059 = vst.msk [vmem:[%s1058] sm:$0xc] %vm1055, %v1054
    %s1060 = scalar_lea.vmem [#allocation0], 26
    %1061 = vst.msk [vmem:[%s1060] ss:$6 sm:$0x30] %vm1055, %v1054
    %s1062 = scalar_lea.vmem [#allocation0], 51
    %1063 = vst.msk [vmem:[%s1062] sm:$0xc0] %vm1055, %v1054
    %s1064 = scalar_lea.vmem %s0, 522
    %s1065 = smov 3
    %v1066 = vld [vmem:[%s1064] ss:$16 sm:%s1065]
    %s1067 = scalar_lea.vmem %s0, 522
    %s1068 = smov 12
    %v1069 = vld [vmem:[%s1067] ss:$16 sm:%s1068]
    %vm1070 = vcmask 1043458
    %v1071 = vsel %vm1070, %v1069, %v1066
    %s1072 = scalar_lea.vmem %s0, 710
    %v1073 = vld [vmem:[%s1072] sm:$0x10]
    %vm1074 = vcmask 1044484
    %v1075 = vsel %vm1074, %v1073, %v1071
    %1076 = vrot.lane.b32.xlu0 %v1075, 50
    %v1077 = vpop.permute.xlu0 %1076
    %vm1078 = vcmask 449936
    %s1079 = scalar_lea.vmem [#allocation0], 82
    %1080 = vst.msk [vmem:[%s1079] ss:$6 sm:$0x3] %vm1078, %v1077
    %s1081 = scalar_lea.vmem [#allocation0], 87
    %1082 = vst.msk [vmem:[%s1081] sm:$0xc] %vm1078, %v1077
    %s1083 = scalar_lea.vmem [#allocation0], 110
    %1084 = vst.msk [vmem:[%s1083] sm:$0x10] %vm1078, %v1077
    %s1085 = scalar_lea.vmem %s0, 9
    %s1086 = smov 3
    %v1087 = vld [vmem:[%s1085] ss:$16 sm:%s1086]
    %s1088 = scalar_lea.vmem %s0, 9
    %s1089 = smov 12
    %v1090 = vld [vmem:[%s1088] ss:$16 sm:%s1089]
    %vm1091 = vcmask 1043458
    %v1092 = vsel %vm1091, %v1090, %v1087
    %s1093 = scalar_lea.vmem %s0, 9
    %s1094 = smov 48
    %v1095 = vld [vmem:[%s1093] ss:$16 sm:%s1094]
    %vm1096 = vcmask 1045508
    %v1097 = vsel %vm1096, %v1095, %v1092
    %s1098 = scalar_lea.vmem %s0, 9
    %s1099 = smov 192
    %v1100 = vld [vmem:[%s1098] ss:$16 sm:%s1099]
    %vm1101 = vcmask 1047558
    %v1102 = vsel %vm1101, %v1100, %v1097
    %1103 = vrot.lane.b32.xlu0 %v1102, 45
    %v1104 = vpop.permute.xlu0 %1103
    %vm1105 = vcmask 408936
    %1106 = vst.msk [vmem:[#allocation0] sm:$0x7] %vm1105, %v1104
    %s1107 = scalar_lea.vmem [#allocation0], 5
    %1108 = vst.msk [vmem:[%s1107] sm:$0x38] %vm1105, %v1104
    %s1109 = scalar_lea.vmem [#allocation0], 10
    %1110 = vst.msk [vmem:[%s1109] sm:$0xc0] %vm1105, %v1104
    %s1111 = scalar_lea.vmem %s0, 201
    %s1112 = smov 3
    %v1113 = vld [vmem:[%s1111] ss:$16 sm:%s1112]
    %s1114 = scalar_lea.vmem %s0, 201
    %s1115 = smov 12
    %v1116 = vld [vmem:[%s1114] ss:$16 sm:%s1115]
    %vm1117 = vcmask 1043458
    %v1118 = vsel %vm1117, %v1116, %v1113
    %s1119 = scalar_lea.vmem %s0, 201
    %s1120 = smov 48
    %v1121 = vld [vmem:[%s1119] ss:$16 sm:%s1120]
    %vm1122 = vcmask 1045508
    %v1123 = vsel %vm1122, %v1121, %v1118
    %s1124 = scalar_lea.vmem %s0, 201
    %s1125 = smov 192
    %v1126 = vld [vmem:[%s1124] ss:$16 sm:%s1125]
    %vm1127 = vcmask 1047558
    %v1128 = vsel %vm1127, %v1126, %v1123
    %1129 = vrot.lane.b32.xlu0 %v1128, 45
    %v1130 = vpop.permute.xlu0 %1129
    %vm1131 = vcmask 408936
    %s1132 = scalar_lea.vmem [#allocation0], 32
    %1133 = vst.msk [vmem:[%s1132] sm:$0x7] %vm1131, %v1130
    %s1134 = scalar_lea.vmem [#allocation0], 37
    %1135 = vst.msk [vmem:[%s1134] sm:$0x38] %vm1131, %v1130
    %s1136 = scalar_lea.vmem [#allocation0], 42
    %1137 = vst.msk [vmem:[%s1136] sm:$0xc0] %vm1131, %v1130
    %s1138 = scalar_lea.vmem %s0, 393
    %s1139 = smov 3
    %v1140 = vld [vmem:[%s1138] ss:$16 sm:%s1139]
    %s1141 = scalar_lea.vmem %s0, 393
    %s1142 = smov 12
    %v1143 = vld [vmem:[%s1141] ss:$16 sm:%s1142]
    %vm1144 = vcmask 1043458
    %v1145 = vsel %vm1144, %v1143, %v1140
    %s1146 = scalar_lea.vmem %s0, 393
    %s1147 = smov 48
    %v1148 = vld [vmem:[%s1146] ss:$16 sm:%s1147]
    %vm1149 = vcmask 1045508
    %v1150 = vsel %vm1149, %v1148, %v1145
    %s1151 = scalar_lea.vmem %s0, 393
    %s1152 = smov 192
    %v1153 = vld [vmem:[%s1151] ss:$16 sm:%s1152]
    %vm1154 = vcmask 1047558
    %v1155 = vsel %vm1154, %v1153, %v1150
    %1156 = vrot.lane.b32.xlu0 %v1155, 45
    %v1157 = vpop.permute.xlu0 %1156
    %vm1158 = vcmask 408936
    %s1159 = scalar_lea.vmem [#allocation0], 64
    %1160 = vst.msk [vmem:[%s1159] sm:$0x7] %vm1158, %v1157
    %s1161 = scalar_lea.vmem [#allocation0], 69
    %1162 = vst.msk [vmem:[%s1161] sm:$0x38] %vm1158, %v1157
    %s1163 = scalar_lea.vmem [#allocation0], 74
    %1164 = vst.msk [vmem:[%s1163] sm:$0xc0] %vm1158, %v1157
    %s1165 = scalar_lea.vmem %s0, 585
    %s1166 = smov 3
    %v1167 = vld [vmem:[%s1165] ss:$16 sm:%s1166]
    %s1168 = scalar_lea.vmem %s0, 585
    %s1169 = smov 12
    %v1170 = vld [vmem:[%s1168] ss:$16 sm:%s1169]
    %vm1171 = vcmask 1043458
    %v1172 = vsel %vm1171, %v1170, %v1167
    %s1173 = scalar_lea.vmem %s0, 585
    %s1174 = smov 48
    %v1175 = vld [vmem:[%s1173] ss:$16 sm:%s1174]
    %vm1176 = vcmask 1045508
    %v1177 = vsel %vm1176, %v1175, %v1172
    %s1178 = scalar_lea.vmem %s0, 585
    %s1179 = smov 192
    %v1180 = vld [vmem:[%s1178] ss:$16 sm:%s1179]
    %vm1181 = vcmask 1047558
    %v1182 = vsel %vm1181, %v1180, %v1177
    %1183 = vrot.lane.b32.xlu0 %v1182, 45
    %v1184 = vpop.permute.xlu0 %1183
    %vm1185 = vcmask 408936
    %s1186 = scalar_lea.vmem [#allocation0], 96
    %1187 = vst.msk [vmem:[%s1186] sm:$0x7] %vm1185, %v1184
    %s1188 = scalar_lea.vmem [#allocation0], 101
    %1189 = vst.msk [vmem:[%s1188] sm:$0x38] %vm1185, %v1184
    %s1190 = scalar_lea.vmem [#allocation0], 106
    %1191 = vst.msk [vmem:[%s1190] sm:$0xc0] %vm1185, %v1184
    %s1192 = scalar_lea.vmem %s0, 137
    %s1193 = smov 3
    %v1194 = vld [vmem:[%s1192] ss:$16 sm:%s1193]
    %s1195 = scalar_lea.vmem %s0, 137
    %s1196 = smov 12
    %v1197 = vld [vmem:[%s1195] ss:$16 sm:%s1196]
    %vm1198 = vcmask 1043458
    %v1199 = vsel %vm1198, %v1197, %v1194
    %s1200 = scalar_lea.vmem %s0, 265
    %s1201 = smov 48
    %v1202 = vld [vmem:[%s1200] ss:$16 sm:%s1201]
    %vm1203 = vcmask 1045508
    %v1204 = vsel %vm1203, %v1202, %v1199
    %s1205 = scalar_lea.vmem %s0, 265
    %s1206 = smov 192
    %v1207 = vld [vmem:[%s1205] ss:$16 sm:%s1206]
    %vm1208 = vcmask 1047558
    %v1209 = vsel %vm1208, %v1207, %v1204
    %1210 = vrot.lane.b32.xlu0 %v1209, 45
    %v1211 = vpop.permute.xlu0 %1210
    %vm1212 = vcmask 408936
    %s1213 = scalar_lea.vmem [#allocation0], 18
    %1214 = vst.msk [vmem:[%s1213] ss:$6 sm:$0x3] %vm1212, %v1211
    %s1215 = scalar_lea.vmem [#allocation0], 23
    %1216 = vst.msk [vmem:[%s1215] sm:$0xc] %vm1212, %v1211
    %s1217 = scalar_lea.vmem [#allocation0], 26
    %1218 = vst.msk [vmem:[%s1217] ss:$6 sm:$0x30] %vm1212, %v1211
    %s1219 = scalar_lea.vmem [#allocation0], 51
    %1220 = vst.msk [vmem:[%s1219] sm:$0xc0] %vm1212, %v1211
    %s1221 = scalar_lea.vmem %s0, 521
    %s1222 = smov 3
    %v1223 = vld [vmem:[%s1221] ss:$16 sm:%s1222]
    %s1224 = scalar_lea.vmem %s0, 521
    %s1225 = smov 12
    %v1226 = vld [vmem:[%s1224] ss:$16 sm:%s1225]
    %vm1227 = vcmask 1043458
    %v1228 = vsel %vm1227, %v1226, %v1223
    %s1229 = scalar_lea.vmem %s0, 709
    %v1230 = vld [vmem:[%s1229] sm:$0x10]
    %vm1231 = vcmask 1044484
    %v1232 = vsel %vm1231, %v1230, %v1228
    %1233 = vrot.lane.b32.xlu0 %v1232, 45
    %v1234 = vpop.permute.xlu0 %1233
    %vm1235 = vcmask 408936
    %s1236 = scalar_lea.vmem [#allocation0], 82
    %1237 = vst.msk [vmem:[%s1236] ss:$6 sm:$0x3] %vm1235, %v1234
    %s1238 = scalar_lea.vmem [#allocation0], 87
    %1239 = vst.msk [vmem:[%s1238] sm:$0xc] %vm1235, %v1234
    %s1240 = scalar_lea.vmem [#allocation0], 110
    %1241 = vst.msk [vmem:[%s1240] sm:$0x10] %vm1235, %v1234
    %s1242 = scalar_lea.vmem %s0, 8
    %s1243 = smov 3
    %v1244 = vld [vmem:[%s1242] ss:$16 sm:%s1243]
    %s1245 = scalar_lea.vmem %s0, 8
    %s1246 = smov 12
    %v1247 = vld [vmem:[%s1245] ss:$16 sm:%s1246]
    %vm1248 = vcmask 1043458
    %v1249 = vsel %vm1248, %v1247, %v1244
    %s1250 = scalar_lea.vmem %s0, 8
    %s1251 = smov 48
    %v1252 = vld [vmem:[%s1250] ss:$16 sm:%s1251]
    %vm1253 = vcmask 1045508
    %v1254 = vsel %vm1253, %v1252, %v1249
    %s1255 = scalar_lea.vmem %s0, 8
    %s1256 = smov 192
    %v1257 = vld [vmem:[%s1255] ss:$16 sm:%s1256]
    %vm1258 = vcmask 1047558
    %v1259 = vsel %vm1258, %v1257, %v1254
    %1260 = vrot.lane.b32.xlu0 %v1259, 40
    %v1261 = vpop.permute.xlu0 %1260
    %vm1262 = vcmask 367936
    %1263 = vst.msk [vmem:[#allocation0] sm:$0x7] %vm1262, %v1261
    %s1264 = scalar_lea.vmem [#allocation0], 5
    %1265 = vst.msk [vmem:[%s1264] sm:$0x38] %vm1262, %v1261
    %s1266 = scalar_lea.vmem [#allocation0], 10
    %1267 = vst.msk [vmem:[%s1266] sm:$0xc0] %vm1262, %v1261
    %s1268 = scalar_lea.vmem %s0, 200
    %s1269 = smov 3
    %v1270 = vld [vmem:[%s1268] ss:$16 sm:%s1269]
    %s1271 = scalar_lea.vmem %s0, 200
    %s1272 = smov 12
    %v1273 = vld [vmem:[%s1271] ss:$16 sm:%s1272]
    %vm1274 = vcmask 1043458
    %v1275 = vsel %vm1274, %v1273, %v1270
    %s1276 = scalar_lea.vmem %s0, 200
    %s1277 = smov 48
    %v1278 = vld [vmem:[%s1276] ss:$16 sm:%s1277]
    %vm1279 = vcmask 1045508
    %v1280 = vsel %vm1279, %v1278, %v1275
    %s1281 = scalar_lea.vmem %s0, 200
    %s1282 = smov 192
    %v1283 = vld [vmem:[%s1281] ss:$16 sm:%s1282]
    %vm1284 = vcmask 1047558
    %v1285 = vsel %vm1284, %v1283, %v1280
    %1286 = vrot.lane.b32.xlu0 %v1285, 40
    %v1287 = vpop.permute.xlu0 %1286
    %vm1288 = vcmask 367936
    %s1289 = scalar_lea.vmem [#allocation0], 32
    %1290 = vst.msk [vmem:[%s1289] sm:$0x7] %vm1288, %v1287
    %s1291 = scalar_lea.vmem [#allocation0], 37
    %1292 = vst.msk [vmem:[%s1291] sm:$0x38] %vm1288, %v1287
    %s1293 = scalar_lea.vmem [#allocation0], 42
    %1294 = vst.msk [vmem:[%s1293] sm:$0xc0] %vm1288, %v1287
    %s1295 = scalar_lea.vmem %s0, 392
    %s1296 = smov 3
    %v1297 = vld [vmem:[%s1295] ss:$16 sm:%s1296]
    %s1298 = scalar_lea.vmem %s0, 392
    %s1299 = smov 12
    %v1300 = vld [vmem:[%s1298] ss:$16 sm:%s1299]
    %vm1301 = vcmask 1043458
    %v1302 = vsel %vm1301, %v1300, %v1297
    %s1303 = scalar_lea.vmem %s0, 392
    %s1304 = smov 48
    %v1305 = vld [vmem:[%s1303] ss:$16 sm:%s1304]
    %vm1306 = vcmask 1045508
    %v1307 = vsel %vm1306, %v1305, %v1302
    %s1308 = scalar_lea.vmem %s0, 392
    %s1309 = smov 192
    %v1310 = vld [vmem:[%s1308] ss:$16 sm:%s1309]
    %vm1311 = vcmask 1047558
    %v1312 = vsel %vm1311, %v1310, %v1307
    %1313 = vrot.lane.b32.xlu0 %v1312, 40
    %v1314 = vpop.permute.xlu0 %1313
    %vm1315 = vcmask 367936
    %s1316 = scalar_lea.vmem [#allocation0], 64
    %1317 = vst.msk [vmem:[%s1316] sm:$0x7] %vm1315, %v1314
    %s1318 = scalar_lea.vmem [#allocation0], 69
    %1319 = vst.msk [vmem:[%s1318] sm:$0x38] %vm1315, %v1314
    %s1320 = scalar_lea.vmem [#allocation0], 74
    %1321 = vst.msk [vmem:[%s1320] sm:$0xc0] %vm1315, %v1314
    %s1322 = scalar_lea.vmem %s0, 584
    %s1323 = smov 3
    %v1324 = vld [vmem:[%s1322] ss:$16 sm:%s1323]
    %s1325 = scalar_lea.vmem %s0, 584
    %s1326 = smov 12
    %v1327 = vld [vmem:[%s1325] ss:$16 sm:%s1326]
    %vm1328 = vcmask 1043458
    %v1329 = vsel %vm1328, %v1327, %v1324
    %s1330 = scalar_lea.vmem %s0, 584
    %s1331 = smov 48
    %v1332 = vld [vmem:[%s1330] ss:$16 sm:%s1331]
    %vm1333 = vcmask 1045508
    %v1334 = vsel %vm1333, %v1332, %v1329
    %s1335 = scalar_lea.vmem %s0, 584
    %s1336 = smov 192
    %v1337 = vld [vmem:[%s1335] ss:$16 sm:%s1336]
    %vm1338 = vcmask 1047558
    %v1339 = vsel %vm1338, %v1337, %v1334
    %1340 = vrot.lane.b32.xlu0 %v1339, 40
    %v1341 = vpop.permute.xlu0 %1340
    %vm1342 = vcmask 367936
    %s1343 = scalar_lea.vmem [#allocation0], 96
    %1344 = vst.msk [vmem:[%s1343] sm:$0x7] %vm1342, %v1341
    %s1345 = scalar_lea.vmem [#allocation0], 101
    %1346 = vst.msk [vmem:[%s1345] sm:$0x38] %vm1342, %v1341
    %s1347 = scalar_lea.vmem [#allocation0], 106
    %1348 = vst.msk [vmem:[%s1347] sm:$0xc0] %vm1342, %v1341
    %s1349 = scalar_lea.vmem %s0, 136
    %s1350 = smov 3
    %v1351 = vld [vmem:[%s1349] ss:$16 sm:%s1350]
    %s1352 = scalar_lea.vmem %s0, 136
    %s1353 = smov 12
    %v1354 = vld [vmem:[%s1352] ss:$16 sm:%s1353]
    %vm1355 = vcmask 1043458
    %v1356 = vsel %vm1355, %v1354, %v1351
    %s1357 = scalar_lea.vmem %s0, 264
    %s1358 = smov 48
    %v1359 = vld [vmem:[%s1357] ss:$16 sm:%s1358]
    %vm1360 = vcmask 1045508
    %v1361 = vsel %vm1360, %v1359, %v1356
    %s1362 = scalar_lea.vmem %s0, 264
    %s1363 = smov 192
    %v1364 = vld [vmem:[%s1362] ss:$16 sm:%s1363]
    %vm1365 = vcmask 1047558
    %v1366 = vsel %vm1365, %v1364, %v1361
    %1367 = vrot.lane.b32.xlu0 %v1366, 40
    %v1368 = vpop.permute.xlu0 %1367
    %vm1369 = vcmask 367936
    %s1370 = scalar_lea.vmem [#allocation0], 18
    %1371 = vst.msk [vmem:[%s1370] ss:$6 sm:$0x3] %vm1369, %v1368
    %s1372 = scalar_lea.vmem [#allocation0], 23
    %1373 = vst.msk [vmem:[%s1372] sm:$0xc] %vm1369, %v1368
    %s1374 = scalar_lea.vmem [#allocation0], 26
    %1375 = vst.msk [vmem:[%s1374] ss:$6 sm:$0x30] %vm1369, %v1368
    %s1376 = scalar_lea.vmem [#allocation0], 51
    %1377 = vst.msk [vmem:[%s1376] sm:$0xc0] %vm1369, %v1368
    %s1378 = scalar_lea.vmem %s0, 520
    %s1379 = smov 3
    %v1380 = vld [vmem:[%s1378] ss:$16 sm:%s1379]
    %s1381 = scalar_lea.vmem %s0, 520
    %s1382 = smov 12
    %v1383 = vld [vmem:[%s1381] ss:$16 sm:%s1382]
    %vm1384 = vcmask 1043458
    %v1385 = vsel %vm1384, %v1383, %v1380
    %s1386 = scalar_lea.vmem %s0, 708
    %v1387 = vld [vmem:[%s1386] sm:$0x10]
    %vm1388 = vcmask 1044484
    %v1389 = vsel %vm1388, %v1387, %v1385
    %1390 = vrot.lane.b32.xlu0 %v1389, 40
    %v1391 = vpop.permute.xlu0 %1390
    %vm1392 = vcmask 367936
    %s1393 = scalar_lea.vmem [#allocation0], 82
    %1394 = vst.msk [vmem:[%s1393] ss:$6 sm:$0x3] %vm1392, %v1391
    %s1395 = scalar_lea.vmem [#allocation0], 87
    %1396 = vst.msk [vmem:[%s1395] sm:$0xc] %vm1392, %v1391
    %s1397 = scalar_lea.vmem [#allocation0], 110
    %1398 = vst.msk [vmem:[%s1397] sm:$0x10] %vm1392, %v1391
    %s1399 = scalar_lea.vmem %s0, 7
    %s1400 = smov 3
    %v1401 = vld [vmem:[%s1399] ss:$16 sm:%s1400]
    %s1402 = scalar_lea.vmem %s0, 7
    %s1403 = smov 12
    %v1404 = vld [vmem:[%s1402] ss:$16 sm:%s1403]
    %vm1405 = vcmask 1043458
    %v1406 = vsel %vm1405, %v1404, %v1401
    %s1407 = scalar_lea.vmem %s0, 7
    %s1408 = smov 48
    %v1409 = vld [vmem:[%s1407] ss:$16 sm:%s1408]
    %vm1410 = vcmask 1045508
    %v1411 = vsel %vm1410, %v1409, %v1406
    %s1412 = scalar_lea.vmem %s0, 7
    %s1413 = smov 192
    %v1414 = vld [vmem:[%s1412] ss:$16 sm:%s1413]
    %vm1415 = vcmask 1047558
    %v1416 = vsel %vm1415, %v1414, %v1411
    %1417 = vrot.lane.b32.xlu0 %v1416, 35
    %v1418 = vpop.permute.xlu0 %1417
    %vm1419 = vcmask 326936
    %1420 = vst.msk [vmem:[#allocation0] sm:$0x7] %vm1419, %v1418
    %s1421 = scalar_lea.vmem [#allocation0], 5
    %1422 = vst.msk [vmem:[%s1421] sm:$0x38] %vm1419, %v1418
    %s1423 = scalar_lea.vmem [#allocation0], 10
    %1424 = vst.msk [vmem:[%s1423] sm:$0xc0] %vm1419, %v1418
    %s1425 = scalar_lea.vmem %s0, 199
    %s1426 = smov 3
    %v1427 = vld [vmem:[%s1425] ss:$16 sm:%s1426]
    %s1428 = scalar_lea.vmem %s0, 199
    %s1429 = smov 12
    %v1430 = vld [vmem:[%s1428] ss:$16 sm:%s1429]
    %vm1431 = vcmask 1043458
    %v1432 = vsel %vm1431, %v1430, %v1427
    %s1433 = scalar_lea.vmem %s0, 199
    %s1434 = smov 48
    %v1435 = vld [vmem:[%s1433] ss:$16 sm:%s1434]
    %vm1436 = vcmask 1045508
    %v1437 = vsel %vm1436, %v1435, %v1432
    %s1438 = scalar_lea.vmem %s0, 199
    %s1439 = smov 192
    %v1440 = vld [vmem:[%s1438] ss:$16 sm:%s1439]
    %vm1441 = vcmask 1047558
    %v1442 = vsel %vm1441, %v1440, %v1437
    %1443 = vrot.lane.b32.xlu0 %v1442, 35
    %v1444 = vpop.permute.xlu0 %1443
    %vm1445 = vcmask 326936
    %s1446 = scalar_lea.vmem [#allocation0], 32
    %1447 = vst.msk [vmem:[%s1446] sm:$0x7] %vm1445, %v1444
    %s1448 = scalar_lea.vmem [#allocation0], 37
    %1449 = vst.msk [vmem:[%s1448] sm:$0x38] %vm1445, %v1444
    %s1450 = scalar_lea.vmem [#allocation0], 42
    %1451 = vst.msk [vmem:[%s1450] sm:$0xc0] %vm1445, %v1444
    %s1452 = scalar_lea.vmem %s0, 391
    %s1453 = smov 3
    %v1454 = vld [vmem:[%s1452] ss:$16 sm:%s1453]
    %s1455 = scalar_lea.vmem %s0, 391
    %s1456 = smov 12
    %v1457 = vld [vmem:[%s1455] ss:$16 sm:%s1456]
    %vm1458 = vcmask 1043458
    %v1459 = vsel %vm1458, %v1457, %v1454
    %s1460 = scalar_lea.vmem %s0, 391
    %s1461 = smov 48
    %v1462 = vld [vmem:[%s1460] ss:$16 sm:%s1461]
    %vm1463 = vcmask 1045508
    %v1464 = vsel %vm1463, %v1462, %v1459
    %s1465 = scalar_lea.vmem %s0, 391
    %s1466 = smov 192
    %v1467 = vld [vmem:[%s1465] ss:$16 sm:%s1466]
    %vm1468 = vcmask 1047558
    %v1469 = vsel %vm1468, %v1467, %v1464
    %1470 = vrot.lane.b32.xlu0 %v1469, 35
    %v1471 = vpop.permute.xlu0 %1470
    %vm1472 = vcmask 326936
    %s1473 = scalar_lea.vmem [#allocation0], 64
    %1474 = vst.msk [vmem:[%s1473] sm:$0x7] %vm1472, %v1471
    %s1475 = scalar_lea.vmem [#allocation0], 69
    %1476 = vst.msk [vmem:[%s1475] sm:$0x38] %vm1472, %v1471
    %s1477 = scalar_lea.vmem [#allocation0], 74
    %1478 = vst.msk [vmem:[%s1477] sm:$0xc0] %vm1472, %v1471
    %s1479 = scalar_lea.vmem %s0, 583
    %s1480 = smov 3
    %v1481 = vld [vmem:[%s1479] ss:$16 sm:%s1480]
    %s1482 = scalar_lea.vmem %s0, 583
    %s1483 = smov 12
    %v1484 = vld [vmem:[%s1482] ss:$16 sm:%s1483]
    %vm1485 = vcmask 1043458
    %v1486 = vsel %vm1485, %v1484, %v1481
    %s1487 = scalar_lea.vmem %s0, 583
    %s1488 = smov 48
    %v1489 = vld [vmem:[%s1487] ss:$16 sm:%s1488]
    %vm1490 = vcmask 1045508
    %v1491 = vsel %vm1490, %v1489, %v1486
    %s1492 = scalar_lea.vmem %s0, 583
    %s1493 = smov 192
    %v1494 = vld [vmem:[%s1492] ss:$16 sm:%s1493]
    %vm1495 = vcmask 1047558
    %v1496 = vsel %vm1495, %v1494, %v1491
    %1497 = vrot.lane.b32.xlu0 %v1496, 35
    %v1498 = vpop.permute.xlu0 %1497
    %vm1499 = vcmask 326936
    %s1500 = scalar_lea.vmem [#allocation0], 96
    %1501 = vst.msk [vmem:[%s1500] sm:$0x7] %vm1499, %v1498
    %s1502 = scalar_lea.vmem [#allocation0], 101
    %1503 = vst.msk [vmem:[%s1502] sm:$0x38] %vm1499, %v1498
    %s1504 = scalar_lea.vmem [#allocation0], 106
    %1505 = vst.msk [vmem:[%s1504] sm:$0xc0] %vm1499, %v1498
    %s1506 = scalar_lea.vmem %s0, 135
    %s1507 = smov 3
    %v1508 = vld [vmem:[%s1506] ss:$16 sm:%s1507]
    %s1509 = scalar_lea.vmem %s0, 135
    %s1510 = smov 12
    %v1511 = vld [vmem:[%s1509] ss:$16 sm:%s1510]
    %vm1512 = vcmask 1043458
    %v1513 = vsel %vm1512, %v1511, %v1508
    %s1514 = scalar_lea.vmem %s0, 263
    %s1515 = smov 48
    %v1516 = vld [vmem:[%s1514] ss:$16 sm:%s1515]
    %vm1517 = vcmask 1045508
    %v1518 = vsel %vm1517, %v1516, %v1513
    %s1519 = scalar_lea.vmem %s0, 263
    %s1520 = smov 192
    %v1521 = vld [vmem:[%s1519] ss:$16 sm:%s1520]
    %vm1522 = vcmask 1047558
    %v1523 = vsel %vm1522, %v1521, %v1518
    %1524 = vrot.lane.b32.xlu0 %v1523, 35
    %v1525 = vpop.permute.xlu0 %1524
    %vm1526 = vcmask 326936
    %s1527 = scalar_lea.vmem [#allocation0], 18
    %1528 = vst.msk [vmem:[%s1527] ss:$6 sm:$0x3] %vm1526, %v1525
    %s1529 = scalar_lea.vmem [#allocation0], 23
    %1530 = vst.msk [vmem:[%s1529] sm:$0xc] %vm1526, %v1525
    %s1531 = scalar_lea.vmem [#allocation0], 26
    %1532 = vst.msk [vmem:[%s1531] ss:$6 sm:$0x30] %vm1526, %v1525
    %s1533 = scalar_lea.vmem [#allocation0], 51
    %1534 = vst.msk [vmem:[%s1533] sm:$0xc0] %vm1526, %v1525
    %s1535 = scalar_lea.vmem %s0, 519
    %s1536 = smov 3
    %v1537 = vld [vmem:[%s1535] ss:$16 sm:%s1536]
    %s1538 = scalar_lea.vmem %s0, 519
    %s1539 = smov 12
    %v1540 = vld [vmem:[%s1538] ss:$16 sm:%s1539]
    %vm1541 = vcmask 1043458
    %v1542 = vsel %vm1541, %v1540, %v1537
    %s1543 = scalar_lea.vmem %s0, 707
    %v1544 = vld [vmem:[%s1543] sm:$0x10]
    %vm1545 = vcmask 1044484
    %v1546 = vsel %vm1545, %v1544, %v1542
    %1547 = vrot.lane.b32.xlu0 %v1546, 35
    %v1548 = vpop.permute.xlu0 %1547
    %vm1549 = vcmask 326936
    %s1550 = scalar_lea.vmem [#allocation0], 82
    %1551 = vst.msk [vmem:[%s1550] ss:$6 sm:$0x3] %vm1549, %v1548
    %s1552 = scalar_lea.vmem [#allocation0], 87
    %1553 = vst.msk [vmem:[%s1552] sm:$0xc] %vm1549, %v1548
    %s1554 = scalar_lea.vmem [#allocation0], 110
    %1555 = vst.msk [vmem:[%s1554] sm:$0x10] %vm1549, %v1548
    %s1556 = scalar_lea.vmem %s0, 6
    %s1557 = smov 3
    %v1558 = vld [vmem:[%s1556] ss:$16 sm:%s1557]
    %s1559 = scalar_lea.vmem %s0, 6
    %s1560 = smov 12
    %v1561 = vld [vmem:[%s1559] ss:$16 sm:%s1560]
    %vm1562 = vcmask 1043458
    %v1563 = vsel %vm1562, %v1561, %v1558
    %s1564 = scalar_lea.vmem %s0, 6
    %s1565 = smov 48
    %v1566 = vld [vmem:[%s1564] ss:$16 sm:%s1565]
    %vm1567 = vcmask 1045508
    %v1568 = vsel %vm1567, %v1566, %v1563
    %s1569 = scalar_lea.vmem %s0, 6
    %s1570 = smov 192
    %v1571 = vld [vmem:[%s1569] ss:$16 sm:%s1570]
    %vm1572 = vcmask 1047558
    %v1573 = vsel %vm1572, %v1571, %v1568
    %1574 = vrot.lane.b32.xlu0 %v1573, 30
    %v1575 = vpop.permute.xlu0 %1574
    %vm1576 = vcmask 285936
    %1577 = vst.msk [vmem:[#allocation0] sm:$0x7] %vm1576, %v1575
    %s1578 = scalar_lea.vmem [#allocation0], 5
    %1579 = vst.msk [vmem:[%s1578] sm:$0x38] %vm1576, %v1575
    %s1580 = scalar_lea.vmem [#allocation0], 10
    %1581 = vst.msk [vmem:[%s1580] sm:$0xc0] %vm1576, %v1575
    %s1582 = scalar_lea.vmem %s0, 198
    %s1583 = smov 3
    %v1584 = vld [vmem:[%s1582] ss:$16 sm:%s1583]
    %s1585 = scalar_lea.vmem %s0, 198
    %s1586 = smov 12
    %v1587 = vld [vmem:[%s1585] ss:$16 sm:%s1586]
    %vm1588 = vcmask 1043458
    %v1589 = vsel %vm1588, %v1587, %v1584
    %s1590 = scalar_lea.vmem %s0, 198
    %s1591 = smov 48
    %v1592 = vld [vmem:[%s1590] ss:$16 sm:%s1591]
    %vm1593 = vcmask 1045508
    %v1594 = vsel %vm1593, %v1592, %v1589
    %s1595 = scalar_lea.vmem %s0, 198
    %s1596 = smov 192
    %v1597 = vld [vmem:[%s1595] ss:$16 sm:%s1596]
    %vm1598 = vcmask 1047558
    %v1599 = vsel %vm1598, %v1597, %v1594
    %1600 = vrot.lane.b32.xlu0 %v1599, 30
    %v1601 = vpop.permute.xlu0 %1600
    %vm1602 = vcmask 285936
    %s1603 = scalar_lea.vmem [#allocation0], 32
    %1604 = vst.msk [vmem:[%s1603] sm:$0x7] %vm1602, %v1601
    %s1605 = scalar_lea.vmem [#allocation0], 37
    %1606 = vst.msk [vmem:[%s1605] sm:$0x38] %vm1602, %v1601
    %s1607 = scalar_lea.vmem [#allocation0], 42
    %1608 = vst.msk [vmem:[%s1607] sm:$0xc0] %vm1602, %v1601
    %s1609 = scalar_lea.vmem %s0, 390
    %s1610 = smov 3
    %v1611 = vld [vmem:[%s1609] ss:$16 sm:%s1610]
    %s1612 = scalar_lea.vmem %s0, 390
    %s1613 = smov 12
    %v1614 = vld [vmem:[%s1612] ss:$16 sm:%s1613]
    %vm1615 = vcmask 1043458
    %v1616 = vsel %vm1615, %v1614, %v1611
    %s1617 = scalar_lea.vmem %s0, 390
    %s1618 = smov 48
    %v1619 = vld [vmem:[%s1617] ss:$16 sm:%s1618]
    %vm1620 = vcmask 1045508
    %v1621 = vsel %vm1620, %v1619, %v1616
    %s1622 = scalar_lea.vmem %s0, 390
    %s1623 = smov 192
    %v1624 = vld [vmem:[%s1622] ss:$16 sm:%s1623]
    %vm1625 = vcmask 1047558
    %v1626 = vsel %vm1625, %v1624, %v1621
    %1627 = vrot.lane.b32.xlu0 %v1626, 30
    %v1628 = vpop.permute.xlu0 %1627
    %vm1629 = vcmask 285936
    %s1630 = scalar_lea.vmem [#allocation0], 64
    %1631 = vst.msk [vmem:[%s1630] sm:$0x7] %vm1629, %v1628
    %s1632 = scalar_lea.vmem [#allocation0], 69
    %1633 = vst.msk [vmem:[%s1632] sm:$0x38] %vm1629, %v1628
    %s1634 = scalar_lea.vmem [#allocation0], 74
    %1635 = vst.msk [vmem:[%s1634] sm:$0xc0] %vm1629, %v1628
    %s1636 = scalar_lea.vmem %s0, 582
    %s1637 = smov 3
    %v1638 = vld [vmem:[%s1636] ss:$16 sm:%s1637]
    %s1639 = scalar_lea.vmem %s0, 582
    %s1640 = smov 12
    %v1641 = vld [vmem:[%s1639] ss:$16 sm:%s1640]
    %vm1642 = vcmask 1043458
    %v1643 = vsel %vm1642, %v1641, %v1638
    %s1644 = scalar_lea.vmem %s0, 582
    %s1645 = smov 48
    %v1646 = vld [vmem:[%s1644] ss:$16 sm:%s1645]
    %vm1647 = vcmask 1045508
    %v1648 = vsel %vm1647, %v1646, %v1643
    %s1649 = scalar_lea.vmem %s0, 582
    %s1650 = smov 192
    %v1651 = vld [vmem:[%s1649] ss:$16 sm:%s1650]
    %vm1652 = vcmask 1047558
    %v1653 = vsel %vm1652, %v1651, %v1648
    %1654 = vrot.lane.b32.xlu0 %v1653, 30
    %v1655 = vpop.permute.xlu0 %1654
    %vm1656 = vcmask 285936
    %s1657 = scalar_lea.vmem [#allocation0], 96
    %1658 = vst.msk [vmem:[%s1657] sm:$0x7] %vm1656, %v1655
    %s1659 = scalar_lea.vmem [#allocation0], 101
    %1660 = vst.msk [vmem:[%s1659] sm:$0x38] %vm1656, %v1655
    %s1661 = scalar_lea.vmem [#allocation0], 106
    %1662 = vst.msk [vmem:[%s1661] sm:$0xc0] %vm1656, %v1655
    %s1663 = scalar_lea.vmem %s0, 134
    %s1664 = smov 3
    %v1665 = vld [vmem:[%s1663] ss:$16 sm:%s1664]
    %s1666 = scalar_lea.vmem %s0, 134
    %s1667 = smov 12
    %v1668 = vld [vmem:[%s1666] ss:$16 sm:%s1667]
    %vm1669 = vcmask 1043458
    %v1670 = vsel %vm1669, %v1668, %v1665
    %s1671 = scalar_lea.vmem %s0, 262
    %s1672 = smov 48
    %v1673 = vld [vmem:[%s1671] ss:$16 sm:%s1672]
    %vm1674 = vcmask 1045508
    %v1675 = vsel %vm1674, %v1673, %v1670
    %s1676 = scalar_lea.vmem %s0, 262
    %s1677 = smov 192
    %v1678 = vld [vmem:[%s1676] ss:$16 sm:%s1677]
    %vm1679 = vcmask 1047558
    %v1680 = vsel %vm1679, %v1678, %v1675
    %1681 = vrot.lane.b32.xlu0 %v1680, 30
    %v1682 = vpop.permute.xlu0 %1681
    %vm1683 = vcmask 285936
    %s1684 = scalar_lea.vmem [#allocation0], 18
    %1685 = vst.msk [vmem:[%s1684] ss:$6 sm:$0x3] %vm1683, %v1682
    %s1686 = scalar_lea.vmem [#allocation0], 23
    %1687 = vst.msk [vmem:[%s1686] sm:$0xc] %vm1683, %v1682
    %s1688 = scalar_lea.vmem [#allocation0], 26
    %1689 = vst.msk [vmem:[%s1688] ss:$6 sm:$0x30] %vm1683, %v1682
    %s1690 = scalar_lea.vmem [#allocation0], 51
    %1691 = vst.msk [vmem:[%s1690] sm:$0xc0] %vm1683, %v1682
    %s1692 = scalar_lea.vmem %s0, 518
    %s1693 = smov 3
    %v1694 = vld [vmem:[%s1692] ss:$16 sm:%s1693]
    %s1695 = scalar_lea.vmem %s0, 518
    %s1696 = smov 12
    %v1697 = vld [vmem:[%s1695] ss:$16 sm:%s1696]
    %vm1698 = vcmask 1043458
    %v1699 = vsel %vm1698, %v1697, %v1694
    %s1700 = scalar_lea.vmem %s0, 706
    %v1701 = vld [vmem:[%s1700] sm:$0x10]
    %vm1702 = vcmask 1044484
    %v1703 = vsel %vm1702, %v1701, %v1699
    %1704 = vrot.lane.b32.xlu0 %v1703, 30
    %v1705 = vpop.permute.xlu0 %1704
    %vm1706 = vcmask 285936
    %s1707 = scalar_lea.vmem [#allocation0], 82
    %1708 = vst.msk [vmem:[%s1707] ss:$6 sm:$0x3] %vm1706, %v1705
    %s1709 = scalar_lea.vmem [#allocation0], 87
    %1710 = vst.msk [vmem:[%s1709] sm:$0xc] %vm1706, %v1705
    %s1711 = scalar_lea.vmem [#allocation0], 110
    %1712 = vst.msk [vmem:[%s1711] sm:$0x10] %vm1706, %v1705
    %s1713 = scalar_lea.vmem %s0, 5
    %s1714 = smov 3
    %v1715 = vld [vmem:[%s1713] ss:$16 sm:%s1714]
    %s1716 = scalar_lea.vmem %s0, 5
    %s1717 = smov 12
    %v1718 = vld [vmem:[%s1716] ss:$16 sm:%s1717]
    %vm1719 = vcmask 1043458
    %v1720 = vsel %vm1719, %v1718, %v1715
    %s1721 = scalar_lea.vmem %s0, 5
    %s1722 = smov 48
    %v1723 = vld [vmem:[%s1721] ss:$16 sm:%s1722]
    %vm1724 = vcmask 1045508
    %v1725 = vsel %vm1724, %v1723, %v1720
    %s1726 = scalar_lea.vmem %s0, 5
    %s1727 = smov 192
    %v1728 = vld [vmem:[%s1726] ss:$16 sm:%s1727]
    %vm1729 = vcmask 1047558
    %v1730 = vsel %vm1729, %v1728, %v1725
    %1731 = vrot.lane.b32.xlu0 %v1730, 25
    %v1732 = vpop.permute.xlu0 %1731
    %vm1733 = vcmask 244936
    %1734 = vst.msk [vmem:[#allocation0] sm:$0x7] %vm1733, %v1732
    %s1735 = scalar_lea.vmem [#allocation0], 5
    %1736 = vst.msk [vmem:[%s1735] sm:$0x38] %vm1733, %v1732
    %s1737 = scalar_lea.vmem [#allocation0], 10
    %1738 = vst.msk [vmem:[%s1737] sm:$0xc0] %vm1733, %v1732
    %s1739 = scalar_lea.vmem %s0, 197
    %s1740 = smov 3
    %v1741 = vld [vmem:[%s1739] ss:$16 sm:%s1740]
    %s1742 = scalar_lea.vmem %s0, 197
    %s1743 = smov 12
    %v1744 = vld [vmem:[%s1742] ss:$16 sm:%s1743]
    %vm1745 = vcmask 1043458
    %v1746 = vsel %vm1745, %v1744, %v1741
    %s1747 = scalar_lea.vmem %s0, 197
    %s1748 = smov 48
    %v1749 = vld [vmem:[%s1747] ss:$16 sm:%s1748]
    %vm1750 = vcmask 1045508
    %v1751 = vsel %vm1750, %v1749, %v1746
    %s1752 = scalar_lea.vmem %s0, 197
    %s1753 = smov 192
    %v1754 = vld [vmem:[%s1752] ss:$16 sm:%s1753]
    %vm1755 = vcmask 1047558
    %v1756 = vsel %vm1755, %v1754, %v1751
    %1757 = vrot.lane.b32.xlu0 %v1756, 25
    %v1758 = vpop.permute.xlu0 %1757
    %vm1759 = vcmask 244936
    %s1760 = scalar_lea.vmem [#allocation0], 32
    %1761 = vst.msk [vmem:[%s1760] sm:$0x7] %vm1759, %v1758
    %s1762 = scalar_lea.vmem [#allocation0], 37
    %1763 = vst.msk [vmem:[%s1762] sm:$0x38] %vm1759, %v1758
    %s1764 = scalar_lea.vmem [#allocation0], 42
    %1765 = vst.msk [vmem:[%s1764] sm:$0xc0] %vm1759, %v1758
    %s1766 = scalar_lea.vmem %s0, 389
    %s1767 = smov 3
    %v1768 = vld [vmem:[%s1766] ss:$16 sm:%s1767]
    %s1769 = scalar_lea.vmem %s0, 389
    %s1770 = smov 12
    %v1771 = vld [vmem:[%s1769] ss:$16 sm:%s1770]
    %vm1772 = vcmask 1043458
    %v1773 = vsel %vm1772, %v1771, %v1768
    %s1774 = scalar_lea.vmem %s0, 389
    %s1775 = smov 48
    %v1776 = vld [vmem:[%s1774] ss:$16 sm:%s1775]
    %vm1777 = vcmask 1045508
    %v1778 = vsel %vm1777, %v1776, %v1773
    %s1779 = scalar_lea.vmem %s0, 389
    %s1780 = smov 192
    %v1781 = vld [vmem:[%s1779] ss:$16 sm:%s1780]
    %vm1782 = vcmask 1047558
    %v1783 = vsel %vm1782, %v1781, %v1778
    %1784 = vrot.lane.b32.xlu0 %v1783, 25
    %v1785 = vpop.permute.xlu0 %1784
    %vm1786 = vcmask 244936
    %s1787 = scalar_lea.vmem [#allocation0], 64
    %1788 = vst.msk [vmem:[%s1787] sm:$0x7] %vm1786, %v1785
    %s1789 = scalar_lea.vmem [#allocation0], 69
    %1790 = vst.msk [vmem:[%s1789] sm:$0x38] %vm1786, %v1785
    %s1791 = scalar_lea.vmem [#allocation0], 74
    %1792 = vst.msk [vmem:[%s1791] sm:$0xc0] %vm1786, %v1785
    %s1793 = scalar_lea.vmem %s0, 581
    %s1794 = smov 3
    %v1795 = vld [vmem:[%s1793] ss:$16 sm:%s1794]
    %s1796 = scalar_lea.vmem %s0, 581
    %s1797 = smov 12
    %v1798 = vld [vmem:[%s1796] ss:$16 sm:%s1797]
    %vm1799 = vcmask 1043458
    %v1800 = vsel %vm1799, %v1798, %v1795
    %s1801 = scalar_lea.vmem %s0, 581
    %s1802 = smov 48
    %v1803 = vld [vmem:[%s1801] ss:$16 sm:%s1802]
    %vm1804 = vcmask 1045508
    %v1805 = vsel %vm1804, %v1803, %v1800
    %s1806 = scalar_lea.vmem %s0, 581
    %s1807 = smov 192
    %v1808 = vld [vmem:[%s1806] ss:$16 sm:%s1807]
    %vm1809 = vcmask 1047558
    %v1810 = vsel %vm1809, %v1808, %v1805
    %1811 = vrot.lane.b32.xlu0 %v1810, 25
    %v1812 = vpop.permute.xlu0 %1811
    %vm1813 = vcmask 244936
    %s1814 = scalar_lea.vmem [#allocation0], 96
    %1815 = vst.msk [vmem:[%s1814] sm:$0x7] %vm1813, %v1812
    %s1816 = scalar_lea.vmem [#allocation0], 101
    %1817 = vst.msk [vmem:[%s1816] sm:$0x38] %vm1813, %v1812
    %s1818 = scalar_lea.vmem [#allocation0], 106
    %1819 = vst.msk [vmem:[%s1818] sm:$0xc0] %vm1813, %v1812
    %s1820 = scalar_lea.vmem %s0, 133
    %s1821 = smov 3
    %v1822 = vld [vmem:[%s1820] ss:$16 sm:%s1821]
    %s1823 = scalar_lea.vmem %s0, 133
    %s1824 = smov 12
    %v1825 = vld [vmem:[%s1823] ss:$16 sm:%s1824]
    %vm1826 = vcmask 1043458
    %v1827 = vsel %vm1826, %v1825, %v1822
    %s1828 = scalar_lea.vmem %s0, 261
    %s1829 = smov 48
    %v1830 = vld [vmem:[%s1828] ss:$16 sm:%s1829]
    %vm1831 = vcmask 1045508
    %v1832 = vsel %vm1831, %v1830, %v1827
    %s1833 = scalar_lea.vmem %s0, 261
    %s1834 = smov 192
    %v1835 = vld [vmem:[%s1833] ss:$16 sm:%s1834]
    %vm1836 = vcmask 1047558
    %v1837 = vsel %vm1836, %v1835, %v1832
    %1838 = vrot.lane.b32.xlu0 %v1837, 25
    %v1839 = vpop.permute.xlu0 %1838
    %vm1840 = vcmask 244936
    %s1841 = scalar_lea.vmem [#allocation0], 18
    %1842 = vst.msk [vmem:[%s1841] ss:$6 sm:$0x3] %vm1840, %v1839
    %s1843 = scalar_lea.vmem [#allocation0], 23
    %1844 = vst.msk [vmem:[%s1843] sm:$0xc] %vm1840, %v1839
    %s1845 = scalar_lea.vmem [#allocation0], 26
    %1846 = vst.msk [vmem:[%s1845] ss:$6 sm:$0x30] %vm1840, %v1839
    %s1847 = scalar_lea.vmem [#allocation0], 51
    %1848 = vst.msk [vmem:[%s1847] sm:$0xc0] %vm1840, %v1839
    %s1849 = scalar_lea.vmem %s0, 517
    %s1850 = smov 3
    %v1851 = vld [vmem:[%s1849] ss:$16 sm:%s1850]
    %s1852 = scalar_lea.vmem %s0, 517
    %s1853 = smov 12
    %v1854 = vld [vmem:[%s1852] ss:$16 sm:%s1853]
    %vm1855 = vcmask 1043458
    %v1856 = vsel %vm1855, %v1854, %v1851
    %s1857 = scalar_lea.vmem %s0, 705
    %v1858 = vld [vmem:[%s1857] sm:$0x10]
    %vm1859 = vcmask 1044484
    %v1860 = vsel %vm1859, %v1858, %v1856
    %1861 = vrot.lane.b32.xlu0 %v1860, 25
    %v1862 = vpop.permute.xlu0 %1861
    %vm1863 = vcmask 244936
    %s1864 = scalar_lea.vmem [#allocation0], 82
    %1865 = vst.msk [vmem:[%s1864] ss:$6 sm:$0x3] %vm1863, %v1862
    %s1866 = scalar_lea.vmem [#allocation0], 87
    %1867 = vst.msk [vmem:[%s1866] sm:$0xc] %vm1863, %v1862
    %s1868 = scalar_lea.vmem [#allocation0], 110
    %1869 = vst.msk [vmem:[%s1868] sm:$0x10] %vm1863, %v1862
    %s1870 = scalar_lea.vmem %s0, 4
    %s1871 = smov 3
    %v1872 = vld [vmem:[%s1870] ss:$16 sm:%s1871]
    %s1873 = scalar_lea.vmem %s0, 4
    %s1874 = smov 12
    %v1875 = vld [vmem:[%s1873] ss:$16 sm:%s1874]
    %vm1876 = vcmask 1043458
    %v1877 = vsel %vm1876, %v1875, %v1872
    %s1878 = scalar_lea.vmem %s0, 4
    %s1879 = smov 48
    %v1880 = vld [vmem:[%s1878] ss:$16 sm:%s1879]
    %vm1881 = vcmask 1045508
    %v1882 = vsel %vm1881, %v1880, %v1877
    %s1883 = scalar_lea.vmem %s0, 4
    %s1884 = smov 192
    %v1885 = vld [vmem:[%s1883] ss:$16 sm:%s1884]
    %vm1886 = vcmask 1047558
    %v1887 = vsel %vm1886, %v1885, %v1882
    %1888 = vrot.lane.b32.xlu0 %v1887, 20
    %v1889 = vpop.permute.xlu0 %1888
    %vm1890 = vcmask 203936
    %1891 = vst.msk [vmem:[#allocation0] sm:$0x7] %vm1890, %v1889
    %s1892 = scalar_lea.vmem [#allocation0], 5
    %1893 = vst.msk [vmem:[%s1892] sm:$0x38] %vm1890, %v1889
    %s1894 = scalar_lea.vmem [#allocation0], 10
    %1895 = vst.msk [vmem:[%s1894] sm:$0xc0] %vm1890, %v1889
    %s1896 = scalar_lea.vmem %s0, 196
    %s1897 = smov 3
    %v1898 = vld [vmem:[%s1896] ss:$16 sm:%s1897]
    %s1899 = scalar_lea.vmem %s0, 196
    %s1900 = smov 12
    %v1901 = vld [vmem:[%s1899] ss:$16 sm:%s1900]
    %vm1902 = vcmask 1043458
    %v1903 = vsel %vm1902, %v1901, %v1898
    %s1904 = scalar_lea.vmem %s0, 196
    %s1905 = smov 48
    %v1906 = vld [vmem:[%s1904] ss:$16 sm:%s1905]
    %vm1907 = vcmask 1045508
    %v1908 = vsel %vm1907, %v1906, %v1903
    %s1909 = scalar_lea.vmem %s0, 196
    %s1910 = smov 192
    %v1911 = vld [vmem:[%s1909] ss:$16 sm:%s1910]
    %vm1912 = vcmask 1047558
    %v1913 = vsel %vm1912, %v1911, %v1908
    %1914 = vrot.lane.b32.xlu0 %v1913, 20
    %v1915 = vpop.permute.xlu0 %1914
    %vm1916 = vcmask 203936
    %s1917 = scalar_lea.vmem [#allocation0], 32
    %1918 = vst.msk [vmem:[%s1917] sm:$0x7] %vm1916, %v1915
    %s1919 = scalar_lea.vmem [#allocation0], 37
    %1920 = vst.msk [vmem:[%s1919] sm:$0x38] %vm1916, %v1915
    %s1921 = scalar_lea.vmem [#allocation0], 42
    %1922 = vst.msk [vmem:[%s1921] sm:$0xc0] %vm1916, %v1915
    %s1923 = scalar_lea.vmem %s0, 388
    %s1924 = smov 3
    %v1925 = vld [vmem:[%s1923] ss:$16 sm:%s1924]
    %s1926 = scalar_lea.vmem %s0, 388
    %s1927 = smov 12
    %v1928 = vld [vmem:[%s1926] ss:$16 sm:%s1927]
    %vm1929 = vcmask 1043458
    %v1930 = vsel %vm1929, %v1928, %v1925
    %s1931 = scalar_lea.vmem %s0, 388
    %s1932 = smov 48
    %v1933 = vld [vmem:[%s1931] ss:$16 sm:%s1932]
    %vm1934 = vcmask 1045508
    %v1935 = vsel %vm1934, %v1933, %v1930
    %s1936 = scalar_lea.vmem %s0, 388
    %s1937 = smov 192
    %v1938 = vld [vmem:[%s1936] ss:$16 sm:%s1937]
    %vm1939 = vcmask 1047558
    %v1940 = vsel %vm1939, %v1938, %v1935
    %1941 = vrot.lane.b32.xlu0 %v1940, 20
    %v1942 = vpop.permute.xlu0 %1941
    %vm1943 = vcmask 203936
    %s1944 = scalar_lea.vmem [#allocation0], 64
    %1945 = vst.msk [vmem:[%s1944] sm:$0x7] %vm1943, %v1942
    %s1946 = scalar_lea.vmem [#allocation0], 69
    %1947 = vst.msk [vmem:[%s1946] sm:$0x38] %vm1943, %v1942
    %s1948 = scalar_lea.vmem [#allocation0], 74
    %1949 = vst.msk [vmem:[%s1948] sm:$0xc0] %vm1943, %v1942
    %s1950 = scalar_lea.vmem %s0, 580
    %s1951 = smov 3
    %v1952 = vld [vmem:[%s1950] ss:$16 sm:%s1951]
    %s1953 = scalar_lea.vmem %s0, 580
    %s1954 = smov 12
    %v1955 = vld [vmem:[%s1953] ss:$16 sm:%s1954]
    %vm1956 = vcmask 1043458
    %v1957 = vsel %vm1956, %v1955, %v1952
    %s1958 = scalar_lea.vmem %s0, 580
    %s1959 = smov 48
    %v1960 = vld [vmem:[%s1958] ss:$16 sm:%s1959]
    %vm1961 = vcmask 1045508
    %v1962 = vsel %vm1961, %v1960, %v1957
    %s1963 = scalar_lea.vmem %s0, 580
    %s1964 = smov 192
    %v1965 = vld [vmem:[%s1963] ss:$16 sm:%s1964]
    %vm1966 = vcmask 1047558
    %v1967 = vsel %vm1966, %v1965, %v1962
    %1968 = vrot.lane.b32.xlu0 %v1967, 20
    %v1969 = vpop.permute.xlu0 %1968
    %vm1970 = vcmask 203936
    %s1971 = scalar_lea.vmem [#allocation0], 96
    %1972 = vst.msk [vmem:[%s1971] sm:$0x7] %vm1970, %v1969
    %s1973 = scalar_lea.vmem [#allocation0], 101
    %1974 = vst.msk [vmem:[%s1973] sm:$0x38] %vm1970, %v1969
    %s1975 = scalar_lea.vmem [#allocation0], 106
    %1976 = vst.msk [vmem:[%s1975] sm:$0xc0] %vm1970, %v1969
    %s1977 = scalar_lea.vmem %s0, 132
    %s1978 = smov 3
    %v1979 = vld [vmem:[%s1977] ss:$16 sm:%s1978]
    %s1980 = scalar_lea.vmem %s0, 132
    %s1981 = smov 12
    %v1982 = vld [vmem:[%s1980] ss:$16 sm:%s1981]
    %vm1983 = vcmask 1043458
    %v1984 = vsel %vm1983, %v1982, %v1979
    %s1985 = scalar_lea.vmem %s0, 260
    %s1986 = smov 48
    %v1987 = vld [vmem:[%s1985] ss:$16 sm:%s1986]
    %vm1988 = vcmask 1045508
    %v1989 = vsel %vm1988, %v1987, %v1984
    %s1990 = scalar_lea.vmem %s0, 260
    %s1991 = smov 192
    %v1992 = vld [vmem:[%s1990] ss:$16 sm:%s1991]
    %vm1993 = vcmask 1047558
    %v1994 = vsel %vm1993, %v1992, %v1989
    %1995 = vrot.lane.b32.xlu0 %v1994, 20
    %v1996 = vpop.permute.xlu0 %1995
    %vm1997 = vcmask 203936
    %s1998 = scalar_lea.vmem [#allocation0], 18
    %1999 = vst.msk [vmem:[%s1998] ss:$6 sm:$0x3] %vm1997, %v1996
    %s2000 = scalar_lea.vmem [#allocation0], 23
    %2001 = vst.msk [vmem:[%s2000] sm:$0xc] %vm1997, %v1996
    %s2002 = scalar_lea.vmem [#allocation0], 26
    %2003 = vst.msk [vmem:[%s2002] ss:$6 sm:$0x30] %vm1997, %v1996
    %s2004 = scalar_lea.vmem [#allocation0], 51
    %2005 = vst.msk [vmem:[%s2004] sm:$0xc0] %vm1997, %v1996
    %s2006 = scalar_lea.vmem %s0, 516
    %s2007 = smov 3
    %v2008 = vld [vmem:[%s2006] ss:$16 sm:%s2007]
    %s2009 = scalar_lea.vmem %s0, 516
    %s2010 = smov 12
    %v2011 = vld [vmem:[%s2009] ss:$16 sm:%s2010]
    %vm2012 = vcmask 1043458
    %v2013 = vsel %vm2012, %v2011, %v2008
    %s2014 = scalar_lea.vmem %s0, 704
    %v2015 = vld [vmem:[%s2014] sm:$0x10]
    %vm2016 = vcmask 1044484
    %v2017 = vsel %vm2016, %v2015, %v2013
    %2018 = vrot.lane.b32.xlu0 %v2017, 20
    %v2019 = vpop.permute.xlu0 %2018
    %vm2020 = vcmask 203936
    %s2021 = scalar_lea.vmem [#allocation0], 82
    %2022 = vst.msk [vmem:[%s2021] ss:$6 sm:$0x3] %vm2020, %v2019
    %s2023 = scalar_lea.vmem [#allocation0], 87
    %2024 = vst.msk [vmem:[%s2023] sm:$0xc] %vm2020, %v2019
    %s2025 = scalar_lea.vmem [#allocation0], 110
    %2026 = vst.msk [vmem:[%s2025] sm:$0x10] %vm2020, %v2019
    %s2027 = scalar_lea.vmem %s0, 3
    %s2028 = smov 3
    %v2029 = vld [vmem:[%s2027] ss:$16 sm:%s2028]
    %s2030 = scalar_lea.vmem %s0, 3
    %s2031 = smov 12
    %v2032 = vld [vmem:[%s2030] ss:$16 sm:%s2031]
    %vm2033 = vcmask 1043458
    %v2034 = vsel %vm2033, %v2032, %v2029
    %s2035 = scalar_lea.vmem %s0, 3
    %s2036 = smov 48
    %v2037 = vld [vmem:[%s2035] ss:$16 sm:%s2036]
    %vm2038 = vcmask 1045508
    %v2039 = vsel %vm2038, %v2037, %v2034
    %s2040 = scalar_lea.vmem %s0, 3
    %s2041 = smov 192
    %v2042 = vld [vmem:[%s2040] ss:$16 sm:%s2041]
    %vm2043 = vcmask 1047558
    %v2044 = vsel %vm2043, %v2042, %v2039
    %2045 = vrot.lane.b32.xlu0 %v2044, 15
    %v2046 = vpop.permute.xlu0 %2045
    %vm2047 = vcmask 162936
    %2048 = vst.msk [vmem:[#allocation0] sm:$0x7] %vm2047, %v2046
    %s2049 = scalar_lea.vmem [#allocation0], 5
    %2050 = vst.msk [vmem:[%s2049] sm:$0x38] %vm2047, %v2046
    %s2051 = scalar_lea.vmem [#allocation0], 10
    %2052 = vst.msk [vmem:[%s2051] sm:$0xc0] %vm2047, %v2046
    %s2053 = scalar_lea.vmem %s0, 195
    %s2054 = smov 3
    %v2055 = vld [vmem:[%s2053] ss:$16 sm:%s2054]
    %s2056 = scalar_lea.vmem %s0, 195
    %s2057 = smov 12
    %v2058 = vld [vmem:[%s2056] ss:$16 sm:%s2057]
    %vm2059 = vcmask 1043458
    %v2060 = vsel %vm2059, %v2058, %v2055
    %s2061 = scalar_lea.vmem %s0, 195
    %s2062 = smov 48
    %v2063 = vld [vmem:[%s2061] ss:$16 sm:%s2062]
    %vm2064 = vcmask 1045508
    %v2065 = vsel %vm2064, %v2063, %v2060
    %s2066 = scalar_lea.vmem %s0, 195
    %s2067 = smov 192
    %v2068 = vld [vmem:[%s2066] ss:$16 sm:%s2067]
    %vm2069 = vcmask 1047558
    %v2070 = vsel %vm2069, %v2068, %v2065
    %2071 = vrot.lane.b32.xlu0 %v2070, 15
    %v2072 = vpop.permute.xlu0 %2071
    %vm2073 = vcmask 162936
    %s2074 = scalar_lea.vmem [#allocation0], 32
    %2075 = vst.msk [vmem:[%s2074] sm:$0x7] %vm2073, %v2072
    %s2076 = scalar_lea.vmem [#allocation0], 37
    %2077 = vst.msk [vmem:[%s2076] sm:$0x38] %vm2073, %v2072
    %s2078 = scalar_lea.vmem [#allocation0], 42
    %2079 = vst.msk [vmem:[%s2078] sm:$0xc0] %vm2073, %v2072
    %s2080 = scalar_lea.vmem %s0, 387
    %s2081 = smov 3
    %v2082 = vld [vmem:[%s2080] ss:$16 sm:%s2081]
    %s2083 = scalar_lea.vmem %s0, 387
    %s2084 = smov 12
    %v2085 = vld [vmem:[%s2083] ss:$16 sm:%s2084]
    %vm2086 = vcmask 1043458
    %v2087 = vsel %vm2086, %v2085, %v2082
    %s2088 = scalar_lea.vmem %s0, 387
    %s2089 = smov 48
    %v2090 = vld [vmem:[%s2088] ss:$16 sm:%s2089]
    %vm2091 = vcmask 1045508
    %v2092 = vsel %vm2091, %v2090, %v2087
    %s2093 = scalar_lea.vmem %s0, 387
    %s2094 = smov 192
    %v2095 = vld [vmem:[%s2093] ss:$16 sm:%s2094]
    %vm2096 = vcmask 1047558
    %v2097 = vsel %vm2096, %v2095, %v2092
    %2098 = vrot.lane.b32.xlu0 %v2097, 15
    %v2099 = vpop.permute.xlu0 %2098
    %vm2100 = vcmask 162936
    %s2101 = scalar_lea.vmem [#allocation0], 64
    %2102 = vst.msk [vmem:[%s2101] sm:$0x7] %vm2100, %v2099
    %s2103 = scalar_lea.vmem [#allocation0], 69
    %2104 = vst.msk [vmem:[%s2103] sm:$0x38] %vm2100, %v2099
    %s2105 = scalar_lea.vmem [#allocation0], 74
    %2106 = vst.msk [vmem:[%s2105] sm:$0xc0] %vm2100, %v2099
    %s2107 = scalar_lea.vmem %s0, 579
    %s2108 = smov 3
    %v2109 = vld [vmem:[%s2107] ss:$16 sm:%s2108]
    %s2110 = scalar_lea.vmem %s0, 579
    %s2111 = smov 12
    %v2112 = vld [vmem:[%s2110] ss:$16 sm:%s2111]
    %vm2113 = vcmask 1043458
    %v2114 = vsel %vm2113, %v2112, %v2109
    %s2115 = scalar_lea.vmem %s0, 579
    %s2116 = smov 48
    %v2117 = vld [vmem:[%s2115] ss:$16 sm:%s2116]
    %vm2118 = vcmask 1045508
    %v2119 = vsel %vm2118, %v2117, %v2114
    %s2120 = scalar_lea.vmem %s0, 579
    %s2121 = smov 192
    %v2122 = vld [vmem:[%s2120] ss:$16 sm:%s2121]
    %vm2123 = vcmask 1047558
    %v2124 = vsel %vm2123, %v2122, %v2119
    %2125 = vrot.lane.b32.xlu0 %v2124, 15
    %v2126 = vpop.permute.xlu0 %2125
    %vm2127 = vcmask 162936
    %s2128 = scalar_lea.vmem [#allocation0], 96
    %2129 = vst.msk [vmem:[%s2128] sm:$0x7] %vm2127, %v2126
    %s2130 = scalar_lea.vmem [#allocation0], 101
    %2131 = vst.msk [vmem:[%s2130] sm:$0x38] %vm2127, %v2126
    %s2132 = scalar_lea.vmem [#allocation0], 106
    %2133 = vst.msk [vmem:[%s2132] sm:$0xc0] %vm2127, %v2126
    %s2134 = scalar_lea.vmem %s0, 131
    %s2135 = smov 3
    %v2136 = vld [vmem:[%s2134] ss:$16 sm:%s2135]
    %s2137 = scalar_lea.vmem %s0, 131
    %s2138 = smov 12
    %v2139 = vld [vmem:[%s2137] ss:$16 sm:%s2138]
    %vm2140 = vcmask 1043458
    %v2141 = vsel %vm2140, %v2139, %v2136
    %s2142 = scalar_lea.vmem %s0, 259
    %s2143 = smov 48
    %v2144 = vld [vmem:[%s2142] ss:$16 sm:%s2143]
    %vm2145 = vcmask 1045508
    %v2146 = vsel %vm2145, %v2144, %v2141
    %s2147 = scalar_lea.vmem %s0, 259
    %s2148 = smov 192
    %v2149 = vld [vmem:[%s2147] ss:$16 sm:%s2148]
    %vm2150 = vcmask 1047558
    %v2151 = vsel %vm2150, %v2149, %v2146
    %2152 = vrot.lane.b32.xlu0 %v2151, 15
    %v2153 = vpop.permute.xlu0 %2152
    %vm2154 = vcmask 162936
    %s2155 = scalar_lea.vmem [#allocation0], 18
    %2156 = vst.msk [vmem:[%s2155] ss:$6 sm:$0x3] %vm2154, %v2153
    %s2157 = scalar_lea.vmem [#allocation0], 23
    %2158 = vst.msk [vmem:[%s2157] sm:$0xc] %vm2154, %v2153
    %s2159 = scalar_lea.vmem [#allocation0], 26
    %2160 = vst.msk [vmem:[%s2159] ss:$6 sm:$0x30] %vm2154, %v2153
    %s2161 = scalar_lea.vmem [#allocation0], 51
    %2162 = vst.msk [vmem:[%s2161] sm:$0xc0] %vm2154, %v2153
    %s2163 = scalar_lea.vmem %s0, 515
    %s2164 = smov 3
    %v2165 = vld [vmem:[%s2163] ss:$16 sm:%s2164]
    %s2166 = scalar_lea.vmem %s0, 515
    %s2167 = smov 12
    %v2168 = vld [vmem:[%s2166] ss:$16 sm:%s2167]
    %vm2169 = vcmask 1043458
    %v2170 = vsel %vm2169, %v2168, %v2165
    %s2171 = scalar_lea.vmem %s0, 703
    %v2172 = vld [vmem:[%s2171] sm:$0x10]
    %vm2173 = vcmask 1044484
    %v2174 = vsel %vm2173, %v2172, %v2170
    %2175 = vrot.lane.b32.xlu0 %v2174, 15
    %v2176 = vpop.permute.xlu0 %2175
    %vm2177 = vcmask 162936
    %s2178 = scalar_lea.vmem [#allocation0], 82
    %2179 = vst.msk [vmem:[%s2178] ss:$6 sm:$0x3] %vm2177, %v2176
    %s2180 = scalar_lea.vmem [#allocation0], 87
    %2181 = vst.msk [vmem:[%s2180] sm:$0xc] %vm2177, %v2176
    %s2182 = scalar_lea.vmem [#allocation0], 110
    %2183 = vst.msk [vmem:[%s2182] sm:$0x10] %vm2177, %v2176
    %s2184 = scalar_lea.vmem %s0, 2
    %s2185 = smov 3
    %v2186 = vld [vmem:[%s2184] ss:$16 sm:%s2185]
    %s2187 = scalar_lea.vmem %s0, 2
    %s2188 = smov 12
    %v2189 = vld [vmem:[%s2187] ss:$16 sm:%s2188]
    %vm2190 = vcmask 1043458
    %v2191 = vsel %vm2190, %v2189, %v2186
    %s2192 = scalar_lea.vmem %s0, 2
    %s2193 = smov 48
    %v2194 = vld [vmem:[%s2192] ss:$16 sm:%s2193]
    %vm2195 = vcmask 1045508
    %v2196 = vsel %vm2195, %v2194, %v2191
    %s2197 = scalar_lea.vmem %s0, 2
    %s2198 = smov 192
    %v2199 = vld [vmem:[%s2197] ss:$16 sm:%s2198]
    %vm2200 = vcmask 1047558
    %v2201 = vsel %vm2200, %v2199, %v2196
    %2202 = vrot.lane.b32.xlu0 %v2201, 10
    %v2203 = vpop.permute.xlu0 %2202
    %vm2204 = vcmask 121936
    %2205 = vst.msk [vmem:[#allocation0] sm:$0x7] %vm2204, %v2203
    %s2206 = scalar_lea.vmem [#allocation0], 5
    %2207 = vst.msk [vmem:[%s2206] sm:$0x38] %vm2204, %v2203
    %s2208 = scalar_lea.vmem [#allocation0], 10
    %2209 = vst.msk [vmem:[%s2208] sm:$0xc0] %vm2204, %v2203
    %s2210 = scalar_lea.vmem %s0, 194
    %s2211 = smov 3
    %v2212 = vld [vmem:[%s2210] ss:$16 sm:%s2211]
    %s2213 = scalar_lea.vmem %s0, 194
    %s2214 = smov 12
    %v2215 = vld [vmem:[%s2213] ss:$16 sm:%s2214]
    %vm2216 = vcmask 1043458
    %v2217 = vsel %vm2216, %v2215, %v2212
    %s2218 = scalar_lea.vmem %s0, 194
    %s2219 = smov 48
    %v2220 = vld [vmem:[%s2218] ss:$16 sm:%s2219]
    %vm2221 = vcmask 1045508
    %v2222 = vsel %vm2221, %v2220, %v2217
    %s2223 = scalar_lea.vmem %s0, 194
    %s2224 = smov 192
    %v2225 = vld [vmem:[%s2223] ss:$16 sm:%s2224]
    %vm2226 = vcmask 1047558
    %v2227 = vsel %vm2226, %v2225, %v2222
    %2228 = vrot.lane.b32.xlu0 %v2227, 10
    %v2229 = vpop.permute.xlu0 %2228
    %vm2230 = vcmask 121936
    %s2231 = scalar_lea.vmem [#allocation0], 32
    %2232 = vst.msk [vmem:[%s2231] sm:$0x7] %vm2230, %v2229
    %s2233 = scalar_lea.vmem [#allocation0], 37
    %2234 = vst.msk [vmem:[%s2233] sm:$0x38] %vm2230, %v2229
    %s2235 = scalar_lea.vmem [#allocation0], 42
    %2236 = vst.msk [vmem:[%s2235] sm:$0xc0] %vm2230, %v2229
    %s2237 = scalar_lea.vmem %s0, 386
    %s2238 = smov 3
    %v2239 = vld [vmem:[%s2237] ss:$16 sm:%s2238]
    %s2240 = scalar_lea.vmem %s0, 386
    %s2241 = smov 12
    %v2242 = vld [vmem:[%s2240] ss:$16 sm:%s2241]
    %vm2243 = vcmask 1043458
    %v2244 = vsel %vm2243, %v2242, %v2239
    %s2245 = scalar_lea.vmem %s0, 386
    %s2246 = smov 48
    %v2247 = vld [vmem:[%s2245] ss:$16 sm:%s2246]
    %vm2248 = vcmask 1045508
    %v2249 = vsel %vm2248, %v2247, %v2244
    %s2250 = scalar_lea.vmem %s0, 386
    %s2251 = smov 192
    %v2252 = vld [vmem:[%s2250] ss:$16 sm:%s2251]
    %vm2253 = vcmask 1047558
    %v2254 = vsel %vm2253, %v2252, %v2249
    %2255 = vrot.lane.b32.xlu0 %v2254, 10
    %v2256 = vpop.permute.xlu0 %2255
    %vm2257 = vcmask 121936
    %s2258 = scalar_lea.vmem [#allocation0], 64
    %2259 = vst.msk [vmem:[%s2258] sm:$0x7] %vm2257, %v2256
    %s2260 = scalar_lea.vmem [#allocation0], 69
    %2261 = vst.msk [vmem:[%s2260] sm:$0x38] %vm2257, %v2256
    %s2262 = scalar_lea.vmem [#allocation0], 74
    %2263 = vst.msk [vmem:[%s2262] sm:$0xc0] %vm2257, %v2256
    %s2264 = scalar_lea.vmem %s0, 578
    %s2265 = smov 3
    %v2266 = vld [vmem:[%s2264] ss:$16 sm:%s2265]
    %s2267 = scalar_lea.vmem %s0, 578
    %s2268 = smov 12
    %v2269 = vld [vmem:[%s2267] ss:$16 sm:%s2268]
    %vm2270 = vcmask 1043458
    %v2271 = vsel %vm2270, %v2269, %v2266
    %s2272 = scalar_lea.vmem %s0, 578
    %s2273 = smov 48
    %v2274 = vld [vmem:[%s2272] ss:$16 sm:%s2273]
    %vm2275 = vcmask 1045508
    %v2276 = vsel %vm2275, %v2274, %v2271
    %s2277 = scalar_lea.vmem %s0, 578
    %s2278 = smov 192
    %v2279 = vld [vmem:[%s2277] ss:$16 sm:%s2278]
    %vm2280 = vcmask 1047558
    %v2281 = vsel %vm2280, %v2279, %v2276
    %2282 = vrot.lane.b32.xlu0 %v2281, 10
    %v2283 = vpop.permute.xlu0 %2282
    %vm2284 = vcmask 121936
    %s2285 = scalar_lea.vmem [#allocation0], 96
    %2286 = vst.msk [vmem:[%s2285] sm:$0x7] %vm2284, %v2283
    %s2287 = scalar_lea.vmem [#allocation0], 101
    %2288 = vst.msk [vmem:[%s2287] sm:$0x38] %vm2284, %v2283
    %s2289 = scalar_lea.vmem [#allocation0], 106
    %2290 = vst.msk [vmem:[%s2289] sm:$0xc0] %vm2284, %v2283
    %s2291 = scalar_lea.vmem %s0, 130
    %s2292 = smov 3
    %v2293 = vld [vmem:[%s2291] ss:$16 sm:%s2292]
    %s2294 = scalar_lea.vmem %s0, 130
    %s2295 = smov 12
    %v2296 = vld [vmem:[%s2294] ss:$16 sm:%s2295]
    %vm2297 = vcmask 1043458
    %v2298 = vsel %vm2297, %v2296, %v2293
    %s2299 = scalar_lea.vmem %s0, 258
    %s2300 = smov 48
    %v2301 = vld [vmem:[%s2299] ss:$16 sm:%s2300]
    %vm2302 = vcmask 1045508
    %v2303 = vsel %vm2302, %v2301, %v2298
    %s2304 = scalar_lea.vmem %s0, 258
    %s2305 = smov 192
    %v2306 = vld [vmem:[%s2304] ss:$16 sm:%s2305]
    %vm2307 = vcmask 1047558
    %v2308 = vsel %vm2307, %v2306, %v2303
    %2309 = vrot.lane.b32.xlu0 %v2308, 10
    %v2310 = vpop.permute.xlu0 %2309
    %vm2311 = vcmask 121936
    %s2312 = scalar_lea.vmem [#allocation0], 18
    %2313 = vst.msk [vmem:[%s2312] ss:$6 sm:$0x3] %vm2311, %v2310
    %s2314 = scalar_lea.vmem [#allocation0], 23
    %2315 = vst.msk [vmem:[%s2314] sm:$0xc] %vm2311, %v2310
    %s2316 = scalar_lea.vmem [#allocation0], 26
    %2317 = vst.msk [vmem:[%s2316] ss:$6 sm:$0x30] %vm2311, %v2310
    %s2318 = scalar_lea.vmem [#allocation0], 51
    %2319 = vst.msk [vmem:[%s2318] sm:$0xc0] %vm2311, %v2310
    %s2320 = scalar_lea.vmem %s0, 514
    %s2321 = smov 3
    %v2322 = vld [vmem:[%s2320] ss:$16 sm:%s2321]
    %s2323 = scalar_lea.vmem %s0, 514
    %s2324 = smov 12
    %v2325 = vld [vmem:[%s2323] ss:$16 sm:%s2324]
    %vm2326 = vcmask 1043458
    %v2327 = vsel %vm2326, %v2325, %v2322
    %s2328 = scalar_lea.vmem %s0, 702
    %v2329 = vld [vmem:[%s2328] sm:$0x10]
    %vm2330 = vcmask 1044484
    %v2331 = vsel %vm2330, %v2329, %v2327
    %2332 = vrot.lane.b32.xlu0 %v2331, 10
    %v2333 = vpop.permute.xlu0 %2332
    %vm2334 = vcmask 121936
    %s2335 = scalar_lea.vmem [#allocation0], 82
    %2336 = vst.msk [vmem:[%s2335] ss:$6 sm:$0x3] %vm2334, %v2333
    %s2337 = scalar_lea.vmem [#allocation0], 87
    %2338 = vst.msk [vmem:[%s2337] sm:$0xc] %vm2334, %v2333
    %s2339 = scalar_lea.vmem [#allocation0], 110
    %2340 = vst.msk [vmem:[%s2339] sm:$0x10] %vm2334, %v2333
    %s2341 = scalar_lea.vmem %s0, 1
    %s2342 = smov 3
    %v2343 = vld [vmem:[%s2341] ss:$16 sm:%s2342]
    %s2344 = scalar_lea.vmem %s0, 1
    %s2345 = smov 12
    %v2346 = vld [vmem:[%s2344] ss:$16 sm:%s2345]
    %vm2347 = vcmask 1043458
    %v2348 = vsel %vm2347, %v2346, %v2343
    %s2349 = scalar_lea.vmem %s0, 1
    %s2350 = smov 48
    %v2351 = vld [vmem:[%s2349] ss:$16 sm:%s2350]
    %vm2352 = vcmask 1045508
    %v2353 = vsel %vm2352, %v2351, %v2348
    %s2354 = scalar_lea.vmem %s0, 1
    %s2355 = smov 192
    %v2356 = vld [vmem:[%s2354] ss:$16 sm:%s2355]
    %vm2357 = vcmask 1047558
    %v2358 = vsel %vm2357, %v2356, %v2353
    %2359 = vrot.lane.b32.xlu0 %v2358, 5
    %v2360 = vpop.permute.xlu0 %2359
    %vm2361 = vcmask 80936
    %2362 = vst.msk [vmem:[#allocation0] sm:$0x7] %vm2361, %v2360
    %s2363 = scalar_lea.vmem [#allocation0], 5
    %2364 = vst.msk [vmem:[%s2363] sm:$0x38] %vm2361, %v2360
    %s2365 = scalar_lea.vmem [#allocation0], 10
    %2366 = vst.msk [vmem:[%s2365] sm:$0xc0] %vm2361, %v2360
    %s2367 = scalar_lea.vmem %s0, 193
    %s2368 = smov 3
    %v2369 = vld [vmem:[%s2367] ss:$16 sm:%s2368]
    %s2370 = scalar_lea.vmem %s0, 193
    %s2371 = smov 12
    %v2372 = vld [vmem:[%s2370] ss:$16 sm:%s2371]
    %vm2373 = vcmask 1043458
    %v2374 = vsel %vm2373, %v2372, %v2369
    %s2375 = scalar_lea.vmem %s0, 193
    %s2376 = smov 48
    %v2377 = vld [vmem:[%s2375] ss:$16 sm:%s2376]
    %vm2378 = vcmask 1045508
    %v2379 = vsel %vm2378, %v2377, %v2374
    %s2380 = scalar_lea.vmem %s0, 193
    %s2381 = smov 192
    %v2382 = vld [vmem:[%s2380] ss:$16 sm:%s2381]
    %vm2383 = vcmask 1047558
    %v2384 = vsel %vm2383, %v2382, %v2379
    %2385 = vrot.lane.b32.xlu0 %v2384, 5
    %v2386 = vpop.permute.xlu0 %2385
    %vm2387 = vcmask 80936
    %s2388 = scalar_lea.vmem [#allocation0], 32
    %2389 = vst.msk [vmem:[%s2388] sm:$0x7] %vm2387, %v2386
    %s2390 = scalar_lea.vmem [#allocation0], 37
    %2391 = vst.msk [vmem:[%s2390] sm:$0x38] %vm2387, %v2386
    %s2392 = scalar_lea.vmem [#allocation0], 42
    %2393 = vst.msk [vmem:[%s2392] sm:$0xc0] %vm2387, %v2386
    %s2394 = scalar_lea.vmem %s0, 385
    %s2395 = smov 3
    %v2396 = vld [vmem:[%s2394] ss:$16 sm:%s2395]
    %s2397 = scalar_lea.vmem %s0, 385
    %s2398 = smov 12
    %v2399 = vld [vmem:[%s2397] ss:$16 sm:%s2398]
    %vm2400 = vcmask 1043458
    %v2401 = vsel %vm2400, %v2399, %v2396
    %s2402 = scalar_lea.vmem %s0, 385
    %s2403 = smov 48
    %v2404 = vld [vmem:[%s2402] ss:$16 sm:%s2403]
    %vm2405 = vcmask 1045508
    %v2406 = vsel %vm2405, %v2404, %v2401
    %s2407 = scalar_lea.vmem %s0, 385
    %s2408 = smov 192
    %v2409 = vld [vmem:[%s2407] ss:$16 sm:%s2408]
    %vm2410 = vcmask 1047558
    %v2411 = vsel %vm2410, %v2409, %v2406
    %2412 = vrot.lane.b32.xlu0 %v2411, 5
    %v2413 = vpop.permute.xlu0 %2412
    %vm2414 = vcmask 80936
    %s2415 = scalar_lea.vmem [#allocation0], 64
    %2416 = vst.msk [vmem:[%s2415] sm:$0x7] %vm2414, %v2413
    %s2417 = scalar_lea.vmem [#allocation0], 69
    %2418 = vst.msk [vmem:[%s2417] sm:$0x38] %vm2414, %v2413
    %s2419 = scalar_lea.vmem [#allocation0], 74
    %2420 = vst.msk [vmem:[%s2419] sm:$0xc0] %vm2414, %v2413
    %s2421 = scalar_lea.vmem %s0, 577
    %s2422 = smov 3
    %v2423 = vld [vmem:[%s2421] ss:$16 sm:%s2422]
    %s2424 = scalar_lea.vmem %s0, 577
    %s2425 = smov 12
    %v2426 = vld [vmem:[%s2424] ss:$16 sm:%s2425]
    %vm2427 = vcmask 1043458
    %v2428 = vsel %vm2427, %v2426, %v2423
    %s2429 = scalar_lea.vmem %s0, 577
    %s2430 = smov 48
    %v2431 = vld [vmem:[%s2429] ss:$16 sm:%s2430]
    %vm2432 = vcmask 1045508
    %v2433 = vsel %vm2432, %v2431, %v2428
    %s2434 = scalar_lea.vmem %s0, 577
    %s2435 = smov 192
    %v2436 = vld [vmem:[%s2434] ss:$16 sm:%s2435]
    %vm2437 = vcmask 1047558
    %v2438 = vsel %vm2437, %v2436, %v2433
    %2439 = vrot.lane.b32.xlu0 %v2438, 5
    %v2440 = vpop.permute.xlu0 %2439
    %vm2441 = vcmask 80936
    %s2442 = scalar_lea.vmem [#allocation0], 96
    %2443 = vst.msk [vmem:[%s2442] sm:$0x7] %vm2441, %v2440
    %s2444 = scalar_lea.vmem [#allocation0], 101
    %2445 = vst.msk [vmem:[%s2444] sm:$0x38] %vm2441, %v2440
    %s2446 = scalar_lea.vmem [#allocation0], 106
    %2447 = vst.msk [vmem:[%s2446] sm:$0xc0] %vm2441, %v2440
    %s2448 = scalar_lea.vmem %s0, 129
    %s2449 = smov 3
    %v2450 = vld [vmem:[%s2448] ss:$16 sm:%s2449]
    %s2451 = scalar_lea.vmem %s0, 129
    %s2452 = smov 12
    %v2453 = vld [vmem:[%s2451] ss:$16 sm:%s2452]
    %vm2454 = vcmask 1043458
    %v2455 = vsel %vm2454, %v2453, %v2450
    %s2456 = scalar_lea.vmem %s0, 257
    %s2457 = smov 48
    %v2458 = vld [vmem:[%s2456] ss:$16 sm:%s2457]
    %vm2459 = vcmask 1045508
    %v2460 = vsel %vm2459, %v2458, %v2455
    %s2461 = scalar_lea.vmem %s0, 257
    %s2462 = smov 192
    %v2463 = vld [vmem:[%s2461] ss:$16 sm:%s2462]
    %vm2464 = vcmask 1047558
    %v2465 = vsel %vm2464, %v2463, %v2460
    %2466 = vrot.lane.b32.xlu0 %v2465, 5
    %v2467 = vpop.permute.xlu0 %2466
    %vm2468 = vcmask 80936
    %s2469 = scalar_lea.vmem [#allocation0], 18
    %2470 = vst.msk [vmem:[%s2469] ss:$6 sm:$0x3] %vm2468, %v2467
    %s2471 = scalar_lea.vmem [#allocation0], 23
    %2472 = vst.msk [vmem:[%s2471] sm:$0xc] %vm2468, %v2467
    %s2473 = scalar_lea.vmem [#allocation0], 26
    %2474 = vst.msk [vmem:[%s2473] ss:$6 sm:$0x30] %vm2468, %v2467
    %s2475 = scalar_lea.vmem [#allocation0], 51
    %2476 = vst.msk [vmem:[%s2475] sm:$0xc0] %vm2468, %v2467
    %s2477 = scalar_lea.vmem %s0, 513
    %s2478 = smov 3
    %v2479 = vld [vmem:[%s2477] ss:$16 sm:%s2478]
    %s2480 = scalar_lea.vmem %s0, 513
    %s2481 = smov 12
    %v2482 = vld [vmem:[%s2480] ss:$16 sm:%s2481]
    %vm2483 = vcmask 1043458
    %v2484 = vsel %vm2483, %v2482, %v2479
    %s2485 = scalar_lea.vmem %s0, 701
    %v2486 = vld [vmem:[%s2485] sm:$0x10]
    %vm2487 = vcmask 1044484
    %v2488 = vsel %vm2487, %v2486, %v2484
    %2489 = vrot.lane.b32.xlu0 %v2488, 5
    %v2490 = vpop.permute.xlu0 %2489
    %vm2491 = vcmask 80936
    %s2492 = scalar_lea.vmem [#allocation0], 82
    %2493 = vst.msk [vmem:[%s2492] ss:$6 sm:$0x3] %vm2491, %v2490
    %s2494 = scalar_lea.vmem [#allocation0], 87
    %2495 = vst.msk [vmem:[%s2494] sm:$0xc] %vm2491, %v2490
    %s2496 = scalar_lea.vmem [#allocation0], 110
    %2497 = vst.msk [vmem:[%s2496] sm:$0x10] %vm2491, %v2490
    %s2499 = sshllo.u32 0, 4
    %v2501 = vld [vmem:[#allocation0] sm:%s2499]
    %s2502 = sshllo.u32 0, 4
    %2503 = vst [vmem:[%s1] sm:%s2502] %v2501
    %s2504 = scalar_lea.vmem [#allocation0], 8
    %v2505 = vld [vmem:[%s2504] sm:%s2499]
    %s2506 = sshllo.u32 0, 4
    %s2507 = scalar_lea.vmem %s1, 4
    %2508 = vst [vmem:[%s2507] sm:%s2506] %v2505
    %s2509 = scalar_lea.vmem [#allocation0], 16
    %v2510 = vld [vmem:[%s2509] sm:%s2499]
    %s2511 = sshllo.u32 0, 4
    %s2512 = smul.addr 4, 2
    %s2513 = scalar_lea.vmem %s1, %s2512
    %2514 = vst [vmem:[%s2513] sm:%s2511] %v2510
    %s2515 = scalar_lea.vmem [#allocation0], 24
    %v2516 = vld [vmem:[%s2515] sm:%s2499]
    %s2517 = sshllo.u32 0, 4
    %s2518 = smul.addr 4, 3
    %s2519 = scalar_lea.vmem %s1, %s2518
    %2520 = vst [vmem:[%s2519] sm:%s2517] %v2516
    %s2521 = scalar_lea.vmem [#allocation0], 32
    %v2522 = vld [vmem:[%s2521] sm:%s2499]
    %s2523 = sshllo.u32 0, 4
    %s2524 = smul.addr 4, 4
    %s2525 = scalar_lea.vmem %s1, %s2524
    %2526 = vst [vmem:[%s2525] sm:%s2523] %v2522
    %s2527 = scalar_lea.vmem [#allocation0], 40
    %v2528 = vld [vmem:[%s2527] sm:%s2499]
    %s2529 = sshllo.u32 0, 4
    %s2530 = smul.addr 4, 5
    %s2531 = scalar_lea.vmem %s1, %s2530
    %2532 = vst [vmem:[%s2531] sm:%s2529] %v2528
    %s2533 = scalar_lea.vmem [#allocation0], 48
    %v2534 = vld [vmem:[%s2533] sm:%s2499]
    %s2535 = sshllo.u32 0, 4
    %s2536 = smul.addr 4, 6
    %s2537 = scalar_lea.vmem %s1, %s2536
    %2538 = vst [vmem:[%s2537] sm:%s2535] %v2534
    %s2539 = scalar_lea.vmem [#allocation0], 56
    %v2540 = vld [vmem:[%s2539] sm:%s2499]
    %s2541 = sshllo.u32 0, 4
    %s2542 = smul.addr 4, 7
    %s2543 = scalar_lea.vmem %s1, %s2542
    %2544 = vst [vmem:[%s2543] sm:%s2541] %v2540
    %s2545 = scalar_lea.vmem [#allocation0], 64
    %v2546 = vld [vmem:[%s2545] sm:%s2499]
    %s2547 = sshllo.u32 0, 4
    %s2548 = smul.addr 4, 8
    %s2549 = scalar_lea.vmem %s1, %s2548
    %2550 = vst [vmem:[%s2549] sm:%s2547] %v2546
    %s2551 = scalar_lea.vmem [#allocation0], 72
    %v2552 = vld [vmem:[%s2551] sm:%s2499]
    %s2553 = sshllo.u32 0, 4
    %s2554 = smul.addr 4, 9
    %s2555 = scalar_lea.vmem %s1, %s2554
    %2556 = vst [vmem:[%s2555] sm:%s2553] %v2552
    %s2557 = scalar_lea.vmem [#allocation0], 80
    %v2558 = vld [vmem:[%s2557] sm:%s2499]
    %s2559 = sshllo.u32 0, 4
    %s2560 = smul.addr 4, 10
    %s2561 = scalar_lea.vmem %s1, %s2560
    %2562 = vst [vmem:[%s2561] sm:%s2559] %v2558
    %s2563 = scalar_lea.vmem [#allocation0], 88
    %v2564 = vld [vmem:[%s2563] sm:%s2499]
    %s2565 = sshllo.u32 0, 4
    %s2566 = smul.addr 4, 11
    %s2567 = scalar_lea.vmem %s1, %s2566
    %2568 = vst [vmem:[%s2567] sm:%s2565] %v2564
    %s2569 = scalar_lea.vmem [#allocation0], 96
    %v2570 = vld [vmem:[%s2569] sm:%s2499]
    %s2571 = sshllo.u32 0, 4
    %s2572 = smul.addr 4, 12
    %s2573 = scalar_lea.vmem %s1, %s2572
    %2574 = vst [vmem:[%s2573] sm:%s2571] %v2570
    %s2575 = scalar_lea.vmem [#allocation0], 104
    %v2576 = vld [vmem:[%s2575] sm:%s2499]
    %s2577 = sshllo.u32 0, 4
    %s2578 = smul.addr 4, 13
    %s2579 = scalar_lea.vmem %s1, %s2578
    %2580 = vst [vmem:[%s2579] sm:%s2577] %v2576
    %s2581 = scalar_lea.vmem [#allocation0], 112
    %v2582 = vld [vmem:[%s2581] sm:%s2499]
    %s2583 = sshllo.u32 0, 4
    %s2584 = smul.addr 4, 14
    %s2585 = scalar_lea.vmem %s1, %s2584
    %2586 = vst [vmem:[%s2585] sm:%s2583] %v2582

// kernel: lipfd_conv1.1
$region0: #{lipfd_conv1.1}
  #allocation0 [shape = 'u32[]', space=smem, size = 0x4, offset = 0x4, fixed_abs, tag = 'smem constant byte address 0x4 - core index']
  #allocation1 [shape = 'u32[144,128]{1,0:T(1,128)}', space=vmem, size = 0x12000, scoped, tag = 'internal scratch']
  %s0 = inlined_call_operand.vmem [shape: f32[2,3,16,5,80], index: 0, kind: input, shape index: {}]
  %s1 = inlined_call_operand.vmem [shape: f32[3,3,5,80], index: 1, kind: input, shape index: {}]
  %s2 = inlined_call_operand.vmem [shape: f32[80,16], index: 2, kind: input, shape index: {}]
  %s3 = inlined_call_operand.vmem [shape: f32[3], index: 3, kind: input, shape index: {}]
  %s4 = inlined_call_operand.hbm [shape: f32[2,3,16,16], index: 4, kind: output, shape index: {}]
  %s5 = sld [smem:[#allocation0]]
  $region53: #{lipfd_conv1.1} parent=0
    _
  %s7 = ssub.s32 1, %s5
  %s8 = scalar_select 0, %s7, %s5
  $region1: #{lipfd_conv1.1} parent=0
    #allocation2 [shape = 'u8[512]{0}', space=smem, size = 0x200, scoped, tag = 'input window, operand 3, single buffered']
    #allocation3 [shape = 's32[2]{0}', space=sflag, size = 0x8, scoped, tag = 'scoped memory for lipfd_conv1.1']
    #allocation4 [shape = 's32[2]{0}', space=sflag, size = 0x8, scoped, tag = 'scoped memory for lipfd_conv1.1']
    #allocation5 [shape = 'u8[49152]{0}', space=vmem, size = 0xc000, scoped, tag = 'output window, operand 0']
    %9 = vsyncpa [#allocation4], 0
    %10 = vsyncpa [#allocation3], 0
    %s11 = scalar_lea.sflag [#allocation3], 1
    %12 = vsyncpa %s11, 0
    loop: start=0, step=1, limit=4
    $region2: #{lipfd_conv1.1} parent=1 // loop_pre_header
      _
    $region3: #{lipfd_conv1.1} parent=1 // loop_header
      %s14 = sphi 0, %s18
      %p15 = scmp.ge.s32.totalorder %s14, 4
      %s21 = sphi 0, %s33
      %s22 = sphi 0, %s29
      %s23 = sphi 0, %s21
      %s24 = sphi 0, %s22
      %s25 = sphi 0, %s23
      %s26 = sphi 0, %s24
      %s38 = sphi 0, %s40
      %s41 = sphi 0, %s38
      %s42 = sphi 0, %s41
      %s58 = sphi 0, %s42
      %s62 = sphi 0, %s62
      %s64 = sphi 0, %s62
      %s65 = sphi 0, %s64
      %s79 = sphi 0, %s65
      %s83 = sphi 0, %s83
      %s85 = sphi 0, %s83
      %s86 = sphi 0, %s85
      %s100 = sphi 0, %s86
      %s104 = sphi 0, %s104
      %s106 = sphi 0, %s104
      %s107 = sphi 0, %s106
      %s121 = sphi 0, %s107
      %s129 = sphi 0, %s131
      %s132 = sphi 0, %s129
      %s133 = sphi 0, %s132
      %s149 = sphi 0, %s133
    $region4: #{lipfd_conv1.1} parent=1 // loop_header_branch
      %17 = sbr.rel (%p15) target = $region8
    $region5: #{lipfd_conv1.1} parent=1 // loop_body
      %s19 = ssub.s32 %s14, 1
      %s20 = ssub.s32 %s14, 2
      %s27 = sadd.s32 1, %s22
      %p28 = scmp.ge.s32.totalorder %s27, 1
      %s29 = scalar_select %p28, 0, %s27
      %s30 = sadd.s32 1, %s21
      %s31 = scalar_select %p28, %s30, %s21
      %p32 = scmp.ge.s32.totalorder %s31, 2
      %s33 = scalar_select %p32, 0, %s31
      %s34 = ssub.s32 %s21, %s33
      %s35 = ssub.s32 %s22, %s29
      %s36 = sor.u32 %s34, %s35
      %p37 = scmp.eq.s32.totalorder %s36, 0
      %s39 = sadd.s32 %s38, 1
      %s40 = scalar_select %p37, %s38, %s39
      %p43 = pneg %p37
      %p44 = scmp.eq.s32.totalorder %s14, 1
      %p45 = por %p43, %p44
      %p46 = scmp.ne.s32.totalorder %s38, %s41
      %p47 = scmp.eq.s32.totalorder %s14, 0
      %p48 = por %p46, %p47
      %p49 = scmp.ne.s32.totalorder %s38, %s41
      %p50 = scmp.eq.s32.totalorder %s19, 1
      %p51 = por %p49, %p50
      %p52 = scmp.ne.s32.totalorder %s41, %s42
      %p53 = scmp.eq.s32.totalorder %s19, 0
      %p54 = por %p52, %p53
      %p55 = scmp.ne.s32.totalorder %s41, %s42
      %p56 = scmp.eq.s32.totalorder %s20, 1
      %p57 = por %p55, %p56
      %p59 = scmp.ne.s32.totalorder %s42, %s58
      %p60 = scmp.eq.s32.totalorder %s20, 0
      %p61 = por %p59, %p60
      %s63 = sadd.s32 %s62, 1
      %p66 = scmp.eq.s32.totalorder %s14, 1
      %p67 = scmp.ne.s32.totalorder %s62, %s64
      %p68 = scmp.eq.s32.totalorder %s14, 0
      %p69 = por %p67, %p68
      %p70 = scmp.ne.s32.totalorder %s62, %s64
      %p71 = scmp.eq.s32.totalorder %s19, 1
      %p72 = por %p70, %p71
      %p73 = scmp.ne.s32.totalorder %s64, %s65
      %p74 = scmp.eq.s32.totalorder %s19, 0
      %p75 = por %p73, %p74
      %p76 = scmp.ne.s32.totalorder %s64, %s65
      %p77 = scmp.eq.s32.totalorder %s20, 1
      %p78 = por %p76, %p77
      %p80 = scmp.ne.s32.totalorder %s65, %s79
      %p81 = scmp.eq.s32.totalorder %s20, 0
      %p82 = por %p80, %p81
      %s84 = sadd.s32 %s83, 1
      %p87 = scmp.eq.s32.totalorder %s14, 1
      %p88 = scmp.ne.s32.totalorder %s83, %s85
      %p89 = scmp.eq.s32.totalorder %s14, 0
      %p90 = por %p88, %p89
      %p91 = scmp.ne.s32.totalorder %s83, %s85
      %p92 = scmp.eq.s32.totalorder %s19, 1
      %p93 = por %p91, %p92
      %p94 = scmp.ne.s32.totalorder %s85, %s86
      %p95 = scmp.eq.s32.totalorder %s19, 0
      %p96 = por %p94, %p95
      %p97 = scmp.ne.s32.totalorder %s85, %s86
      %p98 = scmp.eq.s32.totalorder %s20, 1
      %p99 = por %p97, %p98
      %p101 = scmp.ne.s32.totalorder %s86, %s100
      %p102 = scmp.eq.s32.totalorder %s20, 0
      %p103 = por %p101, %p102
      %s105 = sadd.s32 %s104, 1
      %p108 = scmp.eq.s32.totalorder %s14, 1
      %p109 = scmp.ne.s32.totalorder %s104, %s106
      %p110 = scmp.eq.s32.totalorder %s14, 0
      %p111 = por %p109, %p110
      %p112 = scmp.ne.s32.totalorder %s104, %s106
      %p113 = scmp.eq.s32.totalorder %s19, 1
      %p114 = por %p112, %p113
      %p115 = scmp.ne.s32.totalorder %s106, %s107
      %p116 = scmp.eq.s32.totalorder %s19, 0
      %p117 = por %p115, %p116
      %p118 = scmp.ne.s32.totalorder %s106, %s107
      %p119 = scmp.eq.s32.totalorder %s20, 1
      %p120 = por %p118, %p119
      %p122 = scmp.ne.s32.totalorder %s107, %s121
      %p123 = scmp.eq.s32.totalorder %s20, 0
      %p124 = por %p122, %p123
      %s125 = ssub.s32 %s21, %s33
      %s126 = ssub.s32 %s22, %s29
      %s127 = sor.u32 %s125, %s126
      %p128 = scmp.eq.s32.totalorder %s127, 0
      %s130 = sadd.s32 %s129, 1
      %s131 = scalar_select %p128, %s129, %s130
      %p134 = pneg %p128
      %p135 = scmp.eq.s32.totalorder %s14, 1
      %p136 = por %p134, %p135
      %p137 = scmp.ne.s32.totalorder %s129, %s132
      %p138 = scmp.eq.s32.totalorder %s14, 0
      %p139 = por %p137, %p138
      %p140 = scmp.ne.s32.totalorder %s129, %s132
      %p141 = scmp.eq.s32.totalorder %s19, 1
      %p142 = por %p140, %p141
      %p143 = scmp.ne.s32.totalorder %s132, %s133
      %p144 = scmp.eq.s32.totalorder %s19, 0
      %p145 = por %p143, %p144
      %p146 = scmp.ne.s32.totalorder %s132, %s133
      %p147 = scmp.eq.s32.totalorder %s20, 1
      %p148 = por %p146, %p147
      %p150 = scmp.ne.s32.totalorder %s133, %s149
      %p151 = scmp.eq.s32.totalorder %s20, 0
      %p152 = por %p150, %p151
      %p153 = scmp.le.s32.totalorder 1, %s14
      %p154 = scmp.lt.s32.totalorder %s14, 3
      %p155 = pnand %p153, %p154
      %p156 = pneg %p155
      // Predicated region
      $region9: #{lipfd_conv1.1} parent=5 // pred_check
        _
      $region10: #{lipfd_conv1.1} parent=5 // pred_check_branch
        %158 = sbr.rel (%p155) target = $region12
      $region11: #{lipfd_conv1.1} parent=5 // pred_region
        %s159 = ssub.s32 %s14, 1
        // Predicated region
        $region13: #{lipfd_conv1.1} parent=11 // pred_check
          %p160 = pneg %p75
        $region14: #{lipfd_conv1.1} parent=11 // pred_check_branch
          %162 = sbr.rel (%p160) target = $region16
        $region15: #{lipfd_conv1.1} parent=11 // pred_region
          _
        $region16: #{lipfd_conv1.1} parent=11 // pred_fallthru
          _
        // Predicated region
        $region17: #{lipfd_conv1.1} parent=11 // pred_check
          %p163 = pneg %p96
        $region18: #{lipfd_conv1.1} parent=11 // pred_check_branch
          %165 = sbr.rel (%p163) target = $region20
        $region19: #{lipfd_conv1.1} parent=11 // pred_region
          _
        $region20: #{lipfd_conv1.1} parent=11 // pred_fallthru
          _
        // Predicated region
        $region21: #{lipfd_conv1.1} parent=11 // pred_check
          %p166 = pneg %p117
        $region22: #{lipfd_conv1.1} parent=11 // pred_check_branch
          %168 = sbr.rel (%p166) target = $region24
        $region23: #{lipfd_conv1.1} parent=11 // pred_region
          %s170 = ssub.s32 16, 16
          %171 = vsyncadd [#allocation4], %s170
          %s173 = sshll.u32 %s3, 4
          %s174 = int_to_ptr.vmem [resolvable:$true] %s173
          %176 = dma.vmem_to_smem %s174, 16, [#allocation2], [#allocation4]
        $region24: #{lipfd_conv1.1} parent=11 // pred_fallthru
          _
      $region12: #{lipfd_conv1.1} parent=5 // pred_fallthru
        _
      %p177 = scmp.lt.s32.totalorder %s14, 2
      // Predicated region
      $region25: #{lipfd_conv1.1} parent=5 // pred_check
        %p178 = pneg %p177
      $region26: #{lipfd_conv1.1} parent=5 // pred_check_branch
        %180 = sbr.rel (%p178) target = $region28
      $region27: #{lipfd_conv1.1} parent=5 // pred_region
        // Predicated region
        $region29: #{lipfd_conv1.1} parent=27 // pred_check
          %p181 = pneg %p48
        $region30: #{lipfd_conv1.1} parent=27 // pred_check_branch
          %183 = sbr.rel (%p181) target = $region32
        $region31: #{lipfd_conv1.1} parent=27 // pred_region
          %s184 = smul.u32 16, %s22
          %p185 = scmp.lt.s32.totalorder %s21, 1
          %s186 = scalar_select %p185, %s21, 1
          %p187 = scmp.lt.s32.totalorder %s184, 15
          %s188 = scalar_select %p187, %s184, 15
          %s189 = smul.addr %s186, 48
          %s190 = sadd.s32 %s188, %s189
          %s191 = smul.addr %s190, 8
          %s192 = scalar_lea.vmem %s0, %s191
          %s193 = smul.u32 16, %s22
        $region32: #{lipfd_conv1.1} parent=27 // pred_fallthru
          _
      $region28: #{lipfd_conv1.1} parent=5 // pred_fallthru
        _
      %p194 = scmp.le.s32.totalorder 1, %s14
      %p195 = scmp.lt.s32.totalorder %s14, 3
      %p196 = pnand %p194, %p195
      %p197 = pneg %p196
      // Predicated region
      $region33: #{lipfd_conv1.1} parent=5 // pred_check
        _
      $region34: #{lipfd_conv1.1} parent=5 // pred_check_branch
        %199 = sbr.rel (%p196) target = $region36
      $region35: #{lipfd_conv1.1} parent=5 // pred_region
        %s200 = ssub.s32 %s14, 1
        // Predicated region
        $region37: #{lipfd_conv1.1} parent=35 // pred_check
          %p201 = pneg %p117
        $region38: #{lipfd_conv1.1} parent=35 // pred_check_branch
          %203 = sbr.rel (%p201) target = $region40
        $region39: #{lipfd_conv1.1} parent=35 // pred_region
          %204 = dma.done [#allocation4], 16
        $region40: #{lipfd_conv1.1} parent=35 // pred_fallthru
          _
        %205 = sfence
        %s206 = smul.u32 16, %s24
        %p207 = scmp.lt.s32.totalorder %s23, 1
        %s208 = scalar_select %p207, %s23, 1
        %p209 = scmp.lt.s32.totalorder %s206, 15
        %s210 = scalar_select %p209, %s206, 15
        %s211 = smul.addr %s208, 48
        %s212 = sadd.s32 %s210, %s211
        %s213 = smul.addr %s212, 8
        %s214 = scalar_lea.vmem %s0, %s213
        %p215 = pneg %p54
        %p216 = pneg %p51
        %p217 = pneg %p75
        %p218 = pneg %p72
        %p219 = pneg %p96
        %p220 = pneg %p93
        %p221 = pneg %p117
        %p222 = pneg %p114
        %p223 = pneg %p145
        %p224 = pneg %p142
        %s225 = sand.u32 %s132, 1
        %s226 = scalar_lea.sflag [#allocation3], %s225
        %s227 = sand.u32 %s132, 1
        %s228 = smul.addr %s227, 48
        %s229 = scalar_lea.vmem [#allocation5], %s228
        %s230 = smul.u32 16, %s24
        %p231 = scmp.lt.s32.totalorder %s23, 1
        %s232 = scalar_select %p231, %s23, 1
        %p233 = scmp.lt.s32.totalorder %s230, 15
        %s234 = scalar_select %p233, %s230, 15
        %s235 = smul.addr %s232, 48
        %s236 = sadd.s32 %s234, %s235
        %s237 = smul.addr %s236, 8
        %s238 = scalar_lea.vmem %s0, %s237
        %s239 = smul.u32 16, %s24
        %s240 = smul.u32 2, %s24
        %v241 = vld [vmem:[%s238] sm:$0x1f]
        %v242 = vld [vmem:[%s238 + $0x8] sm:$0x1f]
        %v243 = vld [vmem:[%s238 + $0x10] sm:$0x1f]
        %v244 = vld [vmem:[%s238 + $0x18] sm:$0x1f]
        %v245 = vld [vmem:[%s238 + $0x20] sm:$0x1f]
        %v246 = vld [vmem:[%s238 + $0x28] sm:$0x1f]
        %v247 = vld [vmem:[%s238 + $0x30] sm:$0x1f]
        %v248 = vld [vmem:[%s238 + $0x38] sm:$0x1f]
        %v249 = vld [vmem:[%s238 + $0x40] sm:$0x1f]
        %v250 = vld [vmem:[%s238 + $0x48] sm:$0x1f]
        %v251 = vld [vmem:[%s238 + $0x50] sm:$0x1f]
        %v252 = vld [vmem:[%s238 + $0x58] sm:$0x1f]
        %v253 = vld [vmem:[%s238 + $0x60] sm:$0x1f]
        %v254 = vld [vmem:[%s238 + $0x68] sm:$0x1f]
        %v255 = vld [vmem:[%s238 + $0x70] sm:$0x1f]
        %v256 = vld [vmem:[%s238 + $0x78] sm:$0x1f]
        %v257 = vld [vmem:[%s1] sm:$0x1f]
        %v258 = vmul.f32 %v241, %v257
        %v259 = vmul.f32 %v242, %v257
        %v260 = vmul.f32 %v243, %v257
        %v261 = vmul.f32 %v244, %v257
        %v262 = vmul.f32 %v245, %v257
        %v263 = vmul.f32 %v246, %v257
        %v264 = vmul.f32 %v247, %v257
        %v265 = vmul.f32 %v248, %v257
        %v266 = vmul.f32 %v249, %v257
        %v267 = vmul.f32 %v250, %v257
        %v268 = vmul.f32 %v251, %v257
        %v269 = vmul.f32 %v252, %v257
        %v270 = vmul.f32 %v253, %v257
        %v271 = vmul.f32 %v254, %v257
        %v272 = vmul.f32 %v255, %v257
        %v273 = vmul.f32 %v256, %v257
        %s274 = scalar_lea.vmem %s238, 128
        %v275 = vld [vmem:[%s274] sm:$0x1f]
        %v276 = vld [vmem:[%s274 + $0x8] sm:$0x1f]
        %v277 = vld [vmem:[%s274 + $0x10] sm:$0x1f]
        %v278 = vld [vmem:[%s274 + $0x18] sm:$0x1f]
        %v279 = vld [vmem:[%s274 + $0x20] sm:$0x1f]
        %v280 = vld [vmem:[%s274 + $0x28] sm:$0x1f]
        %v281 = vld [vmem:[%s274 + $0x30] sm:$0x1f]
        %v282 = vld [vmem:[%s274 + $0x38] sm:$0x1f]
        %v283 = vld [vmem:[%s274 + $0x40] sm:$0x1f]
        %v284 = vld [vmem:[%s274 + $0x48] sm:$0x1f]
        %v285 = vld [vmem:[%s274 + $0x50] sm:$0x1f]
        %v286 = vld [vmem:[%s274 + $0x58] sm:$0x1f]
        %v287 = vld [vmem:[%s274 + $0x60] sm:$0x1f]
        %v288 = vld [vmem:[%s274 + $0x68] sm:$0x1f]
        %v289 = vld [vmem:[%s274 + $0x70] sm:$0x1f]
        %v290 = vld [vmem:[%s274 + $0x78] sm:$0x1f]
        %s291 = scalar_lea.vmem %s1, 8
        %v292 = vld [vmem:[%s291] sm:$0x1f]
        %v293 = vmul.f32 %v275, %v292
        %v294 = vmul.f32 %v276, %v292
        %v295 = vmul.f32 %v277, %v292
        %v296 = vmul.f32 %v278, %v292
        %v297 = vmul.f32 %v279, %v292
        %v298 = vmul.f32 %v280, %v292
        %v299 = vmul.f32 %v281, %v292
        %v300 = vmul.f32 %v282, %v292
        %v301 = vmul.f32 %v283, %v292
        %v302 = vmul.f32 %v284, %v292
        %v303 = vmul.f32 %v285, %v292
        %v304 = vmul.f32 %v286, %v292
        %v305 = vmul.f32 %v287, %v292
        %v306 = vmul.f32 %v288, %v292
        %v307 = vmul.f32 %v289, %v292
        %v308 = vmul.f32 %v290, %v292
        %v309 = vadd.f32 %v258, %v293
        %v310 = vadd.f32 %v259, %v294
        %v311 = vadd.f32 %v260, %v295
        %v312 = vadd.f32 %v261, %v296
        %v313 = vadd.f32 %v262, %v297
        %v314 = vadd.f32 %v263, %v298
        %v315 = vadd.f32 %v264, %v299
        %v316 = vadd.f32 %v265, %v300
        %v317 = vadd.f32 %v266, %v301
        %v318 = vadd.f32 %v267, %v302
        %v319 = vadd.f32 %v268, %v303
        %v320 = vadd.f32 %v269, %v304
        %v321 = vadd.f32 %v270, %v305
        %v322 = vadd.f32 %v271, %v306
        %v323 = vadd.f32 %v272, %v307
        %v324 = vadd.f32 %v273, %v308
        %s325 = scalar_lea.vmem %s238, 256
        %v326 = vld [vmem:[%s325] sm:$0x1f]
        %v327 = vld [vmem:[%s325 + $0x8] sm:$0x1f]
        %v328 = vld [vmem:[%s325 + $0x10] sm:$0x1f]
        %v329 = vld [vmem:[%s325 + $0x18] sm:$0x1f]
        %v330 = vld [vmem:[%s325 + $0x20] sm:$0x1f]
        %v331 = vld [vmem:[%s325 + $0x28] sm:$0x1f]
        %v332 = vld [vmem:[%s325 + $0x30] sm:$0x1f]
        %v333 = vld [vmem:[%s325 + $0x38] sm:$0x1f]
        %v334 = vld [vmem:[%s325 + $0x40] sm:$0x1f]
        %v335 = vld [vmem:[%s325 + $0x48] sm:$0x1f]
        %v336 = vld [vmem:[%s325 + $0x50] sm:$0x1f]
        %v337 = vld [vmem:[%s325 + $0x58] sm:$0x1f]
        %v338 = vld [vmem:[%s325 + $0x60] sm:$0x1f]
        %v339 = vld [vmem:[%s325 + $0x68] sm:$0x1f]
        %v340 = vld [vmem:[%s325 + $0x70] sm:$0x1f]
        %v341 = vld [vmem:[%s325 + $0x78] sm:$0x1f]
        %s342 = scalar_lea.vmem %s1, 16
        %v343 = vld [vmem:[%s342] sm:$0x1f]
        %v344 = vmul.f32 %v326, %v343
        %v345 = vmul.f32 %v327, %v343
        %v346 = vmul.f32 %v328, %v343
        %v347 = vmul.f32 %v329, %v343
        %v348 = vmul.f32 %v330, %v343
        %v349 = vmul.f32 %v331, %v343
        %v350 = vmul.f32 %v332, %v343
        %v351 = vmul.f32 %v333, %v343
        %v352 = vmul.f32 %v334, %v343
        %v353 = vmul.f32 %v335, %v343
        %v354 = vmul.f32 %v336, %v343
        %v355 = vmul.f32 %v337, %v343
        %v356 = vmul.f32 %v338, %v343
        %v357 = vmul.f32 %v339, %v343
        %v358 = vmul.f32 %v340, %v343
        %v359 = vmul.f32 %v341, %v343
        %v360 = vadd.f32 %v309, %v344
        %v361 = vadd.f32 %v310, %v345
        %v362 = vadd.f32 %v311, %v346
        %v363 = vadd.f32 %v312, %v347
        %v364 = vadd.f32 %v313, %v348
        %v365 = vadd.f32 %v314, %v349
        %v366 = vadd.f32 %v315, %v350
        %v367 = vadd.f32 %v316, %v351
        %v368 = vadd.f32 %v317, %v352
        %v369 = vadd.f32 %v318, %v353
        %v370 = vadd.f32 %v319, %v354
        %v371 = vadd.f32 %v320, %v355
        %v372 = vadd.f32 %v321, %v356
        %v373 = vadd.f32 %v322, %v357
        %v374 = vadd.f32 %v323, %v358
        %v375 = vadd.f32 %v324, %v359
        %vm376 = vcmask 651264
        %v377 = vsel %vm376, %v360, 0.0
        %v378 = vrot.slane %v377, 4
        %v379 = vadd.f32 %v377, %v378
        %v380 = vrot.slane %v379, 2
        %v381 = vadd.f32 %v379, %v380
        %v382 = vrot.slane %v381, 1
        %v383 = vadd.f32 %v381, %v382
        %v384 = vsel %vm376, %v361, 0.0
        %v385 = vrot.slane %v384, 4
        %v386 = vadd.f32 %v384, %v385
        %v387 = vrot.slane %v386, 2
        %v388 = vadd.f32 %v386, %v387
        %v389 = vrot.slane %v388, 1
        %v390 = vadd.f32 %v388, %v389
        %v391 = vsel %vm376, %v362, 0.0
        %v392 = vrot.slane %v391, 4
        %v393 = vadd.f32 %v391, %v392
        %v394 = vrot.slane %v393, 2
        %v395 = vadd.f32 %v393, %v394
        %v396 = vrot.slane %v395, 1
        %v397 = vadd.f32 %v395, %v396
        %v398 = vsel %vm376, %v363, 0.0
        %v399 = vrot.slane %v398, 4
        %v400 = vadd.f32 %v398, %v399
        %v401 = vrot.slane %v400, 2
        %v402 = vadd.f32 %v400, %v401
        %v403 = vrot.slane %v402, 1
        %v404 = vadd.f32 %v402, %v403
        %v405 = vsel %vm376, %v364, 0.0
        %v406 = vrot.slane %v405, 4
        %v407 = vadd.f32 %v405, %v406
        %v408 = vrot.slane %v407, 2
        %v409 = vadd.f32 %v407, %v408
        %v410 = vrot.slane %v409, 1
        %v411 = vadd.f32 %v409, %v410
        %v412 = vsel %vm376, %v365, 0.0
        %v413 = vrot.slane %v412, 4
        %v414 = vadd.f32 %v412, %v413
        %v415 = vrot.slane %v414, 2
        %v416 = vadd.f32 %v414, %v415
        %v417 = vrot.slane %v416, 1
        %v418 = vadd.f32 %v416, %v417
        %v419 = vsel %vm376, %v366, 0.0
        %v420 = vrot.slane %v419, 4
        %v421 = vadd.f32 %v419, %v420
        %v422 = vrot.slane %v421, 2
        %v423 = vadd.f32 %v421, %v422
        %v424 = vrot.slane %v423, 1
        %v425 = vadd.f32 %v423, %v424
        %v426 = vsel %vm376, %v367, 0.0
        %v427 = vrot.slane %v426, 4
        %v428 = vadd.f32 %v426, %v427
        %v429 = vrot.slane %v428, 2
        %v430 = vadd.f32 %v428, %v429
        %v431 = vrot.slane %v430, 1
        %v432 = vadd.f32 %v430, %v431
        %v433 = vsel %vm376, %v368, 0.0
        %v434 = vrot.slane %v433, 4
        %v435 = vadd.f32 %v433, %v434
        %v436 = vrot.slane %v435, 2
        %v437 = vadd.f32 %v435, %v436
        %v438 = vrot.slane %v437, 1
        %v439 = vadd.f32 %v437, %v438
        %v440 = vsel %vm376, %v369, 0.0
        %v441 = vrot.slane %v440, 4
        %v442 = vadd.f32 %v440, %v441
        %v443 = vrot.slane %v442, 2
        %v444 = vadd.f32 %v442, %v443
        %v445 = vrot.slane %v444, 1
        %v446 = vadd.f32 %v444, %v445
        %v447 = vsel %vm376, %v370, 0.0
        %v448 = vrot.slane %v447, 4
        %v449 = vadd.f32 %v447, %v448
        %v450 = vrot.slane %v449, 2
        %v451 = vadd.f32 %v449, %v450
        %v452 = vrot.slane %v451, 1
        %v453 = vadd.f32 %v451, %v452
        %v454 = vsel %vm376, %v371, 0.0
        %v455 = vrot.slane %v454, 4
        %v456 = vadd.f32 %v454, %v455
        %v457 = vrot.slane %v456, 2
        %v458 = vadd.f32 %v456, %v457
        %v459 = vrot.slane %v458, 1
        %v460 = vadd.f32 %v458, %v459
        %v461 = vsel %vm376, %v372, 0.0
        %v462 = vrot.slane %v461, 4
        %v463 = vadd.f32 %v461, %v462
        %v464 = vrot.slane %v463, 2
        %v465 = vadd.f32 %v463, %v464
        %v466 = vrot.slane %v465, 1
        %v467 = vadd.f32 %v465, %v466
        %v468 = vsel %vm376, %v373, 0.0
        %v469 = vrot.slane %v468, 4
        %v470 = vadd.f32 %v468, %v469
        %v471 = vrot.slane %v470, 2
        %v472 = vadd.f32 %v470, %v471
        %v473 = vrot.slane %v472, 1
        %v474 = vadd.f32 %v472, %v473
        %v475 = vsel %vm376, %v374, 0.0
        %v476 = vrot.slane %v475, 4
        %v477 = vadd.f32 %v475, %v476
        %v478 = vrot.slane %v477, 2
        %v479 = vadd.f32 %v477, %v478
        %v480 = vrot.slane %v479, 1
        %v481 = vadd.f32 %v479, %v480
        %v482 = vsel %vm376, %v375, 0.0
        %v483 = vrot.slane %v482, 4
        %v484 = vadd.f32 %v482, %v483
        %v485 = vrot.slane %v484, 2
        %v486 = vadd.f32 %v484, %v485
        %v487 = vrot.slane %v486, 1
        %v488 = vadd.f32 %v486, %v487
        %v489 = vld [vmem:[%s2] sm:$0xff]
        %v490 = vld [vmem:[%s2 + $0x8] sm:$0xff]
        %v491 = vld [vmem:[%s2 + $0x10] sm:$0xff]
        %v492 = vld [vmem:[%s2 + $0x18] sm:$0xff]
        %v493 = vld [vmem:[%s2 + $0x20] sm:$0xff]
        %v494 = vld [vmem:[%s2 + $0x28] sm:$0xff]
        %v495 = vld [vmem:[%s2 + $0x30] sm:$0xff]
        %v496 = vld [vmem:[%s2 + $0x38] sm:$0xff]
        %v497 = vld [vmem:[%s2 + $0x40] sm:$0xff]
        %v498 = vld [vmem:[%s2 + $0x48] sm:$0xff]
        %s499 = sld [smem:[#allocation2]]
        %v500 = vstv %s499
        %vm517 = vcmask 1041409
        %v518 = vsel %vm517, %v390, %v383
        %vm519 = vcmask 1042434
        %v520 = vsel %vm519, %v397, %v518
        %vm521 = vcmask 1043459
        %v522 = vsel %vm521, %v404, %v520
        %vm523 = vcmask 1044484
        %v524 = vsel %vm523, %v411, %v522
        %vm525 = vcmask 1045509
        %v526 = vsel %vm525, %v418, %v524
        %vm527 = vcmask 1046534
        %v528 = vsel %vm527, %v425, %v526
        %vm529 = vcmask 1047559
        %v530 = vsel %vm529, %v432, %v528
        %v531 = vsel %vm517, %v446, %v439
        %v532 = vsel %vm519, %v453, %v531
        %v533 = vsel %vm521, %v460, %v532
        %v534 = vsel %vm523, %v467, %v533
        %v535 = vsel %vm525, %v474, %v534
        %v536 = vsel %vm527, %v481, %v535
        %v537 = vsel %vm529, %v488, %v536
        %vm538 = vcmask 654336
        %v539 = vsel %vm538, %v530, 0
        %v541 = vsel %vm538, %v537, 0
        %543 = vmatprep.subr.mxu0 0.0
        %544 = vmatpush1.msra.mxu0 %v489
        %545 = vmatprep.subr.mxu0 0.0
        %546 = vmatpush1.msra.mxu0 %v490
        %547 = vmatprep.subr.mxu0 0.0
        %548 = vmatpush1.msra.mxu0 %v491
        %549 = vmatprep.subr.mxu0 0.0
        %550 = vmatpush1.msra.mxu0 %v492
        %551 = vmatprep.subr.mxu0 0.0
        %552 = vmatpush1.msra.mxu0 %v493
        %553 = vmatprep.subr.mxu0 0.0
        %554 = vmatpush1.msra.mxu0 %v494
        %555 = vmatprep.subr.mxu0 0.0
        %556 = vmatpush1.msra.mxu0 %v495
        %557 = vmatprep.subr.mxu0 0.0
        %558 = vmatpush1.msra.mxu0 %v496
        %559 = vmatprep.subr.mxu0 0.0
        %560 = vmatpush1.msra.mxu0 %v497
        %561 = vmatprep.subr.mxu0 0.0
        %562 = vmatpush1.msra.mxu0 %v498
        %563 = vmatprep.subr.mxu0 0.0
        %564 = vmatpush1.msra.mxu0 0.0
        %565 = vmatprep.subr.mxu0 0.0
        %566 = vmatpush1.msra.mxu0 0.0
        %567 = vmatprep.subr.mxu0 0.0
        %568 = vmatpush1.msra.mxu0 0.0
        %569 = vmatprep.subr.mxu0 0.0
        %570 = vmatpush1.msra.mxu0 0.0
        %571 = vmatprep.subr.mxu0 0.0
        %572 = vmatpush1.msra.mxu0 0.0
        %573 = vmatprep.subr.mxu0 0.0
        %574 = vmatpush1.msra.mxu0 0.0
        %575 = vmatprep.subr.mxu0 0.0
        %576 = vmatpush1.msra.mxu0 0.0
        %577 = vmatprep.subr.mxu0 0.0
        %578 = vmatpush1.msra.mxu0 0.0
        %579 = vmatprep.subr.mxu0 0.0
        %580 = vmatpush1.msra.mxu0 0.0
        %581 = vmatprep.subr.mxu0 0.0
        %582 = vmatpush1.msra.mxu0 0.0
        %583 = vmatprep.subr.mxu0 0.0
        %584 = vmatpush1.msra.mxu0 0.0
        %585 = vmatprep.subr.mxu0 0.0
        %586 = vmatpush1.msra.mxu0 0.0
        %587 = vmatprep.subr.mxu0 0.0
        %588 = vmatpush1.msra.mxu0 0.0
        %589 = vmatprep.subr.mxu0 0.0
        %590 = vmatpush1.msra.mxu0 0.0
        %591 = vmatprep.subr.mxu0 0.0
        %592 = vmatpush1.msra.mxu0 0.0
        %593 = vmatprep.subr.mxu0 0.0
        %594 = vmatpush1.msra.mxu0 0.0
        %595 = vmatprep.subr.mxu0 0.0
        %596 = vmatpush1.msra.mxu0 0.0
        %597 = vmatprep.subr.mxu0 0.0
        %598 = vmatpush1.msra.mxu0 0.0
        %599 = vmatprep.subr.mxu0 0.0
        %600 = vmatpush1.msra.mxu0 0.0
        %601 = vmatprep.subr.mxu0 0.0
        %602 = vmatpush1.msra.mxu0 0.0
        %603 = vmatprep.subr.mxu0 0.0
        %604 = vmatpush1.msra.mxu0 0.0
        %605 = vmatprep.subr.mxu0 0.0
        %606 = vmatpush1.msra.mxu0 0.0
        %607 = vmatprep.mubr.f32.mxu0 0.0
        %608 = vmatmul.mubr.f32.gmra.mrb[0].mxu0 %v539
        %v609 = vpop.f32.mrb[0].mxu0
        %v610 = vadd.f32 %v500, %v609
        %v611 = vpop.f32.mrb[0].mxu0
        %612 = vmatprep.mubr.f32.mxu0 0.0
        %613 = vmatmul.mubr.f32.gmra.mrb[0].mxu0 %v541
        %v614 = vpop.f32.mrb[0].mxu0
        %v615 = vadd.f32 %v500, %v614
        %v616 = vpop.f32.mrb[0].mxu0
        %617 = vdwg.mxu0
        %vm618 = vcmask 130048
        %619 = vst.msk [vmem:[%s229] sm:$0xff] %vm618, %v610
        %620 = vst.msk [vmem:[%s229 + $0x8] sm:$0xff] %vm618, %v615
        %v621 = vld [vmem:[%s238] sm:$0x1f]
        %v622 = vld [vmem:[%s238 + $0x8] sm:$0x1f]
        %v623 = vld [vmem:[%s238 + $0x10] sm:$0x1f]
        %v624 = vld [vmem:[%s238 + $0x18] sm:$0x1f]
        %v625 = vld [vmem:[%s238 + $0x20] sm:$0x1f]
        %v626 = vld [vmem:[%s238 + $0x28] sm:$0x1f]
        %v627 = vld [vmem:[%s238 + $0x30] sm:$0x1f]
        %v628 = vld [vmem:[%s238 + $0x38] sm:$0x1f]
        %v629 = vld [vmem:[%s238 + $0x40] sm:$0x1f]
        %v630 = vld [vmem:[%s238 + $0x48] sm:$0x1f]
        %v631 = vld [vmem:[%s238 + $0x50] sm:$0x1f]
        %v632 = vld [vmem:[%s238 + $0x58] sm:$0x1f]
        %v633 = vld [vmem:[%s238 + $0x60] sm:$0x1f]
        %v634 = vld [vmem:[%s238 + $0x68] sm:$0x1f]
        %v635 = vld [vmem:[%s238 + $0x70] sm:$0x1f]
        %v636 = vld [vmem:[%s238 + $0x78] sm:$0x1f]
        %s637 = scalar_lea.vmem %s1, 24
        %v638 = vld [vmem:[%s637] sm:$0x1f]
        %v639 = vmul.f32 %v621, %v638
        %v640 = vmul.f32 %v622, %v638
        %v641 = vmul.f32 %v623, %v638
        %v642 = vmul.f32 %v624, %v638
        %v643 = vmul.f32 %v625, %v638
        %v644 = vmul.f32 %v626, %v638
        %v645 = vmul.f32 %v627, %v638
        %v646 = vmul.f32 %v628, %v638
        %v647 = vmul.f32 %v629, %v638
        %v648 = vmul.f32 %v630, %v638
        %v649 = vmul.f32 %v631, %v638
        %v650 = vmul.f32 %v632, %v638
        %v651 = vmul.f32 %v633, %v638
        %v652 = vmul.f32 %v634, %v638
        %v653 = vmul.f32 %v635, %v638
        %v654 = vmul.f32 %v636, %v638
        %v655 = vld [vmem:[%s274] sm:$0x1f]
        %v656 = vld [vmem:[%s274 + $0x8] sm:$0x1f]
        %v657 = vld [vmem:[%s274 + $0x10] sm:$0x1f]
        %v658 = vld [vmem:[%s274 + $0x18] sm:$0x1f]
        %v659 = vld [vmem:[%s274 + $0x20] sm:$0x1f]
        %v660 = vld [vmem:[%s274 + $0x28] sm:$0x1f]
        %v661 = vld [vmem:[%s274 + $0x30] sm:$0x1f]
        %v662 = vld [vmem:[%s274 + $0x38] sm:$0x1f]
        %v663 = vld [vmem:[%s274 + $0x40] sm:$0x1f]
        %v664 = vld [vmem:[%s274 + $0x48] sm:$0x1f]
        %v665 = vld [vmem:[%s274 + $0x50] sm:$0x1f]
        %v666 = vld [vmem:[%s274 + $0x58] sm:$0x1f]
        %v667 = vld [vmem:[%s274 + $0x60] sm:$0x1f]
        %v668 = vld [vmem:[%s274 + $0x68] sm:$0x1f]
        %v669 = vld [vmem:[%s274 + $0x70] sm:$0x1f]
        %v670 = vld [vmem:[%s274 + $0x78] sm:$0x1f]
        %s671 = scalar_lea.vmem %s1, 32
        %v672 = vld [vmem:[%s671] sm:$0x1f]
        %v673 = vmul.f32 %v655, %v672
        %v674 = vmul.f32 %v656, %v672
        %v675 = vmul.f32 %v657, %v672
        %v676 = vmul.f32 %v658, %v672
        %v677 = vmul.f32 %v659, %v672
        %v678 = vmul.f32 %v660, %v672
        %v679 = vmul.f32 %v661, %v672
        %v680 = vmul.f32 %v662, %v672
        %v681 = vmul.f32 %v663, %v672
        %v682 = vmul.f32 %v664, %v672
        %v683 = vmul.f32 %v665, %v672
        %v684 = vmul.f32 %v666, %v672
        %v685 = vmul.f32 %v667, %v672
        %v686 = vmul.f32 %v668, %v672
        %v687 = vmul.f32 %v669, %v672
        %v688 = vmul.f32 %v670, %v672
        %v689 = vadd.f32 %v639, %v673
        %v690 = vadd.f32 %v640, %v674
        %v691 = vadd.f32 %v641, %v675
        %v692 = vadd.f32 %v642, %v676
        %v693 = vadd.f32 %v643, %v677
        %v694 = vadd.f32 %v644, %v678
        %v695 = vadd.f32 %v645, %v679
        %v696 = vadd.f32 %v646, %v680
        %v697 = vadd.f32 %v647, %v681
        %v698 = vadd.f32 %v648, %v682
        %v699 = vadd.f32 %v649, %v683
        %v700 = vadd.f32 %v650, %v684
        %v701 = vadd.f32 %v651, %v685
        %v702 = vadd.f32 %v652, %v686
        %v703 = vadd.f32 %v653, %v687
        %v704 = vadd.f32 %v654, %v688
        %v705 = vld [vmem:[%s325] sm:$0x1f]
        %v706 = vld [vmem:[%s325 + $0x8] sm:$0x1f]
        %v707 = vld [vmem:[%s325 + $0x10] sm:$0x1f]
        %v708 = vld [vmem:[%s325 + $0x18] sm:$0x1f]
        %v709 = vld [vmem:[%s325 + $0x20] sm:$0x1f]
        %v710 = vld [vmem:[%s325 + $0x28] sm:$0x1f]
        %v711 = vld [vmem:[%s325 + $0x30] sm:$0x1f]
        %v712 = vld [vmem:[%s325 + $0x38] sm:$0x1f]
        %v713 = vld [vmem:[%s325 + $0x40] sm:$0x1f]
        %v714 = vld [vmem:[%s325 + $0x48] sm:$0x1f]
        %v715 = vld [vmem:[%s325 + $0x50] sm:$0x1f]
        %v716 = vld [vmem:[%s325 + $0x58] sm:$0x1f]
        %v717 = vld [vmem:[%s325 + $0x60] sm:$0x1f]
        %v718 = vld [vmem:[%s325 + $0x68] sm:$0x1f]
        %v719 = vld [vmem:[%s325 + $0x70] sm:$0x1f]
        %v720 = vld [vmem:[%s325 + $0x78] sm:$0x1f]
        %s721 = scalar_lea.vmem %s1, 40
        %v722 = vld [vmem:[%s721] sm:$0x1f]
        %v723 = vmul.f32 %v705, %v722
        %v724 = vmul.f32 %v706, %v722
        %v725 = vmul.f32 %v707, %v722
        %v726 = vmul.f32 %v708, %v722
        %v727 = vmul.f32 %v709, %v722
        %v728 = vmul.f32 %v710, %v722
        %v729 = vmul.f32 %v711, %v722
        %v730 = vmul.f32 %v712, %v722
        %v731 = vmul.f32 %v713, %v722
        %v732 = vmul.f32 %v714, %v722
        %v733 = vmul.f32 %v715, %v722
        %v734 = vmul.f32 %v716, %v722
        %v735 = vmul.f32 %v717, %v722
        %v736 = vmul.f32 %v718, %v722
        %v737 = vmul.f32 %v719, %v722
        %v738 = vmul.f32 %v720, %v722
        %v739 = vadd.f32 %v689, %v723
        %v740 = vadd.f32 %v690, %v724
        %v741 = vadd.f32 %v691, %v725
        %v742 = vadd.f32 %v692, %v726
        %v743 = vadd.f32 %v693, %v727
        %v744 = vadd.f32 %v694, %v728
        %v745 = vadd.f32 %v695, %v729
        %v746 = vadd.f32 %v696, %v730
        %v747 = vadd.f32 %v697, %v731
        %v748 = vadd.f32 %v698, %v732
        %v749 = vadd.f32 %v699, %v733
        %v750 = vadd.f32 %v700, %v734
        %v751 = vadd.f32 %v701, %v735
        %v752 = vadd.f32 %v702, %v736
        %v753 = vadd.f32 %v703, %v737
        %v754 = vadd.f32 %v704, %v738
        %v755 = vsel %vm376, %v739, 0.0
        %v756 = vrot.slane %v755, 4
        %v757 = vadd.f32 %v755, %v756
        %v758 = vrot.slane %v757, 2
        %v759 = vadd.f32 %v757, %v758
        %v760 = vrot.slane %v759, 1
        %v761 = vadd.f32 %v759, %v760
        %v762 = vsel %vm376, %v740, 0.0
        %v763 = vrot.slane %v762, 4
        %v764 = vadd.f32 %v762, %v763
        %v765 = vrot.slane %v764, 2
        %v766 = vadd.f32 %v764, %v765
        %v767 = vrot.slane %v766, 1
        %v768 = vadd.f32 %v766, %v767
        %v769 = vsel %vm376, %v741, 0.0
        %v770 = vrot.slane %v769, 4
        %v771 = vadd.f32 %v769, %v770
        %v772 = vrot.slane %v771, 2
        %v773 = vadd.f32 %v771, %v772
        %v774 = vrot.slane %v773, 1
        %v775 = vadd.f32 %v773, %v774
        %v776 = vsel %vm376, %v742, 0.0
        %v777 = vrot.slane %v776, 4
        %v778 = vadd.f32 %v776, %v777
        %v779 = vrot.slane %v778, 2
        %v780 = vadd.f32 %v778, %v779
        %v781 = vrot.slane %v780, 1
        %v782 = vadd.f32 %v780, %v781
        %v783 = vsel %vm376, %v743, 0.0
        %v784 = vrot.slane %v783, 4
        %v785 = vadd.f32 %v783, %v784
        %v786 = vrot.slane %v785, 2
        %v787 = vadd.f32 %v785, %v786
        %v788 = vrot.slane %v787, 1
        %v789 = vadd.f32 %v787, %v788
        %v790 = vsel %vm376, %v744, 0.0
        %v791 = vrot.slane %v790, 4
        %v792 = vadd.f32 %v790, %v791
        %v793 = vrot.slane %v792, 2
        %v794 = vadd.f32 %v792, %v793
        %v795 = vrot.slane %v794, 1
        %v796 = vadd.f32 %v794, %v795
        %v797 = vsel %vm376, %v745, 0.0
        %v798 = vrot.slane %v797, 4
        %v799 = vadd.f32 %v797, %v798
        %v800 = vrot.slane %v799, 2
        %v801 = vadd.f32 %v799, %v800
        %v802 = vrot.slane %v801, 1
        %v803 = vadd.f32 %v801, %v802
        %v804 = vsel %vm376, %v746, 0.0
        %v805 = vrot.slane %v804, 4
        %v806 = vadd.f32 %v804, %v805
        %v807 = vrot.slane %v806, 2
        %v808 = vadd.f32 %v806, %v807
        %v809 = vrot.slane %v808, 1
        %v810 = vadd.f32 %v808, %v809
        %v811 = vsel %vm376, %v747, 0.0
        %v812 = vrot.slane %v811, 4
        %v813 = vadd.f32 %v811, %v812
        %v814 = vrot.slane %v813, 2
        %v815 = vadd.f32 %v813, %v814
        %v816 = vrot.slane %v815, 1
        %v817 = vadd.f32 %v815, %v816
        %v818 = vsel %vm376, %v748, 0.0
        %v819 = vrot.slane %v818, 4
        %v820 = vadd.f32 %v818, %v819
        %v821 = vrot.slane %v820, 2
        %v822 = vadd.f32 %v820, %v821
        %v823 = vrot.slane %v822, 1
        %v824 = vadd.f32 %v822, %v823
        %v825 = vsel %vm376, %v749, 0.0
        %v826 = vrot.slane %v825, 4
        %v827 = vadd.f32 %v825, %v826
        %v828 = vrot.slane %v827, 2
        %v829 = vadd.f32 %v827, %v828
        %v830 = vrot.slane %v829, 1
        %v831 = vadd.f32 %v829, %v830
        %v832 = vsel %vm376, %v750, 0.0
        %v833 = vrot.slane %v832, 4
        %v834 = vadd.f32 %v832, %v833
        %v835 = vrot.slane %v834, 2
        %v836 = vadd.f32 %v834, %v835
        %v837 = vrot.slane %v836, 1
        %v838 = vadd.f32 %v836, %v837
        %v839 = vsel %vm376, %v751, 0.0
        %v840 = vrot.slane %v839, 4
        %v841 = vadd.f32 %v839, %v840
        %v842 = vrot.slane %v841, 2
        %v843 = vadd.f32 %v841, %v842
        %v844 = vrot.slane %v843, 1
        %v845 = vadd.f32 %v843, %v844
        %v846 = vsel %vm376, %v752, 0.0
        %v847 = vrot.slane %v846, 4
        %v848 = vadd.f32 %v846, %v847
        %v849 = vrot.slane %v848, 2
        %v850 = vadd.f32 %v848, %v849
        %v851 = vrot.slane %v850, 1
        %v852 = vadd.f32 %v850, %v851
        %v853 = vsel %vm376, %v753, 0.0
        %v854 = vrot.slane %v853, 4
        %v855 = vadd.f32 %v853, %v854
        %v856 = vrot.slane %v855, 2
        %v857 = vadd.f32 %v855, %v856
        %v858 = vrot.slane %v857, 1
        %v859 = vadd.f32 %v857, %v858
        %v860 = vsel %vm376, %v754, 0.0
        %v861 = vrot.slane %v860, 4
        %v862 = vadd.f32 %v860, %v861
        %v863 = vrot.slane %v862, 2
        %v864 = vadd.f32 %v862, %v863
        %v865 = vrot.slane %v864, 1
        %v866 = vadd.f32 %v864, %v865
        %v867 = vld [vmem:[%s2] sm:$0xff]
        %v868 = vld [vmem:[%s2 + $0x8] sm:$0xff]
        %v869 = vld [vmem:[%s2 + $0x10] sm:$0xff]
        %v870 = vld [vmem:[%s2 + $0x18] sm:$0xff]
        %v871 = vld [vmem:[%s2 + $0x20] sm:$0xff]
        %v872 = vld [vmem:[%s2 + $0x28] sm:$0xff]
        %v873 = vld [vmem:[%s2 + $0x30] sm:$0xff]
        %v874 = vld [vmem:[%s2 + $0x38] sm:$0xff]
        %v875 = vld [vmem:[%s2 + $0x40] sm:$0xff]
        %v876 = vld [vmem:[%s2 + $0x48] sm:$0xff]
        %s877 = sld [smem:[#allocation2 + $0x1]]
        %v878 = vstv %s877
        %v895 = vsel %vm517, %v768, %v761
        %v896 = vsel %vm519, %v775, %v895
        %v897 = vsel %vm521, %v782, %v896
        %v898 = vsel %vm523, %v789, %v897
        %v899 = vsel %vm525, %v796, %v898
        %v900 = vsel %vm527, %v803, %v899
        %v901 = vsel %vm529, %v810, %v900
        %v902 = vsel %vm517, %v824, %v817
        %v903 = vsel %vm519, %v831, %v902
        %v904 = vsel %vm521, %v838, %v903
        %v905 = vsel %vm523, %v845, %v904
        %v906 = vsel %vm525, %v852, %v905
        %v907 = vsel %vm527, %v859, %v906
        %v908 = vsel %vm529, %v866, %v907
        %v909 = vsel %vm538, %v901, 0
        %v911 = vsel %vm538, %v908, 0
        %913 = vmatprep.subr.mxu0 0.0
        %914 = vmatpush1.msra.mxu0 %v867
        %915 = vmatprep.subr.mxu0 0.0
        %916 = vmatpush1.msra.mxu0 %v868
        %917 = vmatprep.subr.mxu0 0.0
        %918 = vmatpush1.msra.mxu0 %v869
        %919 = vmatprep.subr.mxu0 0.0
        %920 = vmatpush1.msra.mxu0 %v870
        %921 = vmatprep.subr.mxu0 0.0
        %922 = vmatpush1.msra.mxu0 %v871
        %923 = vmatprep.subr.mxu0 0.0
        %924 = vmatpush1.msra.mxu0 %v872
        %925 = vmatprep.subr.mxu0 0.0
        %926 = vmatpush1.msra.mxu0 %v873
        %927 = vmatprep.subr.mxu0 0.0
        %928 = vmatpush1.msra.mxu0 %v874
        %929 = vmatprep.subr.mxu0 0.0
        %930 = vmatpush1.msra.mxu0 %v875
        %931 = vmatprep.subr.mxu0 0.0
        %932 = vmatpush1.msra.mxu0 %v876
        %933 = vmatprep.subr.mxu0 0.0
        %934 = vmatpush1.msra.mxu0 0.0
        %935 = vmatprep.subr.mxu0 0.0
        %936 = vmatpush1.msra.mxu0 0.0
        %937 = vmatprep.subr.mxu0 0.0
        %938 = vmatpush1.msra.mxu0 0.0
        %939 = vmatprep.subr.mxu0 0.0
        %940 = vmatpush1.msra.mxu0 0.0
        %941 = vmatprep.subr.mxu0 0.0
        %942 = vmatpush1.msra.mxu0 0.0
        %943 = vmatprep.subr.mxu0 0.0
        %944 = vmatpush1.msra.mxu0 0.0
        %945 = vmatprep.subr.mxu0 0.0
        %946 = vmatpush1.msra.mxu0 0.0
        %947 = vmatprep.subr.mxu0 0.0
        %948 = vmatpush1.msra.mxu0 0.0
        %949 = vmatprep.subr.mxu0 0.0
        %950 = vmatpush1.msra.mxu0 0.0
        %951 = vmatprep.subr.mxu0 0.0
        %952 = vmatpush1.msra.mxu0 0.0
        %953 = vmatprep.subr.mxu0 0.0
        %954 = vmatpush1.msra.mxu0 0.0
        %955 = vmatprep.subr.mxu0 0.0
        %956 = vmatpush1.msra.mxu0 0.0
        %957 = vmatprep.subr.mxu0 0.0
        %958 = vmatpush1.msra.mxu0 0.0
        %959 = vmatprep.subr.mxu0 0.0
        %960 = vmatpush1.msra.mxu0 0.0
        %961 = vmatprep.subr.mxu0 0.0
        %962 = vmatpush1.msra.mxu0 0.0
        %963 = vmatprep.subr.mxu0 0.0
        %964 = vmatpush1.msra.mxu0 0.0
        %965 = vmatprep.subr.mxu0 0.0
        %966 = vmatpush1.msra.mxu0 0.0
        %967 = vmatprep.subr.mxu0 0.0
        %968 = vmatpush1.msra.mxu0 0.0
        %969 = vmatprep.subr.mxu0 0.0
        %970 = vmatpush1.msra.mxu0 0.0
        %971 = vmatprep.subr.mxu0 0.0
        %972 = vmatpush1.msra.mxu0 0.0
        %973 = vmatprep.subr.mxu0 0.0
        %974 = vmatpush1.msra.mxu0 0.0
        %975 = vmatprep.subr.mxu0 0.0
        %976 = vmatpush1.msra.mxu0 0.0
        %977 = vmatprep.mubr.f32.mxu0 0.0
        %978 = vmatmul.mubr.f32.gmra.mrb[0].mxu0 %v909
        %v979 = vpop.f32.mrb[0].mxu0
        %v980 = vadd.f32 %v878, %v979
        %v981 = vpop.f32.mrb[0].mxu0
        %982 = vmatprep.mubr.f32.mxu0 0.0
        %983 = vmatmul.mubr.f32.gmra.mrb[0].mxu0 %v911
        %v984 = vpop.f32.mrb[0].mxu0
        %v985 = vadd.f32 %v878, %v984
        %v986 = vpop.f32.mrb[0].mxu0
        %987 = vdwg.mxu0
        %s988 = scalar_lea.vmem %s229, 16 [#allocation5]
        %989 = vst.msk [vmem:[%s988] sm:$0xff] %vm618, %v980
        %990 = vst.msk [vmem:[%s988 + $0x8] sm:$0xff] %vm618, %v985
        %v991 = vld [vmem:[%s238] sm:$0x1f]
        %v992 = vld [vmem:[%s238 + $0x8] sm:$0x1f]
        %v993 = vld [vmem:[%s238 + $0x10] sm:$0x1f]
        %v994 = vld [vmem:[%s238 + $0x18] sm:$0x1f]
        %v995 = vld [vmem:[%s238 + $0x20] sm:$0x1f]
        %v996 = vld [vmem:[%s238 + $0x28] sm:$0x1f]
        %v997 = vld [vmem:[%s238 + $0x30] sm:$0x1f]
        %v998 = vld [vmem:[%s238 + $0x38] sm:$0x1f]
        %v999 = vld [vmem:[%s238 + $0x40] sm:$0x1f]
        %v1000 = vld [vmem:[%s238 + $0x48] sm:$0x1f]
        %v1001 = vld [vmem:[%s238 + $0x50] sm:$0x1f]
        %v1002 = vld [vmem:[%s238 + $0x58] sm:$0x1f]
        %v1003 = vld [vmem:[%s238 + $0x60] sm:$0x1f]
        %v1004 = vld [vmem:[%s238 + $0x68] sm:$0x1f]
        %v1005 = vld [vmem:[%s238 + $0x70] sm:$0x1f]
        %v1006 = vld [vmem:[%s238 + $0x78] sm:$0x1f]
        %s1007 = scalar_lea.vmem %s1, 48
        %v1008 = vld [vmem:[%s1007] sm:$0x1f]
        %v1009 = vmul.f32 %v991, %v1008
        %v1010 = vmul.f32 %v992, %v1008
        %v1011 = vmul.f32 %v993, %v1008
        %v1012 = vmul.f32 %v994, %v1008
        %v1013 = vmul.f32 %v995, %v1008
        %v1014 = vmul.f32 %v996, %v1008
        %v1015 = vmul.f32 %v997, %v1008
        %v1016 = vmul.f32 %v998, %v1008
        %v1017 = vmul.f32 %v999, %v1008
        %v1018 = vmul.f32 %v1000, %v1008
        %v1019 = vmul.f32 %v1001, %v1008
        %v1020 = vmul.f32 %v1002, %v1008
        %v1021 = vmul.f32 %v1003, %v1008
        %v1022 = vmul.f32 %v1004, %v1008
        %v1023 = vmul.f32 %v1005, %v1008
        %v1024 = vmul.f32 %v1006, %v1008
        %v1025 = vld [vmem:[%s274] sm:$0x1f]
        %v1026 = vld [vmem:[%s274 + $0x8] sm:$0x1f]
        %v1027 = vld [vmem:[%s274 + $0x10] sm:$0x1f]
        %v1028 = vld [vmem:[%s274 + $0x18] sm:$0x1f]
        %v1029 = vld [vmem:[%s274 + $0x20] sm:$0x1f]
        %v1030 = vld [vmem:[%s274 + $0x28] sm:$0x1f]
        %v1031 = vld [vmem:[%s274 + $0x30] sm:$0x1f]
        %v1032 = vld [vmem:[%s274 + $0x38] sm:$0x1f]
        %v1033 = vld [vmem:[%s274 + $0x40] sm:$0x1f]
        %v1034 = vld [vmem:[%s274 + $0x48] sm:$0x1f]
        %v1035 = vld [vmem:[%s274 + $0x50] sm:$0x1f]
        %v1036 = vld [vmem:[%s274 + $0x58] sm:$0x1f]
        %v1037 = vld [vmem:[%s274 + $0x60] sm:$0x1f]
        %v1038 = vld [vmem:[%s274 + $0x68] sm:$0x1f]
        %v1039 = vld [vmem:[%s274 + $0x70] sm:$0x1f]
        %v1040 = vld [vmem:[%s274 + $0x78] sm:$0x1f]
        %s1041 = scalar_lea.vmem %s1, 56
        %v1042 = vld [vmem:[%s1041] sm:$0x1f]
        %v1043 = vmul.f32 %v1025, %v1042
        %v1044 = vmul.f32 %v1026, %v1042
        %v1045 = vmul.f32 %v1027, %v1042
        %v1046 = vmul.f32 %v1028, %v1042
        %v1047 = vmul.f32 %v1029, %v1042
        %v1048 = vmul.f32 %v1030, %v1042
        %v1049 = vmul.f32 %v1031, %v1042
        %v1050 = vmul.f32 %v1032, %v1042
        %v1051 = vmul.f32 %v1033, %v1042
        %v1052 = vmul.f32 %v1034, %v1042
        %v1053 = vmul.f32 %v1035, %v1042
        %v1054 = vmul.f32 %v1036, %v1042
        %v1055 = vmul.f32 %v1037, %v1042
        %v1056 = vmul.f32 %v1038, %v1042
        %v1057 = vmul.f32 %v1039, %v1042
        %v1058 = vmul.f32 %v1040, %v1042
        %v1059 = vadd.f32 %v1009, %v1043
        %v1060 = vadd.f32 %v1010, %v1044
        %v1061 = vadd.f32 %v1011, %v1045
        %v1062 = vadd.f32 %v1012, %v1046
        %v1063 = vadd.f32 %v1013, %v1047
        %v1064 = vadd.f32 %v1014, %v1048
        %v1065 = vadd.f32 %v1015, %v1049
        %v1066 = vadd.f32 %v1016, %v1050
        %v1067 = vadd.f32 %v1017, %v1051
        %v1068 = vadd.f32 %v1018, %v1052
        %v1069 = vadd.f32 %v1019, %v1053
        %v1070 = vadd.f32 %v1020, %v1054
        %v1071 = vadd.f32 %v1021, %v1055
        %v1072 = vadd.f32 %v1022, %v1056
        %v1073 = vadd.f32 %v1023, %v1057
        %v1074 = vadd.f32 %v1024, %v1058
        %v1075 = vld [vmem:[%s325] sm:$0x1f]
        %v1076 = vld [vmem:[%s325 + $0x8] sm:$0x1f]
        %v1077 = vld [vmem:[%s325 + $0x10] sm:$0x1f]
        %v1078 = vld [vmem:[%s325 + $0x18] sm:$0x1f]
        %v1079 = vld [vmem:[%s325 + $0x20] sm:$0x1f]
        %v1080 = vld [vmem:[%s325 + $0x28] sm:$0x1f]
        %v1081 = vld [vmem:[%s325 + $0x30] sm:$0x1f]
        %v1082 = vld [vmem:[%s325 + $0x38] sm:$0x1f]
        %v1083 = vld [vmem:[%s325 + $0x40] sm:$0x1f]
        %v1084 = vld [vmem:[%s325 + $0x48] sm:$0x1f]
        %v1085 = vld [vmem:[%s325 + $0x50] sm:$0x1f]
        %v1086 = vld [vmem:[%s325 + $0x58] sm:$0x1f]
        %v1087 = vld [vmem:[%s325 + $0x60] sm:$0x1f]
        %v1088 = vld [vmem:[%s325 + $0x68] sm:$0x1f]
        %v1089 = vld [vmem:[%s325 + $0x70] sm:$0x1f]
        %v1090 = vld [vmem:[%s325 + $0x78] sm:$0x1f]
        %s1091 = scalar_lea.vmem %s1, 64
        %v1092 = vld [vmem:[%s1091] sm:$0x1f]
        %v1093 = vmul.f32 %v1075, %v1092
        %v1094 = vmul.f32 %v1076, %v1092
        %v1095 = vmul.f32 %v1077, %v1092
        %v1096 = vmul.f32 %v1078, %v1092
        %v1097 = vmul.f32 %v1079, %v1092
        %v1098 = vmul.f32 %v1080, %v1092
        %v1099 = vmul.f32 %v1081, %v1092
        %v1100 = vmul.f32 %v1082, %v1092
        %v1101 = vmul.f32 %v1083, %v1092
        %v1102 = vmul.f32 %v1084, %v1092
        %v1103 = vmul.f32 %v1085, %v1092
        %v1104 = vmul.f32 %v1086, %v1092
        %v1105 = vmul.f32 %v1087, %v1092
        %v1106 = vmul.f32 %v1088, %v1092
        %v1107 = vmul.f32 %v1089, %v1092
        %v1108 = vmul.f32 %v1090, %v1092
        %v1109 = vadd.f32 %v1059, %v1093
        %v1110 = vadd.f32 %v1060, %v1094
        %v1111 = vadd.f32 %v1061, %v1095
        %v1112 = vadd.f32 %v1062, %v1096
        %v1113 = vadd.f32 %v1063, %v1097
        %v1114 = vadd.f32 %v1064, %v1098
        %v1115 = vadd.f32 %v1065, %v1099
        %v1116 = vadd.f32 %v1066, %v1100
        %v1117 = vadd.f32 %v1067, %v1101
        %v1118 = vadd.f32 %v1068, %v1102
        %v1119 = vadd.f32 %v1069, %v1103
        %v1120 = vadd.f32 %v1070, %v1104
        %v1121 = vadd.f32 %v1071, %v1105
        %v1122 = vadd.f32 %v1072, %v1106
        %v1123 = vadd.f32 %v1073, %v1107
        %v1124 = vadd.f32 %v1074, %v1108
        %v1125 = vsel %vm376, %v1109, 0.0
        %v1126 = vrot.slane %v1125, 4
        %v1127 = vadd.f32 %v1125, %v1126
        %v1128 = vrot.slane %v1127, 2
        %v1129 = vadd.f32 %v1127, %v1128
        %v1130 = vrot.slane %v1129, 1
        %v1131 = vadd.f32 %v1129, %v1130
        %v1132 = vsel %vm376, %v1110, 0.0
        %v1133 = vrot.slane %v1132, 4
        %v1134 = vadd.f32 %v1132, %v1133
        %v1135 = vrot.slane %v1134, 2
        %v1136 = vadd.f32 %v1134, %v1135
        %v1137 = vrot.slane %v1136, 1
        %v1138 = vadd.f32 %v1136, %v1137
        %v1139 = vsel %vm376, %v1111, 0.0
        %v1140 = vrot.slane %v1139, 4
        %v1141 = vadd.f32 %v1139, %v1140
        %v1142 = vrot.slane %v1141, 2
        %v1143 = vadd.f32 %v1141, %v1142
        %v1144 = vrot.slane %v1143, 1
        %v1145 = vadd.f32 %v1143, %v1144
        %v1146 = vsel %vm376, %v1112, 0.0
        %v1147 = vrot.slane %v1146, 4
        %v1148 = vadd.f32 %v1146, %v1147
        %v1149 = vrot.slane %v1148, 2
        %v1150 = vadd.f32 %v1148, %v1149
        %v1151 = vrot.slane %v1150, 1
        %v1152 = vadd.f32 %v1150, %v1151
        %v1153 = vsel %vm376, %v1113, 0.0
        %v1154 = vrot.slane %v1153, 4
        %v1155 = vadd.f32 %v1153, %v1154
        %v1156 = vrot.slane %v1155, 2
        %v1157 = vadd.f32 %v1155, %v1156
        %v1158 = vrot.slane %v1157, 1
        %v1159 = vadd.f32 %v1157, %v1158
        %v1160 = vsel %vm376, %v1114, 0.0
        %v1161 = vrot.slane %v1160, 4
        %v1162 = vadd.f32 %v1160, %v1161
        %v1163 = vrot.slane %v1162, 2
        %v1164 = vadd.f32 %v1162, %v1163
        %v1165 = vrot.slane %v1164, 1
        %v1166 = vadd.f32 %v1164, %v1165
        %v1167 = vsel %vm376, %v1115, 0.0
        %v1168 = vrot.slane %v1167, 4
        %v1169 = vadd.f32 %v1167, %v1168
        %v1170 = vrot.slane %v1169, 2
        %v1171 = vadd.f32 %v1169, %v1170
        %v1172 = vrot.slane %v1171, 1
        %v1173 = vadd.f32 %v1171, %v1172
        %v1174 = vsel %vm376, %v1116, 0.0
        %v1175 = vrot.slane %v1174, 4
        %v1176 = vadd.f32 %v1174, %v1175
        %v1177 = vrot.slane %v1176, 2
        %v1178 = vadd.f32 %v1176, %v1177
        %v1179 = vrot.slane %v1178, 1
        %v1180 = vadd.f32 %v1178, %v1179
        %v1181 = vsel %vm376, %v1117, 0.0
        %v1182 = vrot.slane %v1181, 4
        %v1183 = vadd.f32 %v1181, %v1182
        %v1184 = vrot.slane %v1183, 2
        %v1185 = vadd.f32 %v1183, %v1184
        %v1186 = vrot.slane %v1185, 1
        %v1187 = vadd.f32 %v1185, %v1186
        %v1188 = vsel %vm376, %v1118, 0.0
        %v1189 = vrot.slane %v1188, 4
        %v1190 = vadd.f32 %v1188, %v1189
        %v1191 = vrot.slane %v1190, 2
        %v1192 = vadd.f32 %v1190, %v1191
        %v1193 = vrot.slane %v1192, 1
        %v1194 = vadd.f32 %v1192, %v1193
        %v1195 = vsel %vm376, %v1119, 0.0
        %v1196 = vrot.slane %v1195, 4
        %v1197 = vadd.f32 %v1195, %v1196
        %v1198 = vrot.slane %v1197, 2
        %v1199 = vadd.f32 %v1197, %v1198
        %v1200 = vrot.slane %v1199, 1
        %v1201 = vadd.f32 %v1199, %v1200
        %v1202 = vsel %vm376, %v1120, 0.0
        %v1203 = vrot.slane %v1202, 4
        %v1204 = vadd.f32 %v1202, %v1203
        %v1205 = vrot.slane %v1204, 2
        %v1206 = vadd.f32 %v1204, %v1205
        %v1207 = vrot.slane %v1206, 1
        %v1208 = vadd.f32 %v1206, %v1207
        %v1209 = vsel %vm376, %v1121, 0.0
        %v1210 = vrot.slane %v1209, 4
        %v1211 = vadd.f32 %v1209, %v1210
        %v1212 = vrot.slane %v1211, 2
        %v1213 = vadd.f32 %v1211, %v1212
        %v1214 = vrot.slane %v1213, 1
        %v1215 = vadd.f32 %v1213, %v1214
        %v1216 = vsel %vm376, %v1122, 0.0
        %v1217 = vrot.slane %v1216, 4
        %v1218 = vadd.f32 %v1216, %v1217
        %v1219 = vrot.slane %v1218, 2
        %v1220 = vadd.f32 %v1218, %v1219
        %v1221 = vrot.slane %v1220, 1
        %v1222 = vadd.f32 %v1220, %v1221
        %v1223 = vsel %vm376, %v1123, 0.0
        %v1224 = vrot.slane %v1223, 4
        %v1225 = vadd.f32 %v1223, %v1224
        %v1226 = vrot.slane %v1225, 2
        %v1227 = vadd.f32 %v1225, %v1226
        %v1228 = vrot.slane %v1227, 1
        %v1229 = vadd.f32 %v1227, %v1228
        %v1230 = vsel %vm376, %v1124, 0.0
        %v1231 = vrot.slane %v1230, 4
        %v1232 = vadd.f32 %v1230, %v1231
        %v1233 = vrot.slane %v1232, 2
        %v1234 = vadd.f32 %v1232, %v1233
        %v1235 = vrot.slane %v1234, 1
        %v1236 = vadd.f32 %v1234, %v1235
        %v1237 = vld [vmem:[%s2] sm:$0xff]
        %v1238 = vld [vmem:[%s2 + $0x8] sm:$0xff]
        %v1239 = vld [vmem:[%s2 + $0x10] sm:$0xff]
        %v1240 = vld [vmem:[%s2 + $0x18] sm:$0xff]
        %v1241 = vld [vmem:[%s2 + $0x20] sm:$0xff]
        %v1242 = vld [vmem:[%s2 + $0x28] sm:$0xff]
        %v1243 = vld [vmem:[%s2 + $0x30] sm:$0xff]
        %v1244 = vld [vmem:[%s2 + $0x38] sm:$0xff]
        %v1245 = vld [vmem:[%s2 + $0x40] sm:$0xff]
        %v1246 = vld [vmem:[%s2 + $0x48] sm:$0xff]
        %s1247 = sld [smem:[#allocation2 + $0x2]]
        %v1248 = vstv %s1247
        %v1265 = vsel %vm517, %v1138, %v1131
        %v1266 = vsel %vm519, %v1145, %v1265
        %v1267 = vsel %vm521, %v1152, %v1266
        %v1268 = vsel %vm523, %v1159, %v1267
        %v1269 = vsel %vm525, %v1166, %v1268
        %v1270 = vsel %vm527, %v1173, %v1269
        %v1271 = vsel %vm529, %v1180, %v1270
        %v1272 = vsel %vm517, %v1194, %v1187
        %v1273 = vsel %vm519, %v1201, %v1272
        %v1274 = vsel %vm521, %v1208, %v1273
        %v1275 = vsel %vm523, %v1215, %v1274
        %v1276 = vsel %vm525, %v1222, %v1275
        %v1277 = vsel %vm527, %v1229, %v1276
        %v1278 = vsel %vm529, %v1236, %v1277
        %v1279 = vsel %vm538, %v1271, 0
        %v1281 = vsel %vm538, %v1278, 0
        %1283 = vmatprep.subr.mxu0 0.0
        %1284 = vmatpush1.msra.mxu0 %v1237
        %1285 = vmatprep.subr.mxu0 0.0
        %1286 = vmatpush1.msra.mxu0 %v1238
        %1287 = vmatprep.subr.mxu0 0.0
        %1288 = vmatpush1.msra.mxu0 %v1239
        %1289 = vmatprep.subr.mxu0 0.0
        %1290 = vmatpush1.msra.mxu0 %v1240
        %1291 = vmatprep.subr.mxu0 0.0
        %1292 = vmatpush1.msra.mxu0 %v1241
        %1293 = vmatprep.subr.mxu0 0.0
        %1294 = vmatpush1.msra.mxu0 %v1242
        %1295 = vmatprep.subr.mxu0 0.0
        %1296 = vmatpush1.msra.mxu0 %v1243
        %1297 = vmatprep.subr.mxu0 0.0
        %1298 = vmatpush1.msra.mxu0 %v1244
        %1299 = vmatprep.subr.mxu0 0.0
        %1300 = vmatpush1.msra.mxu0 %v1245
        %1301 = vmatprep.subr.mxu0 0.0
        %1302 = vmatpush1.msra.mxu0 %v1246
        %1303 = vmatprep.subr.mxu0 0.0
        %1304 = vmatpush1.msra.mxu0 0.0
        %1305 = vmatprep.subr.mxu0 0.0
        %1306 = vmatpush1.msra.mxu0 0.0
        %1307 = vmatprep.subr.mxu0 0.0
        %1308 = vmatpush1.msra.mxu0 0.0
        %1309 = vmatprep.subr.mxu0 0.0
        %1310 = vmatpush1.msra.mxu0 0.0
        %1311 = vmatprep.subr.mxu0 0.0
        %1312 = vmatpush1.msra.mxu0 0.0
        %1313 = vmatprep.subr.mxu0 0.0
        %1314 = vmatpush1.msra.mxu0 0.0
        %1315 = vmatprep.subr.mxu0 0.0
        %1316 = vmatpush1.msra.mxu0 0.0
        %1317 = vmatprep.subr.mxu0 0.0
        %1318 = vmatpush1.msra.mxu0 0.0
        %1319 = vmatprep.subr.mxu0 0.0
        %1320 = vmatpush1.msra.mxu0 0.0
        %1321 = vmatprep.subr.mxu0 0.0
        %1322 = vmatpush1.msra.mxu0 0.0
        %1323 = vmatprep.subr.mxu0 0.0
        %1324 = vmatpush1.msra.mxu0 0.0
        %1325 = vmatprep.subr.mxu0 0.0
        %1326 = vmatpush1.msra.mxu0 0.0
        %1327 = vmatprep.subr.mxu0 0.0
        %1328 = vmatpush1.msra.mxu0 0.0
        %1329 = vmatprep.subr.mxu0 0.0
        %1330 = vmatpush1.msra.mxu0 0.0
        %1331 = vmatprep.subr.mxu0 0.0
        %1332 = vmatpush1.msra.mxu0 0.0
        %1333 = vmatprep.subr.mxu0 0.0
        %1334 = vmatpush1.msra.mxu0 0.0
        %1335 = vmatprep.subr.mxu0 0.0
        %1336 = vmatpush1.msra.mxu0 0.0
        %1337 = vmatprep.subr.mxu0 0.0
        %1338 = vmatpush1.msra.mxu0 0.0
        %1339 = vmatprep.subr.mxu0 0.0
        %1340 = vmatpush1.msra.mxu0 0.0
        %1341 = vmatprep.subr.mxu0 0.0
        %1342 = vmatpush1.msra.mxu0 0.0
        %1343 = vmatprep.subr.mxu0 0.0
        %1344 = vmatpush1.msra.mxu0 0.0
        %1345 = vmatprep.subr.mxu0 0.0
        %1346 = vmatpush1.msra.mxu0 0.0
        %1347 = vmatprep.mubr.f32.mxu0 0.0
        %1348 = vmatmul.mubr.f32.gmra.mrb[0].mxu0 %v1279
        %v1349 = vpop.f32.mrb[0].mxu0
        %v1350 = vadd.f32 %v1248, %v1349
        %v1351 = vpop.f32.mrb[0].mxu0
        %1352 = vmatprep.mubr.f32.mxu0 0.0
        %1353 = vmatmul.mubr.f32.gmra.mrb[0].mxu0 %v1281
        %v1354 = vpop.f32.mrb[0].mxu0
        %v1355 = vadd.f32 %v1248, %v1354
        %v1356 = vpop.f32.mrb[0].mxu0
        %1357 = vdwg.mxu0
        %s1358 = scalar_lea.vmem %s229, 32 [#allocation5]
        %1359 = vst.msk [vmem:[%s1358] sm:$0xff] %vm618, %v1350
        %1360 = vst.msk [vmem:[%s1358 + $0x8] sm:$0xff] %vm618, %v1355
        %s1361 = sand.u32 %s132, 1
        %s1362 = scalar_lea.sflag [#allocation3], %s1361
        %s1363 = sand.u32 %s132, 1
        %s1364 = smul.addr %s1363, 48
        %s1365 = scalar_lea.vmem [#allocation5], %s1364
        // Predicated region
        $region41: #{lipfd_conv1.1} parent=35 // pred_check
          %p1366 = pneg %p142
        $region42: #{lipfd_conv1.1} parent=35 // pred_check_branch
          %1368 = sbr.rel (%p1366) target = $region44
        $region43: #{lipfd_conv1.1} parent=35 // pred_region
          %s1369 = smul.u32 2, %s24
          %s1371 = ssub.s32 768, 768
          %1372 = vsyncadd %s1362, %s1371
          %s1373 = smul.addr %s23, 6
          %s1374 = sadd.s32 %s1369, %s1373
          %s1375 = smul.addr %s1374, 128
          %s1376 = scalar_lea.hbm %s4, %s1375
          %s1377 = sshll.u32 %s1365, 4
          %s1378 = int_to_ptr.vmem [resolvable:$true] %s1377
          %1383 = dma.vmem_to_hbm [thread:$0]  %s1378, 768, %s1376, %s1362, 128, 128, 8
        $region44: #{lipfd_conv1.1} parent=35 // pred_fallthru
          _
      $region36: #{lipfd_conv1.1} parent=5 // pred_fallthru
        _
      %p1384 = scmp.le.s32.totalorder 2, %s14
      // Predicated region
      $region45: #{lipfd_conv1.1} parent=5 // pred_check
        %p1385 = pneg %p1384
      $region46: #{lipfd_conv1.1} parent=5 // pred_check_branch
        %1387 = sbr.rel (%p1385) target = $region48
      $region47: #{lipfd_conv1.1} parent=5 // pred_region
        %s1388 = ssub.s32 %s14, 2
        // Predicated region
        $region49: #{lipfd_conv1.1} parent=47 // pred_check
          %p1389 = pneg %p148
        $region50: #{lipfd_conv1.1} parent=47 // pred_check_branch
          %1391 = sbr.rel (%p1389) target = $region52
        $region51: #{lipfd_conv1.1} parent=47 // pred_region
          %s1392 = sand.u32 %s133, 1
          %s1393 = scalar_lea.sflag [#allocation3], %s1392
          %s1394 = sand.u32 %s133, 1
          %s1395 = smul.addr %s1394, 48
          %s1396 = scalar_lea.vmem [#allocation5], %s1395
          %1397 = dma.done %s1393, 768
        $region52: #{lipfd_conv1.1} parent=47 // pred_fallthru
          _
      $region48: #{lipfd_conv1.1} parent=5 // pred_fallthru
        _
    $region6: #{lipfd_conv1.1} parent=1 // loop_footer
      %s18 = sadd.s32 1, %s14
    $region7: #{lipfd_conv1.1} parent=1 // loop_footer_branch
      %13 = sbr.rel target = $region3
    $region8: #{lipfd_conv1.1} parent=1 // loop_exit
      _
    %1398 = vsyncpa [#allocation3], 1
    %s1399 = scalar_lea.sflag [#allocation3], 1
    %1400 = vsyncpa %s1399, 1
    %1401 = vsyncpa [#allocation4], 1
    %s1402 = scalar_lea.sflag [#allocation4], 1
    %1403 = vsyncpa %s1402, 1

</llo_original>
